<compile_context>
chip_gen: v7x
topology: tpu7x:2x2x1
jax: 0.10.0
libtpu: 0.0.40
codegen_flags: <defaults>
</compile_context>

<pallas_src>
import math

import jax
import jax.numpy as jnp
from jax.experimental import pallas as pl
from jax.experimental.pallas import tpu as pltpu

# ---- small, lane-aligned instance of the module's hyper-parameters ----
N_MOD = 3
SIZE_Z = 256                       # module default is 1024; small multiple of 128
D_IN = SIZE_Z * N_MOD              # 768
D_H = SIZE_Z * 2                   # 512
D_MID = SIZE_Z                     # 256
D_OUT = SIZE_Z * N_MOD             # 768
B = 8                              # batch (8 rows -> one full sublane tile)

# (fan_in, fan_out) of each Linear, in forward order
LAYER_DIMS = [(D_IN, D_H), (D_H, D_H), (D_H, D_H),
              (D_H, D_MID), (D_MID, D_H), (D_H, D_OUT)]
BIAS_WIDTHS = [d_out for _, d_out in LAYER_DIMS]


def _softplus(x):
    # Numerically stable softplus in f32; matches torch.nn.Softplus (beta=1)
    # to well below f32 precision for all inputs.
    return jnp.maximum(x, 0.0) + jnp.log1p(jnp.exp(-jnp.abs(x)))


def sm3_kernel(x_ref, sig_ref,
               w1_ref, w2_ref, w3_ref, w4_ref, w5_ref, w6_ref,
               bpk_ref, o_ref):
    """Whole MLP in one VMEM-resident pass. Weights bf16, accumulation f32."""

    def dense(h_bf16, w_ref, bias_row, bias_width):
        z = jnp.dot(h_bf16, w_ref[...], preferred_element_type=jnp.float32)
        b = bpk_ref[bias_row:bias_row + 1, 0:bias_width]      # (1, width) f32, static slice
        return z + b

    h = x_ref[...].astype(jnp.bfloat16)                        # (B, D_IN)
    h = _softplus(dense(h, w1_ref, 0, D_H)).astype(jnp.bfloat16)
    h = _softplus(dense(h, w2_ref, 1, D_H)).astype(jnp.bfloat16)
    h = _softplus(dense(h, w3_ref, 2, D_H)).astype(jnp.bfloat16)
    h = _softplus(dense(h, w4_ref, 3, D_MID)).astype(jnp.bfloat16)
    h = _softplus(dense(h, w5_ref, 4, D_H)).astype(jnp.bfloat16)
    z = dense(h, w6_ref, 5, D_OUT)                             # (B, D_OUT) f32

    inv_sigma = 1.0 / sig_ref[...]                             # (B, 1) f32, tiny
    o_ref[...] = z * inv_sigma


@jax.jit
def sm3_forward(x, sigma, w1, w2, w3, w4, w5, w6, bias_pack):
    full = lambda shape: pl.BlockSpec(shape, lambda i: tuple(0 for _ in shape))
    grid_spec = pltpu.PrefetchScalarGridSpec(
        num_scalar_prefetch=0,
        grid=(1,),                                   # single step: whole problem in VMEM
        in_specs=[
            full((B, D_IN)),                         # x (f32)
            full((B, 1)),                            # sigma (f32)
            full((D_IN, D_H)),                       # W1 (bf16)
            full((D_H, D_H)),                        # W2
            full((D_H, D_H)),                        # W3
            full((D_H, D_MID)),                      # W4
            full((D_MID, D_H)),                      # W5
            full((D_H, D_OUT)),                      # W6
            full((len(LAYER_DIMS), D_OUT)),          # packed biases (f32)
        ],
        out_specs=full((B, D_OUT)),
    )
    return pl.pallas_call(
        sm3_kernel,
        out_shape=jax.ShapeDtypeStruct((B, D_OUT), jnp.float32),
        grid_spec=grid_spec,
        compiler_params=pltpu.CompilerParams(
            dimension_semantics=("arbitrary",)),
    )(x, sigma, w1, w2, w3, w4, w5, w6, bias_pack)


def reference(x, sigma, weights, biases):
    """Pure-JAX f32 reference of SM3simple.forward."""
    h = x
    n = len(weights)
    for i, (w, b) in enumerate(zip(weights, biases)):
        h = h @ w + b[None, :]
        if i < n - 1:
            h = jax.nn.softplus(h)
    return h / sigma


if __name__ == "__main__":
    key = jax.random.PRNGKey(0)
    keys = jax.random.split(key, 16)

    x = jax.random.normal(keys[0], (B, D_IN), dtype=jnp.float32)
    sigma = jax.random.uniform(keys[1], (B, 1), dtype=jnp.float32,
                               minval=0.5, maxval=1.5)

    # Synthetic parameters, PyTorch-Linear-like init, stored as (in, out).
    weights_f32, biases = [], []
    for i, (d_in, d_out) in enumerate(LAYER_DIMS):
        bound = 1.0 / math.sqrt(d_in)
        w = jax.random.uniform(keys[2 + 2 * i], (d_in, d_out), dtype=jnp.float32,
                               minval=-bound, maxval=bound)
        b = jax.random.uniform(keys[3 + 2 * i], (d_out,), dtype=jnp.float32,
                               minval=-bound, maxval=bound)
        weights_f32.append(w)
        biases.append(b)

    # bf16 weights for the MXU (halves weight DMA traffic, native MXU dtype).
    weights_bf16 = [w.astype(jnp.bfloat16) for w in weights_f32]

    # Pack all six biases into one lane-dense (6, D_OUT) f32 block.
    bias_pack = jnp.zeros((len(LAYER_DIMS), D_OUT), dtype=jnp.float32)
    for i, (b, width) in enumerate(zip(biases, BIAS_WIDTHS)):
        bias_pack = bias_pack.at[i, :width].set(b)

    y = sm3_forward(x, sigma, *weights_bf16, bias_pack)
    y = jax.block_until_ready(y)

    # Reference uses the same (bf16-rounded) weight values in full-f32 math, so
    # the only kernel-vs-reference difference is bf16 activation rounding.
    ref_weights = [w.astype(jnp.float32) for w in weights_bf16]
    y_ref = reference(x, sigma, ref_weights, biases)

    assert y.shape == (B, D_OUT)
    max_err = float(jnp.max(jnp.abs(y - y_ref)))
    assert jnp.allclose(y, y_ref, atol=2e-2, rtol=2e-2), \
        f"mismatch vs reference, max_err={max_err}"

    print("KERNEL_OK")
</pallas_src>

<mosaic_0001>
module attributes {stable_mosaic.version = 11 : i64} {
  func.func @sm3_kernel(%arg0: i32, %arg1: memref<8x768xf32, #tpu.memory_space<vmem>>, %arg2: memref<8x1xf32, #tpu.memory_space<vmem>>, %arg3: memref<768x512xbf16, #tpu.memory_space<vmem>>, %arg4: memref<512x512xbf16, #tpu.memory_space<vmem>>, %arg5: memref<512x512xbf16, #tpu.memory_space<vmem>>, %arg6: memref<512x256xbf16, #tpu.memory_space<vmem>>, %arg7: memref<256x512xbf16, #tpu.memory_space<vmem>>, %arg8: memref<512x768xbf16, #tpu.memory_space<vmem>>, %arg9: memref<6x768xf32, #tpu.memory_space<vmem>>, %arg10: memref<8x768xf32, #tpu.memory_space<vmem>>) attributes {dimension_semantics = [#tpu.dimension_semantics<arbitrary>], iteration_bounds = array<i64: 1>, scalar_prefetch = 0 : i64, scratch_operands = 0 : i64, tpu.core_type = #tpu.core_type<tc>, window_params = [{pipeline_mode = #tpu.pipeline_mode<synchronous>, transform_indices = @transform_0, window_bounds = array<i64: 8, 768>}, {pipeline_mode = #tpu.pipeline_mode<synchronous>, transform_indices = @transform_1, window_bounds = array<i64: 8, 1>}, {pipeline_mode = #tpu.pipeline_mode<synchronous>, transform_indices = @transform_2, window_bounds = array<i64: 768, 512>}, {pipeline_mode = #tpu.pipeline_mode<synchronous>, transform_indices = @transform_3, window_bounds = array<i64: 512, 512>}, {pipeline_mode = #tpu.pipeline_mode<synchronous>, transform_indices = @transform_4, window_bounds = array<i64: 512, 512>}, {pipeline_mode = #tpu.pipeline_mode<synchronous>, transform_indices = @transform_5, window_bounds = array<i64: 512, 256>}, {pipeline_mode = #tpu.pipeline_mode<synchronous>, transform_indices = @transform_6, window_bounds = array<i64: 256, 512>}, {pipeline_mode = #tpu.pipeline_mode<synchronous>, transform_indices = @transform_7, window_bounds = array<i64: 512, 768>}, {pipeline_mode = #tpu.pipeline_mode<synchronous>, transform_indices = @transform_8, window_bounds = array<i64: 6, 768>}, {pipeline_mode = #tpu.pipeline_mode<synchronous>, transform_indices = @transform_9, window_bounds = array<i64: 8, 768>}]} {
    %c0 = arith.constant 0 : index
    %c0_0 = arith.constant 0 : index
    %0 = vector.load %arg1[%c0, %c0_0] : memref<8x768xf32, #tpu.memory_space<vmem>>, vector<8x768xf32>
    %1 = arith.truncf %0 : vector<8x768xf32> to vector<8x768xbf16>
    %c0_1 = arith.constant 0 : index
    %c0_2 = arith.constant 0 : index
    %2 = vector.load %arg3[%c0_1, %c0_2] : memref<768x512xbf16, #tpu.memory_space<vmem>>, vector<768x512xbf16>
    %cst = arith.constant dense<0.000000e+00> : vector<8x512xf32>
    %3 = tpu.matmul %1, %2, %cst {dimension_numbers = #tpu.dot_dimension_numbers<[1], [0], [0], [1], [0, 0, 1, 1], [], []>} : vector<8x768xbf16>, vector<768x512xbf16>, vector<8x512xf32> -> vector<8x512xf32>
    %c0_3 = arith.constant 0 : index
    %c0_4 = arith.constant 0 : index
    %4 = vector.load %arg9[%c0_3, %c0_4] : memref<6x768xf32, #tpu.memory_space<vmem>>, vector<1x512xf32>
    %5 = vector.broadcast %4 : vector<1x512xf32> to vector<8x512xf32>
    %6 = arith.addf %3, %5 : vector<8x512xf32>
    %cst_5 = arith.constant 0.000000e+00 : f32
    %7 = vector.broadcast %cst_5 : f32 to vector<8x512xf32>
    %8 = arith.maximumf %6, %7 : vector<8x512xf32>
    %9 = math.absf %6 : vector<8x512xf32>
    %cst_6 = arith.constant 0.000000e+00 : f32
    %10 = vector.broadcast %cst_6 : f32 to vector<8x512xf32>
    %11 = arith.subf %10, %9 : vector<8x512xf32>
    %12 = math.exp %11 : vector<8x512xf32>
    %13 = math.log1p %12 : vector<8x512xf32>
    %14 = arith.addf %8, %13 : vector<8x512xf32>
    %15 = arith.truncf %14 : vector<8x512xf32> to vector<8x512xbf16>
    %c0_7 = arith.constant 0 : index
    %c0_8 = arith.constant 0 : index
    %16 = vector.load %arg4[%c0_7, %c0_8] : memref<512x512xbf16, #tpu.memory_space<vmem>>, vector<512x512xbf16>
    %cst_9 = arith.constant dense<0.000000e+00> : vector<8x512xf32>
    %17 = tpu.matmul %15, %16, %cst_9 {dimension_numbers = #tpu.dot_dimension_numbers<[1], [0], [0], [1], [0, 0, 1, 1], [], []>} : vector<8x512xbf16>, vector<512x512xbf16>, vector<8x512xf32> -> vector<8x512xf32>
    %c1 = arith.constant 1 : index
    %c0_10 = arith.constant 0 : index
    %18 = vector.load %arg9[%c1, %c0_10] : memref<6x768xf32, #tpu.memory_space<vmem>>, vector<1x512xf32>
    %19 = vector.broadcast %18 : vector<1x512xf32> to vector<8x512xf32>
    %20 = arith.addf %17, %19 : vector<8x512xf32>
    %cst_11 = arith.constant 0.000000e+00 : f32
    %21 = vector.broadcast %cst_11 : f32 to vector<8x512xf32>
    %22 = arith.maximumf %20, %21 : vector<8x512xf32>
    %23 = math.absf %20 : vector<8x512xf32>
    %cst_12 = arith.constant 0.000000e+00 : f32
    %24 = vector.broadcast %cst_12 : f32 to vector<8x512xf32>
    %25 = arith.subf %24, %23 : vector<8x512xf32>
    %26 = math.exp %25 : vector<8x512xf32>
    %27 = math.log1p %26 : vector<8x512xf32>
    %28 = arith.addf %22, %27 : vector<8x512xf32>
    %29 = arith.truncf %28 : vector<8x512xf32> to vector<8x512xbf16>
    %c0_13 = arith.constant 0 : index
    %c0_14 = arith.constant 0 : index
    %30 = vector.load %arg5[%c0_13, %c0_14] : memref<512x512xbf16, #tpu.memory_space<vmem>>, vector<512x512xbf16>
    %cst_15 = arith.constant dense<0.000000e+00> : vector<8x512xf32>
    %31 = tpu.matmul %29, %30, %cst_15 {dimension_numbers = #tpu.dot_dimension_numbers<[1], [0], [0], [1], [0, 0, 1, 1], [], []>} : vector<8x512xbf16>, vector<512x512xbf16>, vector<8x512xf32> -> vector<8x512xf32>
    %c2 = arith.constant 2 : index
    %c0_16 = arith.constant 0 : index
    %32 = vector.load %arg9[%c2, %c0_16] : memref<6x768xf32, #tpu.memory_space<vmem>>, vector<1x512xf32>
    %33 = vector.broadcast %32 : vector<1x512xf32> to vector<8x512xf32>
    %34 = arith.addf %31, %33 : vector<8x512xf32>
    %cst_17 = arith.constant 0.000000e+00 : f32
    %35 = vector.broadcast %cst_17 : f32 to vector<8x512xf32>
    %36 = arith.maximumf %34, %35 : vector<8x512xf32>
    %37 = math.absf %34 : vector<8x512xf32>
    %cst_18 = arith.constant 0.000000e+00 : f32
    %38 = vector.broadcast %cst_18 : f32 to vector<8x512xf32>
    %39 = arith.subf %38, %37 : vector<8x512xf32>
    %40 = math.exp %39 : vector<8x512xf32>
    %41 = math.log1p %40 : vector<8x512xf32>
    %42 = arith.addf %36, %41 : vector<8x512xf32>
    %43 = arith.truncf %42 : vector<8x512xf32> to vector<8x512xbf16>
    %c0_19 = arith.constant 0 : index
    %c0_20 = arith.constant 0 : index
    %44 = vector.load %arg6[%c0_19, %c0_20] : memref<512x256xbf16, #tpu.memory_space<vmem>>, vector<512x256xbf16>
    %cst_21 = arith.constant dense<0.000000e+00> : vector<8x256xf32>
    %45 = tpu.matmul %43, %44, %cst_21 {dimension_numbers = #tpu.dot_dimension_numbers<[1], [0], [0], [1], [0, 0, 1, 1], [], []>} : vector<8x512xbf16>, vector<512x256xbf16>, vector<8x256xf32> -> vector<8x256xf32>
    %c3 = arith.constant 3 : index
    %c0_22 = arith.constant 0 : index
    %46 = vector.load %arg9[%c3, %c0_22] : memref<6x768xf32, #tpu.memory_space<vmem>>, vector<1x256xf32>
    %47 = vector.broadcast %46 : vector<1x256xf32> to vector<8x256xf32>
    %48 = arith.addf %45, %47 : vector<8x256xf32>
    %cst_23 = arith.constant 0.000000e+00 : f32
    %49 = vector.broadcast %cst_23 : f32 to vector<8x256xf32>
    %50 = arith.maximumf %48, %49 : vector<8x256xf32>
    %51 = math.absf %48 : vector<8x256xf32>
    %cst_24 = arith.constant 0.000000e+00 : f32
    %52 = vector.broadcast %cst_24 : f32 to vector<8x256xf32>
    %53 = arith.subf %52, %51 : vector<8x256xf32>
    %54 = math.exp %53 : vector<8x256xf32>
    %55 = math.log1p %54 : vector<8x256xf32>
    %56 = arith.addf %50, %55 : vector<8x256xf32>
    %57 = arith.truncf %56 : vector<8x256xf32> to vector<8x256xbf16>
    %c0_25 = arith.constant 0 : index
    %c0_26 = arith.constant 0 : index
    %58 = vector.load %arg7[%c0_25, %c0_26] : memref<256x512xbf16, #tpu.memory_space<vmem>>, vector<256x512xbf16>
    %cst_27 = arith.constant dense<0.000000e+00> : vector<8x512xf32>
    %59 = tpu.matmul %57, %58, %cst_27 {dimension_numbers = #tpu.dot_dimension_numbers<[1], [0], [0], [1], [0, 0, 1, 1], [], []>} : vector<8x256xbf16>, vector<256x512xbf16>, vector<8x512xf32> -> vector<8x512xf32>
    %c4 = arith.constant 4 : index
    %c0_28 = arith.constant 0 : index
    %60 = vector.load %arg9[%c4, %c0_28] : memref<6x768xf32, #tpu.memory_space<vmem>>, vector<1x512xf32>
    %61 = vector.broadcast %60 : vector<1x512xf32> to vector<8x512xf32>
    %62 = arith.addf %59, %61 : vector<8x512xf32>
    %cst_29 = arith.constant 0.000000e+00 : f32
    %63 = vector.broadcast %cst_29 : f32 to vector<8x512xf32>
    %64 = arith.maximumf %62, %63 : vector<8x512xf32>
    %65 = math.absf %62 : vector<8x512xf32>
    %cst_30 = arith.constant 0.000000e+00 : f32
    %66 = vector.broadcast %cst_30 : f32 to vector<8x512xf32>
    %67 = arith.subf %66, %65 : vector<8x512xf32>
    %68 = math.exp %67 : vector<8x512xf32>
    %69 = math.log1p %68 : vector<8x512xf32>
    %70 = arith.addf %64, %69 : vector<8x512xf32>
    %71 = arith.truncf %70 : vector<8x512xf32> to vector<8x512xbf16>
    %c0_31 = arith.constant 0 : index
    %c0_32 = arith.constant 0 : index
    %72 = vector.load %arg8[%c0_31, %c0_32] : memref<512x768xbf16, #tpu.memory_space<vmem>>, vector<512x768xbf16>
    %cst_33 = arith.constant dense<0.000000e+00> : vector<8x768xf32>
    %73 = tpu.matmul %71, %72, %cst_33 {dimension_numbers = #tpu.dot_dimension_numbers<[1], [0], [0], [1], [0, 0, 1, 1], [], []>} : vector<8x512xbf16>, vector<512x768xbf16>, vector<8x768xf32> -> vector<8x768xf32>
    %c5 = arith.constant 5 : index
    %c0_34 = arith.constant 0 : index
    %74 = vector.load %arg9[%c5, %c0_34] : memref<6x768xf32, #tpu.memory_space<vmem>>, vector<1x768xf32>
    %75 = vector.broadcast %74 : vector<1x768xf32> to vector<8x768xf32>
    %76 = arith.addf %73, %75 : vector<8x768xf32>
    %c0_35 = arith.constant 0 : index
    %c0_36 = arith.constant 0 : index
    %77 = vector.load %arg2[%c0_35, %c0_36] : memref<8x1xf32, #tpu.memory_space<vmem>>, vector<8x1xf32>
    %cst_37 = arith.constant 1.000000e+00 : f32
    %78 = vector.broadcast %cst_37 : f32 to vector<8x1xf32>
    %79 = arith.divf %78, %77 : vector<8x1xf32>
    %80 = vector.broadcast %79 : vector<8x1xf32> to vector<8x768xf32>
    %81 = arith.mulf %76, %80 : vector<8x768xf32>
    %c0_38 = arith.constant 0 : index
    %c0_39 = arith.constant 0 : index
    %82 = vector.load %arg10[%c0_38, %c0_39] : memref<8x768xf32, #tpu.memory_space<vmem>>, vector<8x768xf32>
    tpu.vector_store %arg10[%c0_38, %c0_39], %81 {strides = array<i32>} : memref<8x768xf32, #tpu.memory_space<vmem>>, vector<8x768xf32>,
    return
  }
  func.func @transform_0(%arg0: i32) -> (i32, i32) {
    %c0_i32 = arith.constant 0 : i32
    %c0_i32_0 = arith.constant 0 : i32
    %c0_i32_1 = arith.constant 0 : i32
    return %c0_i32, %c0_i32_0 : i32, i32
  }
  func.func @transform_1(%arg0: i32) -> (i32, i32) {
    %c0_i32 = arith.constant 0 : i32
    %c0_i32_0 = arith.constant 0 : i32
    %c0_i32_1 = arith.constant 0 : i32
    return %c0_i32, %c0_i32_0 : i32, i32
  }
  func.func @transform_2(%arg0: i32) -> (i32, i32) {
    %c0_i32 = arith.constant 0 : i32
    %c0_i32_0 = arith.constant 0 : i32
    %c0_i32_1 = arith.constant 0 : i32
    return %c0_i32, %c0_i32_0 : i32, i32
  }
  func.func @transform_3(%arg0: i32) -> (i32, i32) {
    %c0_i32 = arith.constant 0 : i32
    %c0_i32_0 = arith.constant 0 : i32
    %c0_i32_1 = arith.constant 0 : i32
    return %c0_i32, %c0_i32_0 : i32, i32
  }
  func.func @transform_4(%arg0: i32) -> (i32, i32) {
    %c0_i32 = arith.constant 0 : i32
    %c0_i32_0 = arith.constant 0 : i32
    %c0_i32_1 = arith.constant 0 : i32
    return %c0_i32, %c0_i32_0 : i32, i32
  }
  func.func @transform_5(%arg0: i32) -> (i32, i32) {
    %c0_i32 = arith.constant 0 : i32
    %c0_i32_0 = arith.constant 0 : i32
    %c0_i32_1 = arith.constant 0 : i32
    return %c0_i32, %c0_i32_0 : i32, i32
  }
  func.func @transform_6(%arg0: i32) -> (i32, i32) {
    %c0_i32 = arith.constant 0 : i32
    %c0_i32_0 = arith.constant 0 : i32
    %c0_i32_1 = arith.constant 0 : i32
    return %c0_i32, %c0_i32_0 : i32, i32
  }
  func.func @transform_7(%arg0: i32) -> (i32, i32) {
    %c0_i32 = arith.constant 0 : i32
    %c0_i32_0 = arith.constant 0 : i32
    %c0_i32_1 = arith.constant 0 : i32
    return %c0_i32, %c0_i32_0 : i32, i32
  }
  func.func @transform_8(%arg0: i32) -> (i32, i32) {
    %c0_i32 = arith.constant 0 : i32
    %c0_i32_0 = arith.constant 0 : i32
    %c0_i32_1 = arith.constant 0 : i32
    return %c0_i32, %c0_i32_0 : i32, i32
  }
  func.func @transform_9(%arg0: i32) -> (i32, i32) {
    %c0_i32 = arith.constant 0 : i32
    %c0_i32_0 = arith.constant 0 : i32
    %c0_i32_1 = arith.constant 0 : i32
    return %c0_i32, %c0_i32_0 : i32, i32
  }
}

</mosaic_0001>

<llo_original>
// kernel: sm3_forward.1
$region0: #{sm3_forward.1}
  #allocation0 [shape = 'u32[]', space=smem, size = 0x4, offset = 0x4, fixed_abs, tag = 'smem constant byte address 0x4 - core index']
  #allocation1 [shape = 'u32[144,128]{1,0:T(1,128)}', space=vmem, size = 0x12000, scoped, tag = 'internal scratch']
  %s0 = inlined_call_operand.hbm [shape: f32[8,768], index: 0, kind: input, shape index: {}]
  %s1 = inlined_call_operand.vmem [shape: f32[8,1], index: 1, kind: input, shape index: {}]
  %s2 = inlined_call_operand.hbm [shape: bf16[768,512], index: 2, kind: input, shape index: {}]
  %s3 = inlined_call_operand.hbm [shape: bf16[512,512], index: 3, kind: input, shape index: {}]
  %s4 = inlined_call_operand.hbm [shape: bf16[512,512], index: 4, kind: input, shape index: {}]
  %s5 = inlined_call_operand.hbm [shape: bf16[512,256], index: 5, kind: input, shape index: {}]
  %s6 = inlined_call_operand.hbm [shape: bf16[256,512], index: 6, kind: input, shape index: {}]
  %s7 = inlined_call_operand.hbm [shape: bf16[512,768], index: 7, kind: input, shape index: {}]
  %s8 = inlined_call_operand.hbm [shape: f32[6,768], index: 8, kind: input, shape index: {}]
  %s9 = inlined_call_operand.hbm [shape: f32[8,768], index: 9, kind: output, shape index: {}]
  %s10 = sld [smem:[#allocation0]]
  $region78: #{sm3_forward.1} parent=0
    _
  %s12 = ssub.s32 1, %s10
  %s13 = scalar_select 0, %s12, %s10
  $region1: #{sm3_forward.1} parent=0
    #allocation2 [shape = 'u8[24576]{0}', space=vmem, size = 0x6000, scoped, tag = 'input window, operand 0, single buffered']
    #allocation3 [shape = 's32[1]{0}', space=sflag, size = 0x4, scoped, tag = 'scoped memory for sm3_forward.1']
    #allocation4 [shape = 's32[1]{0}', space=sflag, size = 0x4, scoped, tag = 'scoped memory for sm3_forward.1']
    #allocation5 [shape = 'u8[786432]{0}', space=vmem, size = 0xc0000, scoped, tag = 'input window, operand 2, single buffered']
    #allocation6 [shape = 's32[1]{0}', space=sflag, size = 0x4, scoped, tag = 'scoped memory for sm3_forward.1']
    #allocation7 [shape = 'u8[524288]{0}', space=vmem, size = 0x80000, scoped, tag = 'input window, operand 3, single buffered']
    #allocation8 [shape = 'u8[524288]{0}', space=vmem, size = 0x80000, scoped, tag = 'input window, operand 4, single buffered']
    #allocation9 [shape = 's32[1]{0}', space=sflag, size = 0x4, scoped, tag = 'scoped memory for sm3_forward.1']
    #allocation10 [shape = 'u8[262144]{0}', space=vmem, size = 0x40000, scoped, tag = 'input window, operand 5, single buffered']
    #allocation11 [shape = 'u8[262144]{0}', space=vmem, size = 0x40000, scoped, tag = 'input window, operand 6, single buffered']
    #allocation12 [shape = 's32[1]{0}', space=sflag, size = 0x4, scoped, tag = 'scoped memory for sm3_forward.1']
    #allocation13 [shape = 'u8[786432]{0}', space=vmem, size = 0xc0000, scoped, tag = 'input window, operand 7, single buffered']
    #allocation14 [shape = 'u8[24576]{0}', space=vmem, size = 0x6000, scoped, tag = 'input window, operand 8, single buffered']
    #allocation15 [shape = 's32[1]{0}', space=sflag, size = 0x4, scoped, tag = 'scoped memory for sm3_forward.1']
    #allocation16 [shape = 'u8[24576]{0}', space=vmem, size = 0x6000, scoped, tag = 'output window, operand 0, single buffered']
    %14 = vsyncpa [#allocation3], 0
    %15 = vsyncpa [#allocation6], 0
    %16 = vsyncpa [#allocation9], 0
    %17 = vsyncpa [#allocation12], 0
    %18 = vsyncpa [#allocation15], 0
    %19 = vsyncpa [#allocation4], 0
    // Predicated region
    $region2: #{sm3_forward.1} parent=1 // pred_check
      _
    $region3: #{sm3_forward.1} parent=1 // pred_check_branch
      %21 = sbr.rel (0) target = $region5
    $region4: #{sm3_forward.1} parent=1 // pred_region
      %s23 = ssub.s32 768, 768
      %24 = vsyncadd [#allocation3], %s23
      %s26 = sshll.u32 [#allocation2], 4
      %s27 = int_to_ptr.vmem [resolvable:$true] %s26
      %29 = dma.hbm_to_vmem [thread:$0]  %s0, 768, %s27, [#allocation3]
    $region5: #{sm3_forward.1} parent=1 // pred_fallthru
      _
    // Predicated region
    $region6: #{sm3_forward.1} parent=1 // pred_check
      _
    $region7: #{sm3_forward.1} parent=1 // pred_check_branch
      %31 = sbr.rel (0) target = $region9
    $region8: #{sm3_forward.1} parent=1 // pred_region
      _
    $region9: #{sm3_forward.1} parent=1 // pred_fallthru
      _
    // Predicated region
    $region10: #{sm3_forward.1} parent=1 // pred_check
      _
    $region11: #{sm3_forward.1} parent=1 // pred_check_branch
      %33 = sbr.rel (0) target = $region13
    $region12: #{sm3_forward.1} parent=1 // pred_region
      %s35 = ssub.s32 24576, 24576
      %36 = vsyncadd [#allocation6], %s35
      %s37 = sshll.u32 [#allocation5], 4
      %s38 = int_to_ptr.vmem [resolvable:$true] %s37
      %43 = dma.hbm_to_vmem [thread:$0]  %s2, 24576, %s38, [#allocation6], 256, 256, 16
    $region13: #{sm3_forward.1} parent=1 // pred_fallthru
      _
    // Predicated region
    $region14: #{sm3_forward.1} parent=1 // pred_check
      _
    $region15: #{sm3_forward.1} parent=1 // pred_check_branch
      %45 = sbr.rel (0) target = $region17
    $region16: #{sm3_forward.1} parent=1 // pred_region
      %s47 = ssub.s32 16384, 16384
      %48 = vsyncadd [#allocation6], %s47
      %s49 = sshll.u32 [#allocation7], 4
      %s50 = int_to_ptr.vmem [resolvable:$true] %s49
      %55 = dma.hbm_to_vmem [thread:$0]  %s3, 16384, %s50, [#allocation6], 256, 256, 16
    $region17: #{sm3_forward.1} parent=1 // pred_fallthru
      _
    // Predicated region
    $region18: #{sm3_forward.1} parent=1 // pred_check
      _
    $region19: #{sm3_forward.1} parent=1 // pred_check_branch
      %57 = sbr.rel (0) target = $region21
    $region20: #{sm3_forward.1} parent=1 // pred_region
      %s59 = ssub.s32 16384, 16384
      %60 = vsyncadd [#allocation9], %s59
      %s61 = sshll.u32 [#allocation8], 4
      %s62 = int_to_ptr.vmem [resolvable:$true] %s61
      %67 = dma.hbm_to_vmem [thread:$0]  %s4, 16384, %s62, [#allocation9], 256, 256, 16
    $region21: #{sm3_forward.1} parent=1 // pred_fallthru
      _
    // Predicated region
    $region22: #{sm3_forward.1} parent=1 // pred_check
      _
    $region23: #{sm3_forward.1} parent=1 // pred_check_branch
      %69 = sbr.rel (0) target = $region25
    $region24: #{sm3_forward.1} parent=1 // pred_region
      %s71 = ssub.s32 8192, 8192
      %72 = vsyncadd [#allocation9], %s71
      %s73 = sshll.u32 [#allocation10], 4
      %s74 = int_to_ptr.vmem [resolvable:$true] %s73
      %79 = dma.hbm_to_vmem [thread:$0]  %s5, 8192, %s74, [#allocation9], 128, 128, 8
    $region25: #{sm3_forward.1} parent=1 // pred_fallthru
      _
    // Predicated region
    $region26: #{sm3_forward.1} parent=1 // pred_check
      _
    $region27: #{sm3_forward.1} parent=1 // pred_check_branch
      %81 = sbr.rel (0) target = $region29
    $region28: #{sm3_forward.1} parent=1 // pred_region
      %s83 = ssub.s32 8192, 8192
      %84 = vsyncadd [#allocation12], %s83
      %s85 = sshll.u32 [#allocation11], 4
      %s86 = int_to_ptr.vmem [resolvable:$true] %s85
      %91 = dma.hbm_to_vmem [thread:$0]  %s6, 8192, %s86, [#allocation12], 256, 256, 16
    $region29: #{sm3_forward.1} parent=1 // pred_fallthru
      _
    // Predicated region
    $region30: #{sm3_forward.1} parent=1 // pred_check
      _
    $region31: #{sm3_forward.1} parent=1 // pred_check_branch
      %93 = sbr.rel (0) target = $region33
    $region32: #{sm3_forward.1} parent=1 // pred_region
      %s95 = ssub.s32 24576, 24576
      %96 = vsyncadd [#allocation12], %s95
      %s97 = sshll.u32 [#allocation13], 4
      %s98 = int_to_ptr.vmem [resolvable:$true] %s97
      %103 = dma.hbm_to_vmem [thread:$0]  %s7, 24576, %s98, [#allocation12], 384, 384, 24
    $region33: #{sm3_forward.1} parent=1 // pred_fallthru
      _
    // Predicated region
    $region34: #{sm3_forward.1} parent=1 // pred_check
      _
    $region35: #{sm3_forward.1} parent=1 // pred_check_branch
      %105 = sbr.rel (0) target = $region37
    $region36: #{sm3_forward.1} parent=1 // pred_region
      %s107 = ssub.s32 768, 768
      %108 = vsyncadd [#allocation15], %s107
      %s110 = sshll.u32 [#allocation14], 4
      %s111 = int_to_ptr.vmem [resolvable:$true] %s110
      %113 = dma.hbm_to_vmem [thread:$0]  %s8, 768, %s111, [#allocation15]
    $region37: #{sm3_forward.1} parent=1 // pred_fallthru
      _
    // Predicated region
    $region38: #{sm3_forward.1} parent=1 // pred_check
      _
    $region39: #{sm3_forward.1} parent=1 // pred_check_branch
      %115 = sbr.rel (0) target = $region41
    $region40: #{sm3_forward.1} parent=1 // pred_region
      %116 = dma.done [#allocation3], 768
    $region41: #{sm3_forward.1} parent=1 // pred_fallthru
      _
    // Predicated region
    $region42: #{sm3_forward.1} parent=1 // pred_check
      _
    $region43: #{sm3_forward.1} parent=1 // pred_check_branch
      %118 = sbr.rel (0) target = $region45
    $region44: #{sm3_forward.1} parent=1 // pred_region
      %119 = dma.done [#allocation6], 24576
    $region45: #{sm3_forward.1} parent=1 // pred_fallthru
      _
    // Predicated region
    $region46: #{sm3_forward.1} parent=1 // pred_check
      _
    $region47: #{sm3_forward.1} parent=1 // pred_check_branch
      %121 = sbr.rel (0) target = $region49
    $region48: #{sm3_forward.1} parent=1 // pred_region
      %122 = dma.done [#allocation6], 16384
    $region49: #{sm3_forward.1} parent=1 // pred_fallthru
      _
    // Predicated region
    $region50: #{sm3_forward.1} parent=1 // pred_check
      _
    $region51: #{sm3_forward.1} parent=1 // pred_check_branch
      %124 = sbr.rel (0) target = $region53
    $region52: #{sm3_forward.1} parent=1 // pred_region
      %125 = dma.done [#allocation9], 16384
    $region53: #{sm3_forward.1} parent=1 // pred_fallthru
      _
    // Predicated region
    $region54: #{sm3_forward.1} parent=1 // pred_check
      _
    $region55: #{sm3_forward.1} parent=1 // pred_check_branch
      %127 = sbr.rel (0) target = $region57
    $region56: #{sm3_forward.1} parent=1 // pred_region
      %128 = dma.done [#allocation9], 8192
    $region57: #{sm3_forward.1} parent=1 // pred_fallthru
      _
    // Predicated region
    $region58: #{sm3_forward.1} parent=1 // pred_check
      _
    $region59: #{sm3_forward.1} parent=1 // pred_check_branch
      %130 = sbr.rel (0) target = $region61
    $region60: #{sm3_forward.1} parent=1 // pred_region
      %131 = dma.done [#allocation12], 8192
    $region61: #{sm3_forward.1} parent=1 // pred_fallthru
      _
    // Predicated region
    $region62: #{sm3_forward.1} parent=1 // pred_check
      _
    $region63: #{sm3_forward.1} parent=1 // pred_check_branch
      %133 = sbr.rel (0) target = $region65
    $region64: #{sm3_forward.1} parent=1 // pred_region
      %134 = dma.done [#allocation12], 24576
    $region65: #{sm3_forward.1} parent=1 // pred_fallthru
      _
    // Predicated region
    $region66: #{sm3_forward.1} parent=1 // pred_check
      _
    $region67: #{sm3_forward.1} parent=1 // pred_check_branch
      %136 = sbr.rel (0) target = $region69
    $region68: #{sm3_forward.1} parent=1 // pred_region
      %137 = dma.done [#allocation15], 768
    $region69: #{sm3_forward.1} parent=1 // pred_fallthru
      _
    %v138 = vld [vmem:[#allocation2] sm:$0xff]
    %v139 = vld [vmem:[#allocation2 + $0x8] sm:$0xff]
    %v140 = vld [vmem:[#allocation2 + $0x10] sm:$0xff]
    %v141 = vld [vmem:[#allocation2 + $0x18] sm:$0xff]
    %v142 = vld [vmem:[#allocation2 + $0x20] sm:$0xff]
    %v143 = vld [vmem:[#allocation2 + $0x28] sm:$0xff]
    %v144 = vpack.c.bf16 %v138, %v138
    %v145 = vpack.c.bf16 %v139, %v139
    %v146 = vpack.c.bf16 %v140, %v140
    %v147 = vpack.c.bf16 %v141, %v141
    %v148 = vpack.c.bf16 %v142, %v142
    %v149 = vpack.c.bf16 %v143, %v143
    %v150 = vld [vmem:[#allocation5] sm:$0xff]
    %v151 = vld [vmem:[#allocation5 + $0x8] sm:$0xff]
    %v152 = vld [vmem:[#allocation5 + $0x10] sm:$0xff]
    %v153 = vld [vmem:[#allocation5 + $0x18] sm:$0xff]
    %v154 = vld [vmem:[#allocation5 + $0x20] sm:$0xff]
    %v155 = vld [vmem:[#allocation5 + $0x28] sm:$0xff]
    %v156 = vld [vmem:[#allocation5 + $0x30] sm:$0xff]
    %v157 = vld [vmem:[#allocation5 + $0x38] sm:$0xff]
    %v158 = vld [vmem:[#allocation5 + $0x40] sm:$0xff]
    %v159 = vld [vmem:[#allocation5 + $0x48] sm:$0xff]
    %v160 = vld [vmem:[#allocation5 + $0x50] sm:$0xff]
    %v161 = vld [vmem:[#allocation5 + $0x58] sm:$0xff]
    %v162 = vld [vmem:[#allocation5 + $0x60] sm:$0xff]
    %v163 = vld [vmem:[#allocation5 + $0x68] sm:$0xff]
    %v164 = vld [vmem:[#allocation5 + $0x70] sm:$0xff]
    %v165 = vld [vmem:[#allocation5 + $0x78] sm:$0xff]
    %v166 = vld [vmem:[#allocation5 + $0x80] sm:$0xff]
    %v167 = vld [vmem:[#allocation5 + $0x88] sm:$0xff]
    %v168 = vld [vmem:[#allocation5 + $0x90] sm:$0xff]
    %v169 = vld [vmem:[#allocation5 + $0x98] sm:$0xff]
    %v170 = vld [vmem:[#allocation5 + $0xa0] sm:$0xff]
    %v171 = vld [vmem:[#allocation5 + $0xa8] sm:$0xff]
    %v172 = vld [vmem:[#allocation5 + $0xb0] sm:$0xff]
    %v173 = vld [vmem:[#allocation5 + $0xb8] sm:$0xff]
    %v174 = vld [vmem:[#allocation5 + $0xc0] sm:$0xff]
    %v175 = vld [vmem:[#allocation5 + $0xc8] sm:$0xff]
    %v176 = vld [vmem:[#allocation5 + $0xd0] sm:$0xff]
    %v177 = vld [vmem:[#allocation5 + $0xd8] sm:$0xff]
    %v178 = vld [vmem:[#allocation5 + $0xe0] sm:$0xff]
    %v179 = vld [vmem:[#allocation5 + $0xe8] sm:$0xff]
    %v180 = vld [vmem:[#allocation5 + $0xf0] sm:$0xff]
    %v181 = vld [vmem:[#allocation5 + $0xf8] sm:$0xff]
    %v182 = vld [vmem:[#allocation5 + $0x100] sm:$0xff]
    %v183 = vld [vmem:[#allocation5 + $0x108] sm:$0xff]
    %v184 = vld [vmem:[#allocation5 + $0x110] sm:$0xff]
    %v185 = vld [vmem:[#allocation5 + $0x118] sm:$0xff]
    %v186 = vld [vmem:[#allocation5 + $0x120] sm:$0xff]
    %v187 = vld [vmem:[#allocation5 + $0x128] sm:$0xff]
    %v188 = vld [vmem:[#allocation5 + $0x130] sm:$0xff]
    %v189 = vld [vmem:[#allocation5 + $0x138] sm:$0xff]
    %v190 = vld [vmem:[#allocation5 + $0x140] sm:$0xff]
    %v191 = vld [vmem:[#allocation5 + $0x148] sm:$0xff]
    %v192 = vld [vmem:[#allocation5 + $0x150] sm:$0xff]
    %v193 = vld [vmem:[#allocation5 + $0x158] sm:$0xff]
    %v194 = vld [vmem:[#allocation5 + $0x160] sm:$0xff]
    %v195 = vld [vmem:[#allocation5 + $0x168] sm:$0xff]
    %v196 = vld [vmem:[#allocation5 + $0x170] sm:$0xff]
    %v197 = vld [vmem:[#allocation5 + $0x178] sm:$0xff]
    %v198 = vld [vmem:[#allocation5 + $0x180] sm:$0xff]
    %v199 = vld [vmem:[#allocation5 + $0x188] sm:$0xff]
    %v200 = vld [vmem:[#allocation5 + $0x190] sm:$0xff]
    %v201 = vld [vmem:[#allocation5 + $0x198] sm:$0xff]
    %v202 = vld [vmem:[#allocation5 + $0x1a0] sm:$0xff]
    %v203 = vld [vmem:[#allocation5 + $0x1a8] sm:$0xff]
    %v204 = vld [vmem:[#allocation5 + $0x1b0] sm:$0xff]
    %v205 = vld [vmem:[#allocation5 + $0x1b8] sm:$0xff]
    %v206 = vld [vmem:[#allocation5 + $0x1c0] sm:$0xff]
    %v207 = vld [vmem:[#allocation5 + $0x1c8] sm:$0xff]
    %v208 = vld [vmem:[#allocation5 + $0x1d0] sm:$0xff]
    %v209 = vld [vmem:[#allocation5 + $0x1d8] sm:$0xff]
    %v210 = vld [vmem:[#allocation5 + $0x1e0] sm:$0xff]
    %v211 = vld [vmem:[#allocation5 + $0x1e8] sm:$0xff]
    %v212 = vld [vmem:[#allocation5 + $0x1f0] sm:$0xff]
    %v213 = vld [vmem:[#allocation5 + $0x1f8] sm:$0xff]
    %v214 = vld [vmem:[#allocation5 + $0x200] sm:$0xff]
    %v215 = vld [vmem:[#allocation5 + $0x208] sm:$0xff]
    %v216 = vld [vmem:[#allocation5 + $0x210] sm:$0xff]
    %v217 = vld [vmem:[#allocation5 + $0x218] sm:$0xff]
    %v218 = vld [vmem:[#allocation5 + $0x220] sm:$0xff]
    %v219 = vld [vmem:[#allocation5 + $0x228] sm:$0xff]
    %v220 = vld [vmem:[#allocation5 + $0x230] sm:$0xff]
    %v221 = vld [vmem:[#allocation5 + $0x238] sm:$0xff]
    %v222 = vld [vmem:[#allocation5 + $0x240] sm:$0xff]
    %v223 = vld [vmem:[#allocation5 + $0x248] sm:$0xff]
    %v224 = vld [vmem:[#allocation5 + $0x250] sm:$0xff]
    %v225 = vld [vmem:[#allocation5 + $0x258] sm:$0xff]
    %v226 = vld [vmem:[#allocation5 + $0x260] sm:$0xff]
    %v227 = vld [vmem:[#allocation5 + $0x268] sm:$0xff]
    %v228 = vld [vmem:[#allocation5 + $0x270] sm:$0xff]
    %v229 = vld [vmem:[#allocation5 + $0x278] sm:$0xff]
    %v230 = vld [vmem:[#allocation5 + $0x280] sm:$0xff]
    %v231 = vld [vmem:[#allocation5 + $0x288] sm:$0xff]
    %v232 = vld [vmem:[#allocation5 + $0x290] sm:$0xff]
    %v233 = vld [vmem:[#allocation5 + $0x298] sm:$0xff]
    %v234 = vld [vmem:[#allocation5 + $0x2a0] sm:$0xff]
    %v235 = vld [vmem:[#allocation5 + $0x2a8] sm:$0xff]
    %v236 = vld [vmem:[#allocation5 + $0x2b0] sm:$0xff]
    %v237 = vld [vmem:[#allocation5 + $0x2b8] sm:$0xff]
    %v238 = vld [vmem:[#allocation5 + $0x2c0] sm:$0xff]
    %v239 = vld [vmem:[#allocation5 + $0x2c8] sm:$0xff]
    %v240 = vld [vmem:[#allocation5 + $0x2d0] sm:$0xff]
    %v241 = vld [vmem:[#allocation5 + $0x2d8] sm:$0xff]
    %v242 = vld [vmem:[#allocation5 + $0x2e0] sm:$0xff]
    %v243 = vld [vmem:[#allocation5 + $0x2e8] sm:$0xff]
    %v244 = vld [vmem:[#allocation5 + $0x2f0] sm:$0xff]
    %v245 = vld [vmem:[#allocation5 + $0x2f8] sm:$0xff]
    %v246 = vld [vmem:[#allocation5 + $0x300] sm:$0xff]
    %v247 = vld [vmem:[#allocation5 + $0x308] sm:$0xff]
    %v248 = vld [vmem:[#allocation5 + $0x310] sm:$0xff]
    %v249 = vld [vmem:[#allocation5 + $0x318] sm:$0xff]
    %v250 = vld [vmem:[#allocation5 + $0x320] sm:$0xff]
    %v251 = vld [vmem:[#allocation5 + $0x328] sm:$0xff]
    %v252 = vld [vmem:[#allocation5 + $0x330] sm:$0xff]
    %v253 = vld [vmem:[#allocation5 + $0x338] sm:$0xff]
    %v254 = vld [vmem:[#allocation5 + $0x340] sm:$0xff]
    %v255 = vld [vmem:[#allocation5 + $0x348] sm:$0xff]
    %v256 = vld [vmem:[#allocation5 + $0x350] sm:$0xff]
    %v257 = vld [vmem:[#allocation5 + $0x358] sm:$0xff]
    %v258 = vld [vmem:[#allocation5 + $0x360] sm:$0xff]
    %v259 = vld [vmem:[#allocation5 + $0x368] sm:$0xff]
    %v260 = vld [vmem:[#allocation5 + $0x370] sm:$0xff]
    %v261 = vld [vmem:[#allocation5 + $0x378] sm:$0xff]
    %v262 = vld [vmem:[#allocation5 + $0x380] sm:$0xff]
    %v263 = vld [vmem:[#allocation5 + $0x388] sm:$0xff]
    %v264 = vld [vmem:[#allocation5 + $0x390] sm:$0xff]
    %v265 = vld [vmem:[#allocation5 + $0x398] sm:$0xff]
    %v266 = vld [vmem:[#allocation5 + $0x3a0] sm:$0xff]
    %v267 = vld [vmem:[#allocation5 + $0x3a8] sm:$0xff]
    %v268 = vld [vmem:[#allocation5 + $0x3b0] sm:$0xff]
    %v269 = vld [vmem:[#allocation5 + $0x3b8] sm:$0xff]
    %v270 = vld [vmem:[#allocation5 + $0x3c0] sm:$0xff]
    %v271 = vld [vmem:[#allocation5 + $0x3c8] sm:$0xff]
    %v272 = vld [vmem:[#allocation5 + $0x3d0] sm:$0xff]
    %v273 = vld [vmem:[#allocation5 + $0x3d8] sm:$0xff]
    %v274 = vld [vmem:[#allocation5 + $0x3e0] sm:$0xff]
    %v275 = vld [vmem:[#allocation5 + $0x3e8] sm:$0xff]
    %v276 = vld [vmem:[#allocation5 + $0x3f0] sm:$0xff]
    %v277 = vld [vmem:[#allocation5 + $0x3f8] sm:$0xff]
    %v278 = vld [vmem:[#allocation5 + $0x400] sm:$0xff]
    %v279 = vld [vmem:[#allocation5 + $0x408] sm:$0xff]
    %v280 = vld [vmem:[#allocation5 + $0x410] sm:$0xff]
    %v281 = vld [vmem:[#allocation5 + $0x418] sm:$0xff]
    %v282 = vld [vmem:[#allocation5 + $0x420] sm:$0xff]
    %v283 = vld [vmem:[#allocation5 + $0x428] sm:$0xff]
    %v284 = vld [vmem:[#allocation5 + $0x430] sm:$0xff]
    %v285 = vld [vmem:[#allocation5 + $0x438] sm:$0xff]
    %v286 = vld [vmem:[#allocation5 + $0x440] sm:$0xff]
    %v287 = vld [vmem:[#allocation5 + $0x448] sm:$0xff]
    %v288 = vld [vmem:[#allocation5 + $0x450] sm:$0xff]
    %v289 = vld [vmem:[#allocation5 + $0x458] sm:$0xff]
    %v290 = vld [vmem:[#allocation5 + $0x460] sm:$0xff]
    %v291 = vld [vmem:[#allocation5 + $0x468] sm:$0xff]
    %v292 = vld [vmem:[#allocation5 + $0x470] sm:$0xff]
    %v293 = vld [vmem:[#allocation5 + $0x478] sm:$0xff]
    %v294 = vld [vmem:[#allocation5 + $0x480] sm:$0xff]
    %v295 = vld [vmem:[#allocation5 + $0x488] sm:$0xff]
    %v296 = vld [vmem:[#allocation5 + $0x490] sm:$0xff]
    %v297 = vld [vmem:[#allocation5 + $0x498] sm:$0xff]
    %v298 = vld [vmem:[#allocation5 + $0x4a0] sm:$0xff]
    %v299 = vld [vmem:[#allocation5 + $0x4a8] sm:$0xff]
    %v300 = vld [vmem:[#allocation5 + $0x4b0] sm:$0xff]
    %v301 = vld [vmem:[#allocation5 + $0x4b8] sm:$0xff]
    %v302 = vld [vmem:[#allocation5 + $0x4c0] sm:$0xff]
    %v303 = vld [vmem:[#allocation5 + $0x4c8] sm:$0xff]
    %v304 = vld [vmem:[#allocation5 + $0x4d0] sm:$0xff]
    %v305 = vld [vmem:[#allocation5 + $0x4d8] sm:$0xff]
    %v306 = vld [vmem:[#allocation5 + $0x4e0] sm:$0xff]
    %v307 = vld [vmem:[#allocation5 + $0x4e8] sm:$0xff]
    %v308 = vld [vmem:[#allocation5 + $0x4f0] sm:$0xff]
    %v309 = vld [vmem:[#allocation5 + $0x4f8] sm:$0xff]
    %v310 = vld [vmem:[#allocation5 + $0x500] sm:$0xff]
    %v311 = vld [vmem:[#allocation5 + $0x508] sm:$0xff]
    %v312 = vld [vmem:[#allocation5 + $0x510] sm:$0xff]
    %v313 = vld [vmem:[#allocation5 + $0x518] sm:$0xff]
    %v314 = vld [vmem:[#allocation5 + $0x520] sm:$0xff]
    %v315 = vld [vmem:[#allocation5 + $0x528] sm:$0xff]
    %v316 = vld [vmem:[#allocation5 + $0x530] sm:$0xff]
    %v317 = vld [vmem:[#allocation5 + $0x538] sm:$0xff]
    %v318 = vld [vmem:[#allocation5 + $0x540] sm:$0xff]
    %v319 = vld [vmem:[#allocation5 + $0x548] sm:$0xff]
    %v320 = vld [vmem:[#allocation5 + $0x550] sm:$0xff]
    %v321 = vld [vmem:[#allocation5 + $0x558] sm:$0xff]
    %v322 = vld [vmem:[#allocation5 + $0x560] sm:$0xff]
    %v323 = vld [vmem:[#allocation5 + $0x568] sm:$0xff]
    %v324 = vld [vmem:[#allocation5 + $0x570] sm:$0xff]
    %v325 = vld [vmem:[#allocation5 + $0x578] sm:$0xff]
    %v326 = vld [vmem:[#allocation5 + $0x580] sm:$0xff]
    %v327 = vld [vmem:[#allocation5 + $0x588] sm:$0xff]
    %v328 = vld [vmem:[#allocation5 + $0x590] sm:$0xff]
    %v329 = vld [vmem:[#allocation5 + $0x598] sm:$0xff]
    %v330 = vld [vmem:[#allocation5 + $0x5a0] sm:$0xff]
    %v331 = vld [vmem:[#allocation5 + $0x5a8] sm:$0xff]
    %v332 = vld [vmem:[#allocation5 + $0x5b0] sm:$0xff]
    %v333 = vld [vmem:[#allocation5 + $0x5b8] sm:$0xff]
    %v334 = vld [vmem:[#allocation5 + $0x5c0] sm:$0xff]
    %v335 = vld [vmem:[#allocation5 + $0x5c8] sm:$0xff]
    %v336 = vld [vmem:[#allocation5 + $0x5d0] sm:$0xff]
    %v337 = vld [vmem:[#allocation5 + $0x5d8] sm:$0xff]
    %v338 = vld [vmem:[#allocation5 + $0x5e0] sm:$0xff]
    %v339 = vld [vmem:[#allocation5 + $0x5e8] sm:$0xff]
    %v340 = vld [vmem:[#allocation5 + $0x5f0] sm:$0xff]
    %v341 = vld [vmem:[#allocation5 + $0x5f8] sm:$0xff]
    %v342 = vld [vmem:[#allocation14] ss:$8 sm:$0xf]
    %v344 = vlaneseq
    %v345 = vshrl.u32 %v344, 7
    %v346 = vsub.s32 0, %v345
    %v347 = vrot.slane %v342, %v346
    %v348 = vlaneseq
    %v349 = vshrl.u32 %v348, 7
    %v350 = vsub.s32 1, %v349
    %v351 = vrot.slane %v342, %v350
    %v352 = vlaneseq
    %v353 = vshrl.u32 %v352, 7
    %v354 = vsub.s32 2, %v353
    %v355 = vrot.slane %v342, %v354
    %v356 = vlaneseq
    %v357 = vshrl.u32 %v356, 7
    %v358 = vsub.s32 3, %v357
    %v359 = vrot.slane %v342, %v358
    %v556 = vunpack.c.l.b16 %v150
    %v557 = vunpack.c.h.b16 %v150
    %v558 = vunpack.c.l.b16 %v151
    %v559 = vunpack.c.h.b16 %v151
    %v560 = vunpack.c.l.b16 %v152
    %v561 = vunpack.c.h.b16 %v152
    %v562 = vunpack.c.l.b16 %v153
    %v563 = vunpack.c.h.b16 %v153
    %v564 = vunpack.c.l.b16 %v154
    %v565 = vunpack.c.h.b16 %v154
    %v566 = vunpack.c.l.b16 %v155
    %v567 = vunpack.c.h.b16 %v155
    %v568 = vunpack.c.l.b16 %v156
    %v569 = vunpack.c.h.b16 %v156
    %v570 = vunpack.c.l.b16 %v157
    %v571 = vunpack.c.h.b16 %v157
    %v572 = vunpack.c.l.b16 %v158
    %v573 = vunpack.c.h.b16 %v158
    %v574 = vunpack.c.l.b16 %v159
    %v575 = vunpack.c.h.b16 %v159
    %v576 = vunpack.c.l.b16 %v160
    %v577 = vunpack.c.h.b16 %v160
    %v578 = vunpack.c.l.b16 %v161
    %v579 = vunpack.c.h.b16 %v161
    %v580 = vunpack.c.l.b16 %v162
    %v581 = vunpack.c.h.b16 %v162
    %v582 = vunpack.c.l.b16 %v163
    %v583 = vunpack.c.h.b16 %v163
    %v584 = vunpack.c.l.b16 %v164
    %v585 = vunpack.c.h.b16 %v164
    %v586 = vunpack.c.l.b16 %v165
    %v587 = vunpack.c.h.b16 %v165
    %v588 = vunpack.c.l.b16 %v166
    %v589 = vunpack.c.h.b16 %v166
    %v590 = vunpack.c.l.b16 %v167
    %v591 = vunpack.c.h.b16 %v167
    %v592 = vunpack.c.l.b16 %v168
    %v593 = vunpack.c.h.b16 %v168
    %v594 = vunpack.c.l.b16 %v169
    %v595 = vunpack.c.h.b16 %v169
    %v596 = vunpack.c.l.b16 %v170
    %v597 = vunpack.c.h.b16 %v170
    %v598 = vunpack.c.l.b16 %v171
    %v599 = vunpack.c.h.b16 %v171
    %v600 = vunpack.c.l.b16 %v172
    %v601 = vunpack.c.h.b16 %v172
    %v602 = vunpack.c.l.b16 %v173
    %v603 = vunpack.c.h.b16 %v173
    %v604 = vunpack.c.l.b16 %v174
    %v605 = vunpack.c.h.b16 %v174
    %v606 = vunpack.c.l.b16 %v175
    %v607 = vunpack.c.h.b16 %v175
    %v608 = vunpack.c.l.b16 %v176
    %v609 = vunpack.c.h.b16 %v176
    %v610 = vunpack.c.l.b16 %v177
    %v611 = vunpack.c.h.b16 %v177
    %v612 = vunpack.c.l.b16 %v178
    %v613 = vunpack.c.h.b16 %v178
    %v614 = vunpack.c.l.b16 %v179
    %v615 = vunpack.c.h.b16 %v179
    %v616 = vunpack.c.l.b16 %v180
    %v617 = vunpack.c.h.b16 %v180
    %v618 = vunpack.c.l.b16 %v181
    %v619 = vunpack.c.h.b16 %v181
    %v620 = vunpack.c.l.b16 %v182
    %v621 = vunpack.c.h.b16 %v182
    %v622 = vunpack.c.l.b16 %v183
    %v623 = vunpack.c.h.b16 %v183
    %v624 = vunpack.c.l.b16 %v184
    %v625 = vunpack.c.h.b16 %v184
    %v626 = vunpack.c.l.b16 %v185
    %v627 = vunpack.c.h.b16 %v185
    %v628 = vunpack.c.l.b16 %v186
    %v629 = vunpack.c.h.b16 %v186
    %v630 = vunpack.c.l.b16 %v187
    %v631 = vunpack.c.h.b16 %v187
    %v632 = vunpack.c.l.b16 %v188
    %v633 = vunpack.c.h.b16 %v188
    %v634 = vunpack.c.l.b16 %v189
    %v635 = vunpack.c.h.b16 %v189
    %v636 = vunpack.c.l.b16 %v190
    %v637 = vunpack.c.h.b16 %v190
    %v638 = vunpack.c.l.b16 %v191
    %v639 = vunpack.c.h.b16 %v191
    %v640 = vunpack.c.l.b16 %v192
    %v641 = vunpack.c.h.b16 %v192
    %v642 = vunpack.c.l.b16 %v193
    %v643 = vunpack.c.h.b16 %v193
    %v644 = vunpack.c.l.b16 %v194
    %v645 = vunpack.c.h.b16 %v194
    %v646 = vunpack.c.l.b16 %v195
    %v647 = vunpack.c.h.b16 %v195
    %v648 = vunpack.c.l.b16 %v196
    %v649 = vunpack.c.h.b16 %v196
    %v650 = vunpack.c.l.b16 %v197
    %v651 = vunpack.c.h.b16 %v197
    %v652 = vunpack.c.l.b16 %v198
    %v653 = vunpack.c.h.b16 %v198
    %v654 = vunpack.c.l.b16 %v199
    %v655 = vunpack.c.h.b16 %v199
    %v656 = vunpack.c.l.b16 %v200
    %v657 = vunpack.c.h.b16 %v200
    %v658 = vunpack.c.l.b16 %v201
    %v659 = vunpack.c.h.b16 %v201
    %v660 = vunpack.c.l.b16 %v202
    %v661 = vunpack.c.h.b16 %v202
    %v662 = vunpack.c.l.b16 %v203
    %v663 = vunpack.c.h.b16 %v203
    %v664 = vunpack.c.l.b16 %v204
    %v665 = vunpack.c.h.b16 %v204
    %v666 = vunpack.c.l.b16 %v205
    %v667 = vunpack.c.h.b16 %v205
    %v668 = vunpack.c.l.b16 %v206
    %v669 = vunpack.c.h.b16 %v206
    %v670 = vunpack.c.l.b16 %v207
    %v671 = vunpack.c.h.b16 %v207
    %v672 = vunpack.c.l.b16 %v208
    %v673 = vunpack.c.h.b16 %v208
    %v674 = vunpack.c.l.b16 %v209
    %v675 = vunpack.c.h.b16 %v209
    %v676 = vunpack.c.l.b16 %v210
    %v677 = vunpack.c.h.b16 %v210
    %v678 = vunpack.c.l.b16 %v211
    %v679 = vunpack.c.h.b16 %v211
    %v680 = vunpack.c.l.b16 %v212
    %v681 = vunpack.c.h.b16 %v212
    %v682 = vunpack.c.l.b16 %v213
    %v683 = vunpack.c.h.b16 %v213
    %v684 = vunpack.c.l.b16 %v214
    %v685 = vunpack.c.h.b16 %v214
    %v686 = vunpack.c.l.b16 %v215
    %v687 = vunpack.c.h.b16 %v215
    %v688 = vunpack.c.l.b16 %v216
    %v689 = vunpack.c.h.b16 %v216
    %v690 = vunpack.c.l.b16 %v217
    %v691 = vunpack.c.h.b16 %v217
    %v692 = vunpack.c.l.b16 %v218
    %v693 = vunpack.c.h.b16 %v218
    %v694 = vunpack.c.l.b16 %v219
    %v695 = vunpack.c.h.b16 %v219
    %v696 = vunpack.c.l.b16 %v220
    %v697 = vunpack.c.h.b16 %v220
    %v698 = vunpack.c.l.b16 %v221
    %v699 = vunpack.c.h.b16 %v221
    %v700 = vunpack.c.l.b16 %v222
    %v701 = vunpack.c.h.b16 %v222
    %v702 = vunpack.c.l.b16 %v223
    %v703 = vunpack.c.h.b16 %v223
    %v704 = vunpack.c.l.b16 %v224
    %v705 = vunpack.c.h.b16 %v224
    %v706 = vunpack.c.l.b16 %v225
    %v707 = vunpack.c.h.b16 %v225
    %v708 = vunpack.c.l.b16 %v226
    %v709 = vunpack.c.h.b16 %v226
    %v710 = vunpack.c.l.b16 %v227
    %v711 = vunpack.c.h.b16 %v227
    %v712 = vunpack.c.l.b16 %v228
    %v713 = vunpack.c.h.b16 %v228
    %v714 = vunpack.c.l.b16 %v229
    %v715 = vunpack.c.h.b16 %v229
    %v716 = vunpack.c.l.b16 %v230
    %v717 = vunpack.c.h.b16 %v230
    %v718 = vunpack.c.l.b16 %v231
    %v719 = vunpack.c.h.b16 %v231
    %v720 = vunpack.c.l.b16 %v232
    %v721 = vunpack.c.h.b16 %v232
    %v722 = vunpack.c.l.b16 %v233
    %v723 = vunpack.c.h.b16 %v233
    %v724 = vunpack.c.l.b16 %v234
    %v725 = vunpack.c.h.b16 %v234
    %v726 = vunpack.c.l.b16 %v235
    %v727 = vunpack.c.h.b16 %v235
    %v728 = vunpack.c.l.b16 %v236
    %v729 = vunpack.c.h.b16 %v236
    %v730 = vunpack.c.l.b16 %v237
    %v731 = vunpack.c.h.b16 %v237
    %v732 = vunpack.c.l.b16 %v238
    %v733 = vunpack.c.h.b16 %v238
    %v734 = vunpack.c.l.b16 %v239
    %v735 = vunpack.c.h.b16 %v239
    %v736 = vunpack.c.l.b16 %v240
    %v737 = vunpack.c.h.b16 %v240
    %v738 = vunpack.c.l.b16 %v241
    %v739 = vunpack.c.h.b16 %v241
    %v740 = vunpack.c.l.b16 %v242
    %v741 = vunpack.c.h.b16 %v242
    %v742 = vunpack.c.l.b16 %v243
    %v743 = vunpack.c.h.b16 %v243
    %v744 = vunpack.c.l.b16 %v244
    %v745 = vunpack.c.h.b16 %v244
    %v746 = vunpack.c.l.b16 %v245
    %v747 = vunpack.c.h.b16 %v245
    %v748 = vunpack.c.l.b16 %v246
    %v749 = vunpack.c.h.b16 %v246
    %v750 = vunpack.c.l.b16 %v247
    %v751 = vunpack.c.h.b16 %v247
    %v752 = vunpack.c.l.b16 %v248
    %v753 = vunpack.c.h.b16 %v248
    %v754 = vunpack.c.l.b16 %v249
    %v755 = vunpack.c.h.b16 %v249
    %v756 = vunpack.c.l.b16 %v250
    %v757 = vunpack.c.h.b16 %v250
    %v758 = vunpack.c.l.b16 %v251
    %v759 = vunpack.c.h.b16 %v251
    %v760 = vunpack.c.l.b16 %v252
    %v761 = vunpack.c.h.b16 %v252
    %v762 = vunpack.c.l.b16 %v253
    %v763 = vunpack.c.h.b16 %v253
    %v764 = vunpack.c.l.b16 %v254
    %v765 = vunpack.c.h.b16 %v254
    %v766 = vunpack.c.l.b16 %v255
    %v767 = vunpack.c.h.b16 %v255
    %v768 = vunpack.c.l.b16 %v256
    %v769 = vunpack.c.h.b16 %v256
    %v770 = vunpack.c.l.b16 %v257
    %v771 = vunpack.c.h.b16 %v257
    %v772 = vunpack.c.l.b16 %v258
    %v773 = vunpack.c.h.b16 %v258
    %v774 = vunpack.c.l.b16 %v259
    %v775 = vunpack.c.h.b16 %v259
    %v776 = vunpack.c.l.b16 %v260
    %v777 = vunpack.c.h.b16 %v260
    %v778 = vunpack.c.l.b16 %v261
    %v779 = vunpack.c.h.b16 %v261
    %v780 = vunpack.c.l.b16 %v262
    %v781 = vunpack.c.h.b16 %v262
    %v782 = vunpack.c.l.b16 %v263
    %v783 = vunpack.c.h.b16 %v263
    %v784 = vunpack.c.l.b16 %v264
    %v785 = vunpack.c.h.b16 %v264
    %v786 = vunpack.c.l.b16 %v265
    %v787 = vunpack.c.h.b16 %v265
    %v788 = vunpack.c.l.b16 %v266
    %v789 = vunpack.c.h.b16 %v266
    %v790 = vunpack.c.l.b16 %v267
    %v791 = vunpack.c.h.b16 %v267
    %v792 = vunpack.c.l.b16 %v268
    %v793 = vunpack.c.h.b16 %v268
    %v794 = vunpack.c.l.b16 %v269
    %v795 = vunpack.c.h.b16 %v269
    %v796 = vunpack.c.l.b16 %v270
    %v797 = vunpack.c.h.b16 %v270
    %v798 = vunpack.c.l.b16 %v271
    %v799 = vunpack.c.h.b16 %v271
    %v800 = vunpack.c.l.b16 %v272
    %v801 = vunpack.c.h.b16 %v272
    %v802 = vunpack.c.l.b16 %v273
    %v803 = vunpack.c.h.b16 %v273
    %v804 = vunpack.c.l.b16 %v274
    %v805 = vunpack.c.h.b16 %v274
    %v806 = vunpack.c.l.b16 %v275
    %v807 = vunpack.c.h.b16 %v275
    %v808 = vunpack.c.l.b16 %v276
    %v809 = vunpack.c.h.b16 %v276
    %v810 = vunpack.c.l.b16 %v277
    %v811 = vunpack.c.h.b16 %v277
    %v812 = vunpack.c.l.b16 %v278
    %v813 = vunpack.c.h.b16 %v278
    %v814 = vunpack.c.l.b16 %v279
    %v815 = vunpack.c.h.b16 %v279
    %v816 = vunpack.c.l.b16 %v280
    %v817 = vunpack.c.h.b16 %v280
    %v818 = vunpack.c.l.b16 %v281
    %v819 = vunpack.c.h.b16 %v281
    %v820 = vunpack.c.l.b16 %v282
    %v821 = vunpack.c.h.b16 %v282
    %v822 = vunpack.c.l.b16 %v283
    %v823 = vunpack.c.h.b16 %v283
    %v824 = vunpack.c.l.b16 %v284
    %v825 = vunpack.c.h.b16 %v284
    %v826 = vunpack.c.l.b16 %v285
    %v827 = vunpack.c.h.b16 %v285
    %v828 = vunpack.c.l.b16 %v286
    %v829 = vunpack.c.h.b16 %v286
    %v830 = vunpack.c.l.b16 %v287
    %v831 = vunpack.c.h.b16 %v287
    %v832 = vunpack.c.l.b16 %v288
    %v833 = vunpack.c.h.b16 %v288
    %v834 = vunpack.c.l.b16 %v289
    %v835 = vunpack.c.h.b16 %v289
    %v836 = vunpack.c.l.b16 %v290
    %v837 = vunpack.c.h.b16 %v290
    %v838 = vunpack.c.l.b16 %v291
    %v839 = vunpack.c.h.b16 %v291
    %v840 = vunpack.c.l.b16 %v292
    %v841 = vunpack.c.h.b16 %v292
    %v842 = vunpack.c.l.b16 %v293
    %v843 = vunpack.c.h.b16 %v293
    %v844 = vunpack.c.l.b16 %v294
    %v845 = vunpack.c.h.b16 %v294
    %v846 = vunpack.c.l.b16 %v295
    %v847 = vunpack.c.h.b16 %v295
    %v848 = vunpack.c.l.b16 %v296
    %v849 = vunpack.c.h.b16 %v296
    %v850 = vunpack.c.l.b16 %v297
    %v851 = vunpack.c.h.b16 %v297
    %v852 = vunpack.c.l.b16 %v298
    %v853 = vunpack.c.h.b16 %v298
    %v854 = vunpack.c.l.b16 %v299
    %v855 = vunpack.c.h.b16 %v299
    %v856 = vunpack.c.l.b16 %v300
    %v857 = vunpack.c.h.b16 %v300
    %v858 = vunpack.c.l.b16 %v301
    %v859 = vunpack.c.h.b16 %v301
    %v860 = vunpack.c.l.b16 %v302
    %v861 = vunpack.c.h.b16 %v302
    %v862 = vunpack.c.l.b16 %v303
    %v863 = vunpack.c.h.b16 %v303
    %v864 = vunpack.c.l.b16 %v304
    %v865 = vunpack.c.h.b16 %v304
    %v866 = vunpack.c.l.b16 %v305
    %v867 = vunpack.c.h.b16 %v305
    %v868 = vunpack.c.l.b16 %v306
    %v869 = vunpack.c.h.b16 %v306
    %v870 = vunpack.c.l.b16 %v307
    %v871 = vunpack.c.h.b16 %v307
    %v872 = vunpack.c.l.b16 %v308
    %v873 = vunpack.c.h.b16 %v308
    %v874 = vunpack.c.l.b16 %v309
    %v875 = vunpack.c.h.b16 %v309
    %v876 = vunpack.c.l.b16 %v310
    %v877 = vunpack.c.h.b16 %v310
    %v878 = vunpack.c.l.b16 %v311
    %v879 = vunpack.c.h.b16 %v311
    %v880 = vunpack.c.l.b16 %v312
    %v881 = vunpack.c.h.b16 %v312
    %v882 = vunpack.c.l.b16 %v313
    %v883 = vunpack.c.h.b16 %v313
    %v884 = vunpack.c.l.b16 %v314
    %v885 = vunpack.c.h.b16 %v314
    %v886 = vunpack.c.l.b16 %v315
    %v887 = vunpack.c.h.b16 %v315
    %v888 = vunpack.c.l.b16 %v316
    %v889 = vunpack.c.h.b16 %v316
    %v890 = vunpack.c.l.b16 %v317
    %v891 = vunpack.c.h.b16 %v317
    %v892 = vunpack.c.l.b16 %v318
    %v893 = vunpack.c.h.b16 %v318
    %v894 = vunpack.c.l.b16 %v319
    %v895 = vunpack.c.h.b16 %v319
    %v896 = vunpack.c.l.b16 %v320
    %v897 = vunpack.c.h.b16 %v320
    %v898 = vunpack.c.l.b16 %v321
    %v899 = vunpack.c.h.b16 %v321
    %v900 = vunpack.c.l.b16 %v322
    %v901 = vunpack.c.h.b16 %v322
    %v902 = vunpack.c.l.b16 %v323
    %v903 = vunpack.c.h.b16 %v323
    %v904 = vunpack.c.l.b16 %v324
    %v905 = vunpack.c.h.b16 %v324
    %v906 = vunpack.c.l.b16 %v325
    %v907 = vunpack.c.h.b16 %v325
    %v908 = vunpack.c.l.b16 %v326
    %v909 = vunpack.c.h.b16 %v326
    %v910 = vunpack.c.l.b16 %v327
    %v911 = vunpack.c.h.b16 %v327
    %v912 = vunpack.c.l.b16 %v328
    %v913 = vunpack.c.h.b16 %v328
    %v914 = vunpack.c.l.b16 %v329
    %v915 = vunpack.c.h.b16 %v329
    %v916 = vunpack.c.l.b16 %v330
    %v917 = vunpack.c.h.b16 %v330
    %v918 = vunpack.c.l.b16 %v331
    %v919 = vunpack.c.h.b16 %v331
    %v920 = vunpack.c.l.b16 %v332
    %v921 = vunpack.c.h.b16 %v332
    %v922 = vunpack.c.l.b16 %v333
    %v923 = vunpack.c.h.b16 %v333
    %v924 = vunpack.c.l.b16 %v334
    %v925 = vunpack.c.h.b16 %v334
    %v926 = vunpack.c.l.b16 %v335
    %v927 = vunpack.c.h.b16 %v335
    %v928 = vunpack.c.l.b16 %v336
    %v929 = vunpack.c.h.b16 %v336
    %v930 = vunpack.c.l.b16 %v337
    %v931 = vunpack.c.h.b16 %v337
    %v932 = vunpack.c.l.b16 %v338
    %v933 = vunpack.c.h.b16 %v338
    %v934 = vunpack.c.l.b16 %v339
    %v935 = vunpack.c.h.b16 %v339
    %v936 = vunpack.c.l.b16 %v340
    %v937 = vunpack.c.h.b16 %v340
    %v938 = vunpack.c.l.b16 %v341
    %v939 = vunpack.c.h.b16 %v341
    %v940 = vpack.c.b16 %v560, %v556
    %v941 = vpack.c.b16 %v561, %v557
    %v942 = vpack.c.b16 %v562, %v558
    %v943 = vpack.c.b16 %v563, %v559
    %v944 = vpack.c.b16 %v568, %v564
    %v945 = vpack.c.b16 %v569, %v565
    %v946 = vpack.c.b16 %v570, %v566
    %v947 = vpack.c.b16 %v571, %v567
    %v948 = vpack.c.b16 %v576, %v572
    %v949 = vpack.c.b16 %v577, %v573
    %v950 = vpack.c.b16 %v578, %v574
    %v951 = vpack.c.b16 %v579, %v575
    %v952 = vpack.c.b16 %v584, %v580
    %v953 = vpack.c.b16 %v585, %v581
    %v954 = vpack.c.b16 %v586, %v582
    %v955 = vpack.c.b16 %v587, %v583
    %v956 = vpack.c.b16 %v592, %v588
    %v957 = vpack.c.b16 %v593, %v589
    %v958 = vpack.c.b16 %v594, %v590
    %v959 = vpack.c.b16 %v595, %v591
    %v960 = vpack.c.b16 %v600, %v596
    %v961 = vpack.c.b16 %v601, %v597
    %v962 = vpack.c.b16 %v602, %v598
    %v963 = vpack.c.b16 %v603, %v599
    %v964 = vpack.c.b16 %v608, %v604
    %v965 = vpack.c.b16 %v609, %v605
    %v966 = vpack.c.b16 %v610, %v606
    %v967 = vpack.c.b16 %v611, %v607
    %v968 = vpack.c.b16 %v616, %v612
    %v969 = vpack.c.b16 %v617, %v613
    %v970 = vpack.c.b16 %v618, %v614
    %v971 = vpack.c.b16 %v619, %v615
    %v972 = vpack.c.b16 %v624, %v620
    %v973 = vpack.c.b16 %v625, %v621
    %v974 = vpack.c.b16 %v626, %v622
    %v975 = vpack.c.b16 %v627, %v623
    %v976 = vpack.c.b16 %v632, %v628
    %v977 = vpack.c.b16 %v633, %v629
    %v978 = vpack.c.b16 %v634, %v630
    %v979 = vpack.c.b16 %v635, %v631
    %v980 = vpack.c.b16 %v640, %v636
    %v981 = vpack.c.b16 %v641, %v637
    %v982 = vpack.c.b16 %v642, %v638
    %v983 = vpack.c.b16 %v643, %v639
    %v984 = vpack.c.b16 %v648, %v644
    %v985 = vpack.c.b16 %v649, %v645
    %v986 = vpack.c.b16 %v650, %v646
    %v987 = vpack.c.b16 %v651, %v647
    %v988 = vpack.c.b16 %v656, %v652
    %v989 = vpack.c.b16 %v657, %v653
    %v990 = vpack.c.b16 %v658, %v654
    %v991 = vpack.c.b16 %v659, %v655
    %v992 = vpack.c.b16 %v664, %v660
    %v993 = vpack.c.b16 %v665, %v661
    %v994 = vpack.c.b16 %v666, %v662
    %v995 = vpack.c.b16 %v667, %v663
    %v996 = vpack.c.b16 %v672, %v668
    %v997 = vpack.c.b16 %v673, %v669
    %v998 = vpack.c.b16 %v674, %v670
    %v999 = vpack.c.b16 %v675, %v671
    %v1000 = vpack.c.b16 %v680, %v676
    %v1001 = vpack.c.b16 %v681, %v677
    %v1002 = vpack.c.b16 %v682, %v678
    %v1003 = vpack.c.b16 %v683, %v679
    %v1004 = vpack.c.b16 %v688, %v684
    %v1005 = vpack.c.b16 %v689, %v685
    %v1006 = vpack.c.b16 %v690, %v686
    %v1007 = vpack.c.b16 %v691, %v687
    %v1008 = vpack.c.b16 %v696, %v692
    %v1009 = vpack.c.b16 %v697, %v693
    %v1010 = vpack.c.b16 %v698, %v694
    %v1011 = vpack.c.b16 %v699, %v695
    %v1012 = vpack.c.b16 %v704, %v700
    %v1013 = vpack.c.b16 %v705, %v701
    %v1014 = vpack.c.b16 %v706, %v702
    %v1015 = vpack.c.b16 %v707, %v703
    %v1016 = vpack.c.b16 %v712, %v708
    %v1017 = vpack.c.b16 %v713, %v709
    %v1018 = vpack.c.b16 %v714, %v710
    %v1019 = vpack.c.b16 %v715, %v711
    %v1020 = vpack.c.b16 %v720, %v716
    %v1021 = vpack.c.b16 %v721, %v717
    %v1022 = vpack.c.b16 %v722, %v718
    %v1023 = vpack.c.b16 %v723, %v719
    %v1024 = vpack.c.b16 %v728, %v724
    %v1025 = vpack.c.b16 %v729, %v725
    %v1026 = vpack.c.b16 %v730, %v726
    %v1027 = vpack.c.b16 %v731, %v727
    %v1028 = vpack.c.b16 %v736, %v732
    %v1029 = vpack.c.b16 %v737, %v733
    %v1030 = vpack.c.b16 %v738, %v734
    %v1031 = vpack.c.b16 %v739, %v735
    %v1032 = vpack.c.b16 %v744, %v740
    %v1033 = vpack.c.b16 %v745, %v741
    %v1034 = vpack.c.b16 %v746, %v742
    %v1035 = vpack.c.b16 %v747, %v743
    %v1036 = vpack.c.b16 %v752, %v748
    %v1037 = vpack.c.b16 %v753, %v749
    %v1038 = vpack.c.b16 %v754, %v750
    %v1039 = vpack.c.b16 %v755, %v751
    %v1040 = vpack.c.b16 %v760, %v756
    %v1041 = vpack.c.b16 %v761, %v757
    %v1042 = vpack.c.b16 %v762, %v758
    %v1043 = vpack.c.b16 %v763, %v759
    %v1044 = vpack.c.b16 %v768, %v764
    %v1045 = vpack.c.b16 %v769, %v765
    %v1046 = vpack.c.b16 %v770, %v766
    %v1047 = vpack.c.b16 %v771, %v767
    %v1048 = vpack.c.b16 %v776, %v772
    %v1049 = vpack.c.b16 %v777, %v773
    %v1050 = vpack.c.b16 %v778, %v774
    %v1051 = vpack.c.b16 %v779, %v775
    %v1052 = vpack.c.b16 %v784, %v780
    %v1053 = vpack.c.b16 %v785, %v781
    %v1054 = vpack.c.b16 %v786, %v782
    %v1055 = vpack.c.b16 %v787, %v783
    %v1056 = vpack.c.b16 %v792, %v788
    %v1057 = vpack.c.b16 %v793, %v789
    %v1058 = vpack.c.b16 %v794, %v790
    %v1059 = vpack.c.b16 %v795, %v791
    %v1060 = vpack.c.b16 %v800, %v796
    %v1061 = vpack.c.b16 %v801, %v797
    %v1062 = vpack.c.b16 %v802, %v798
    %v1063 = vpack.c.b16 %v803, %v799
    %v1064 = vpack.c.b16 %v808, %v804
    %v1065 = vpack.c.b16 %v809, %v805
    %v1066 = vpack.c.b16 %v810, %v806
    %v1067 = vpack.c.b16 %v811, %v807
    %v1068 = vpack.c.b16 %v816, %v812
    %v1069 = vpack.c.b16 %v817, %v813
    %v1070 = vpack.c.b16 %v818, %v814
    %v1071 = vpack.c.b16 %v819, %v815
    %v1072 = vpack.c.b16 %v824, %v820
    %v1073 = vpack.c.b16 %v825, %v821
    %v1074 = vpack.c.b16 %v826, %v822
    %v1075 = vpack.c.b16 %v827, %v823
    %v1076 = vpack.c.b16 %v832, %v828
    %v1077 = vpack.c.b16 %v833, %v829
    %v1078 = vpack.c.b16 %v834, %v830
    %v1079 = vpack.c.b16 %v835, %v831
    %v1080 = vpack.c.b16 %v840, %v836
    %v1081 = vpack.c.b16 %v841, %v837
    %v1082 = vpack.c.b16 %v842, %v838
    %v1083 = vpack.c.b16 %v843, %v839
    %v1084 = vpack.c.b16 %v848, %v844
    %v1085 = vpack.c.b16 %v849, %v845
    %v1086 = vpack.c.b16 %v850, %v846
    %v1087 = vpack.c.b16 %v851, %v847
    %v1088 = vpack.c.b16 %v856, %v852
    %v1089 = vpack.c.b16 %v857, %v853
    %v1090 = vpack.c.b16 %v858, %v854
    %v1091 = vpack.c.b16 %v859, %v855
    %v1092 = vpack.c.b16 %v864, %v860
    %v1093 = vpack.c.b16 %v865, %v861
    %v1094 = vpack.c.b16 %v866, %v862
    %v1095 = vpack.c.b16 %v867, %v863
    %v1096 = vpack.c.b16 %v872, %v868
    %v1097 = vpack.c.b16 %v873, %v869
    %v1098 = vpack.c.b16 %v874, %v870
    %v1099 = vpack.c.b16 %v875, %v871
    %v1100 = vpack.c.b16 %v880, %v876
    %v1101 = vpack.c.b16 %v881, %v877
    %v1102 = vpack.c.b16 %v882, %v878
    %v1103 = vpack.c.b16 %v883, %v879
    %v1104 = vpack.c.b16 %v888, %v884
    %v1105 = vpack.c.b16 %v889, %v885
    %v1106 = vpack.c.b16 %v890, %v886
    %v1107 = vpack.c.b16 %v891, %v887
    %v1108 = vpack.c.b16 %v896, %v892
    %v1109 = vpack.c.b16 %v897, %v893
    %v1110 = vpack.c.b16 %v898, %v894
    %v1111 = vpack.c.b16 %v899, %v895
    %v1112 = vpack.c.b16 %v904, %v900
    %v1113 = vpack.c.b16 %v905, %v901
    %v1114 = vpack.c.b16 %v906, %v902
    %v1115 = vpack.c.b16 %v907, %v903
    %v1116 = vpack.c.b16 %v912, %v908
    %v1117 = vpack.c.b16 %v913, %v909
    %v1118 = vpack.c.b16 %v914, %v910
    %v1119 = vpack.c.b16 %v915, %v911
    %v1120 = vpack.c.b16 %v920, %v916
    %v1121 = vpack.c.b16 %v921, %v917
    %v1122 = vpack.c.b16 %v922, %v918
    %v1123 = vpack.c.b16 %v923, %v919
    %v1124 = vpack.c.b16 %v928, %v924
    %v1125 = vpack.c.b16 %v929, %v925
    %v1126 = vpack.c.b16 %v930, %v926
    %v1127 = vpack.c.b16 %v931, %v927
    %v1128 = vpack.c.b16 %v936, %v932
    %v1129 = vpack.c.b16 %v937, %v933
    %v1130 = vpack.c.b16 %v938, %v934
    %v1131 = vpack.c.b16 %v939, %v935
    %1324 = vmatprep.subr.bf16.mxu0 %v941
    %1325 = vmatpush1.bf16.msra.mxu0 %v940
    %1326 = vmatprep.subr.bf16.mxu0 %v945
    %1327 = vmatpush1.bf16.msra.mxu0 %v944
    %1328 = vmatprep.subr.bf16.mxu0 %v949
    %1329 = vmatpush1.bf16.msra.mxu0 %v948
    %1330 = vmatprep.subr.bf16.mxu0 %v953
    %1331 = vmatpush1.bf16.msra.mxu0 %v952
    %1332 = vmatprep.subr.bf16.mxu0 %v957
    %1333 = vmatpush1.bf16.msra.mxu0 %v956
    %1334 = vmatprep.subr.bf16.mxu0 %v961
    %1335 = vmatpush1.bf16.msra.mxu0 %v960
    %1336 = vmatprep.subr.bf16.mxu0 %v965
    %1337 = vmatpush1.bf16.msra.mxu0 %v964
    %1338 = vmatprep.subr.bf16.mxu0 %v969
    %1339 = vmatpush1.bf16.msra.mxu0 %v968
    %1340 = vmatprep.subr.bf16.mxu0 %v973
    %1341 = vmatpush1.bf16.msra.mxu0 %v972
    %1342 = vmatprep.subr.bf16.mxu0 %v977
    %1343 = vmatpush1.bf16.msra.mxu0 %v976
    %1344 = vmatprep.subr.bf16.mxu0 %v981
    %1345 = vmatpush1.bf16.msra.mxu0 %v980
    %1346 = vmatprep.subr.bf16.mxu0 %v985
    %1347 = vmatpush1.bf16.msra.mxu0 %v984
    %1348 = vmatprep.subr.bf16.mxu0 %v989
    %1349 = vmatpush1.bf16.msra.mxu0 %v988
    %1350 = vmatprep.subr.bf16.mxu0 %v993
    %1351 = vmatpush1.bf16.msra.mxu0 %v992
    %1352 = vmatprep.subr.bf16.mxu0 %v997
    %1353 = vmatpush1.bf16.msra.mxu0 %v996
    %1354 = vmatprep.subr.bf16.mxu0 %v1001
    %1355 = vmatpush1.bf16.msra.mxu0 %v1000
    %1356 = vmatprep.mubr.bf16.mxu0 %v145
    %1357 = vmatmul.mubr.bf16.gmra.mrb[0].mxu0 %v144
    %v1358 = vpop.f32.mrb[0].mxu0
    %v1359 = vadd.f32 %v347, %v1358
    %v1360 = vpop.f32.mrb[0].mxu0
    %v1361 = vadd.f32 %v351, %v1360
    %v1362 = vpop.f32.mrb[0].mxu0
    %v1363 = vpop.f32.mrb[0].mxu0
    %1364 = vdwg.mxu0
    %1365 = vmatprep.subr.bf16.mxu0 %v1005
    %1366 = vmatpush1.bf16.msra.mxu0 %v1004
    %1367 = vmatprep.subr.bf16.mxu0 %v1009
    %1368 = vmatpush1.bf16.msra.mxu0 %v1008
    %1369 = vmatprep.subr.bf16.mxu0 %v1013
    %1370 = vmatpush1.bf16.msra.mxu0 %v1012
    %1371 = vmatprep.subr.bf16.mxu0 %v1017
    %1372 = vmatpush1.bf16.msra.mxu0 %v1016
    %1373 = vmatprep.subr.bf16.mxu0 %v1021
    %1374 = vmatpush1.bf16.msra.mxu0 %v1020
    %1375 = vmatprep.subr.bf16.mxu0 %v1025
    %1376 = vmatpush1.bf16.msra.mxu0 %v1024
    %1377 = vmatprep.subr.bf16.mxu0 %v1029
    %1378 = vmatpush1.bf16.msra.mxu0 %v1028
    %1379 = vmatprep.subr.bf16.mxu0 %v1033
    %1380 = vmatpush1.bf16.msra.mxu0 %v1032
    %1381 = vmatprep.subr.bf16.mxu0 %v1037
    %1382 = vmatpush1.bf16.msra.mxu0 %v1036
    %1383 = vmatprep.subr.bf16.mxu0 %v1041
    %1384 = vmatpush1.bf16.msra.mxu0 %v1040
    %1385 = vmatprep.subr.bf16.mxu0 %v1045
    %1386 = vmatpush1.bf16.msra.mxu0 %v1044
    %1387 = vmatprep.subr.bf16.mxu0 %v1049
    %1388 = vmatpush1.bf16.msra.mxu0 %v1048
    %1389 = vmatprep.subr.bf16.mxu0 %v1053
    %1390 = vmatpush1.bf16.msra.mxu0 %v1052
    %1391 = vmatprep.subr.bf16.mxu0 %v1057
    %1392 = vmatpush1.bf16.msra.mxu0 %v1056
    %1393 = vmatprep.subr.bf16.mxu0 %v1061
    %1394 = vmatpush1.bf16.msra.mxu0 %v1060
    %1395 = vmatprep.subr.bf16.mxu0 %v1065
    %1396 = vmatpush1.bf16.msra.mxu0 %v1064
    %1397 = vmatprep.mubr.bf16.mxu0 %v147
    %1398 = vmatmul.mubr.bf16.gmra.mrb[0].mxu0 %v146
    %v1399 = vpop.f32.mrb[0].mxu0
    %v1400 = vadd.f32 %v1359, %v1399
    %v1401 = vpop.f32.mrb[0].mxu0
    %v1402 = vadd.f32 %v1361, %v1401
    %v1403 = vpop.f32.mrb[0].mxu0
    %v1404 = vpop.f32.mrb[0].mxu0
    %1405 = vdwg.mxu0
    %1406 = vmatprep.subr.bf16.mxu0 %v1069
    %1407 = vmatpush1.bf16.msra.mxu0 %v1068
    %1408 = vmatprep.subr.bf16.mxu0 %v1073
    %1409 = vmatpush1.bf16.msra.mxu0 %v1072
    %1410 = vmatprep.subr.bf16.mxu0 %v1077
    %1411 = vmatpush1.bf16.msra.mxu0 %v1076
    %1412 = vmatprep.subr.bf16.mxu0 %v1081
    %1413 = vmatpush1.bf16.msra.mxu0 %v1080
    %1414 = vmatprep.subr.bf16.mxu0 %v1085
    %1415 = vmatpush1.bf16.msra.mxu0 %v1084
    %1416 = vmatprep.subr.bf16.mxu0 %v1089
    %1417 = vmatpush1.bf16.msra.mxu0 %v1088
    %1418 = vmatprep.subr.bf16.mxu0 %v1093
    %1419 = vmatpush1.bf16.msra.mxu0 %v1092
    %1420 = vmatprep.subr.bf16.mxu0 %v1097
    %1421 = vmatpush1.bf16.msra.mxu0 %v1096
    %1422 = vmatprep.subr.bf16.mxu0 %v1101
    %1423 = vmatpush1.bf16.msra.mxu0 %v1100
    %1424 = vmatprep.subr.bf16.mxu0 %v1105
    %1425 = vmatpush1.bf16.msra.mxu0 %v1104
    %1426 = vmatprep.subr.bf16.mxu0 %v1109
    %1427 = vmatpush1.bf16.msra.mxu0 %v1108
    %1428 = vmatprep.subr.bf16.mxu0 %v1113
    %1429 = vmatpush1.bf16.msra.mxu0 %v1112
    %1430 = vmatprep.subr.bf16.mxu0 %v1117
    %1431 = vmatpush1.bf16.msra.mxu0 %v1116
    %1432 = vmatprep.subr.bf16.mxu0 %v1121
    %1433 = vmatpush1.bf16.msra.mxu0 %v1120
    %1434 = vmatprep.subr.bf16.mxu0 %v1125
    %1435 = vmatpush1.bf16.msra.mxu0 %v1124
    %1436 = vmatprep.subr.bf16.mxu0 %v1129
    %1437 = vmatpush1.bf16.msra.mxu0 %v1128
    %1438 = vmatprep.mubr.bf16.mxu0 %v149
    %1439 = vmatmul.mubr.bf16.gmra.mrb[0].mxu0 %v148
    %v1440 = vpop.f32.mrb[0].mxu0
    %v1441 = vadd.f32 %v1400, %v1440
    %v1442 = vpop.f32.mrb[0].mxu0
    %v1443 = vadd.f32 %v1402, %v1442
    %v1444 = vpop.f32.mrb[0].mxu0
    %v1445 = vpop.f32.mrb[0].mxu0
    %1446 = vdwg.mxu0
    %1447 = vmatprep.subr.bf16.mxu0 %v943
    %1448 = vmatpush1.bf16.msra.mxu0 %v942
    %1449 = vmatprep.subr.bf16.mxu0 %v947
    %1450 = vmatpush1.bf16.msra.mxu0 %v946
    %1451 = vmatprep.subr.bf16.mxu0 %v951
    %1452 = vmatpush1.bf16.msra.mxu0 %v950
    %1453 = vmatprep.subr.bf16.mxu0 %v955
    %1454 = vmatpush1.bf16.msra.mxu0 %v954
    %1455 = vmatprep.subr.bf16.mxu0 %v959
    %1456 = vmatpush1.bf16.msra.mxu0 %v958
    %1457 = vmatprep.subr.bf16.mxu0 %v963
    %1458 = vmatpush1.bf16.msra.mxu0 %v962
    %1459 = vmatprep.subr.bf16.mxu0 %v967
    %1460 = vmatpush1.bf16.msra.mxu0 %v966
    %1461 = vmatprep.subr.bf16.mxu0 %v971
    %1462 = vmatpush1.bf16.msra.mxu0 %v970
    %1463 = vmatprep.subr.bf16.mxu0 %v975
    %1464 = vmatpush1.bf16.msra.mxu0 %v974
    %1465 = vmatprep.subr.bf16.mxu0 %v979
    %1466 = vmatpush1.bf16.msra.mxu0 %v978
    %1467 = vmatprep.subr.bf16.mxu0 %v983
    %1468 = vmatpush1.bf16.msra.mxu0 %v982
    %1469 = vmatprep.subr.bf16.mxu0 %v987
    %1470 = vmatpush1.bf16.msra.mxu0 %v986
    %1471 = vmatprep.subr.bf16.mxu0 %v991
    %1472 = vmatpush1.bf16.msra.mxu0 %v990
    %1473 = vmatprep.subr.bf16.mxu0 %v995
    %1474 = vmatpush1.bf16.msra.mxu0 %v994
    %1475 = vmatprep.subr.bf16.mxu0 %v999
    %1476 = vmatpush1.bf16.msra.mxu0 %v998
    %1477 = vmatprep.subr.bf16.mxu0 %v1003
    %1478 = vmatpush1.bf16.msra.mxu0 %v1002
    %1479 = vmatprep.mubr.bf16.mxu0 %v145
    %1480 = vmatmul.mubr.bf16.gmra.mrb[0].mxu0 %v144
    %v1481 = vpop.f32.mrb[0].mxu0
    %v1482 = vadd.f32 %v355, %v1481
    %v1483 = vpop.f32.mrb[0].mxu0
    %v1484 = vadd.f32 %v359, %v1483
    %v1485 = vpop.f32.mrb[0].mxu0
    %v1486 = vpop.f32.mrb[0].mxu0
    %1487 = vdwg.mxu0
    %1488 = vmatprep.subr.bf16.mxu0 %v1007
    %1489 = vmatpush1.bf16.msra.mxu0 %v1006
    %1490 = vmatprep.subr.bf16.mxu0 %v1011
    %1491 = vmatpush1.bf16.msra.mxu0 %v1010
    %1492 = vmatprep.subr.bf16.mxu0 %v1015
    %1493 = vmatpush1.bf16.msra.mxu0 %v1014
    %1494 = vmatprep.subr.bf16.mxu0 %v1019
    %1495 = vmatpush1.bf16.msra.mxu0 %v1018
    %1496 = vmatprep.subr.bf16.mxu0 %v1023
    %1497 = vmatpush1.bf16.msra.mxu0 %v1022
    %1498 = vmatprep.subr.bf16.mxu0 %v1027
    %1499 = vmatpush1.bf16.msra.mxu0 %v1026
    %1500 = vmatprep.subr.bf16.mxu0 %v1031
    %1501 = vmatpush1.bf16.msra.mxu0 %v1030
    %1502 = vmatprep.subr.bf16.mxu0 %v1035
    %1503 = vmatpush1.bf16.msra.mxu0 %v1034
    %1504 = vmatprep.subr.bf16.mxu0 %v1039
    %1505 = vmatpush1.bf16.msra.mxu0 %v1038
    %1506 = vmatprep.subr.bf16.mxu0 %v1043
    %1507 = vmatpush1.bf16.msra.mxu0 %v1042
    %1508 = vmatprep.subr.bf16.mxu0 %v1047
    %1509 = vmatpush1.bf16.msra.mxu0 %v1046
    %1510 = vmatprep.subr.bf16.mxu0 %v1051
    %1511 = vmatpush1.bf16.msra.mxu0 %v1050
    %1512 = vmatprep.subr.bf16.mxu0 %v1055
    %1513 = vmatpush1.bf16.msra.mxu0 %v1054
    %1514 = vmatprep.subr.bf16.mxu0 %v1059
    %1515 = vmatpush1.bf16.msra.mxu0 %v1058
    %1516 = vmatprep.subr.bf16.mxu0 %v1063
    %1517 = vmatpush1.bf16.msra.mxu0 %v1062
    %1518 = vmatprep.subr.bf16.mxu0 %v1067
    %1519 = vmatpush1.bf16.msra.mxu0 %v1066
    %1520 = vmatprep.mubr.bf16.mxu0 %v147
    %1521 = vmatmul.mubr.bf16.gmra.mrb[0].mxu0 %v146
    %v1522 = vpop.f32.mrb[0].mxu0
    %v1523 = vadd.f32 %v1482, %v1522
    %v1524 = vpop.f32.mrb[0].mxu0
    %v1525 = vadd.f32 %v1484, %v1524
    %v1526 = vpop.f32.mrb[0].mxu0
    %v1527 = vpop.f32.mrb[0].mxu0
    %1528 = vdwg.mxu0
    %1529 = vmatprep.subr.bf16.mxu0 %v1071
    %1530 = vmatpush1.bf16.msra.mxu0 %v1070
    %1531 = vmatprep.subr.bf16.mxu0 %v1075
    %1532 = vmatpush1.bf16.msra.mxu0 %v1074
    %1533 = vmatprep.subr.bf16.mxu0 %v1079
    %1534 = vmatpush1.bf16.msra.mxu0 %v1078
    %1535 = vmatprep.subr.bf16.mxu0 %v1083
    %1536 = vmatpush1.bf16.msra.mxu0 %v1082
    %1537 = vmatprep.subr.bf16.mxu0 %v1087
    %1538 = vmatpush1.bf16.msra.mxu0 %v1086
    %1539 = vmatprep.subr.bf16.mxu0 %v1091
    %1540 = vmatpush1.bf16.msra.mxu0 %v1090
    %1541 = vmatprep.subr.bf16.mxu0 %v1095
    %1542 = vmatpush1.bf16.msra.mxu0 %v1094
    %1543 = vmatprep.subr.bf16.mxu0 %v1099
    %1544 = vmatpush1.bf16.msra.mxu0 %v1098
    %1545 = vmatprep.subr.bf16.mxu0 %v1103
    %1546 = vmatpush1.bf16.msra.mxu0 %v1102
    %1547 = vmatprep.subr.bf16.mxu0 %v1107
    %1548 = vmatpush1.bf16.msra.mxu0 %v1106
    %1549 = vmatprep.subr.bf16.mxu0 %v1111
    %1550 = vmatpush1.bf16.msra.mxu0 %v1110
    %1551 = vmatprep.subr.bf16.mxu0 %v1115
    %1552 = vmatpush1.bf16.msra.mxu0 %v1114
    %1553 = vmatprep.subr.bf16.mxu0 %v1119
    %1554 = vmatpush1.bf16.msra.mxu0 %v1118
    %1555 = vmatprep.subr.bf16.mxu0 %v1123
    %1556 = vmatpush1.bf16.msra.mxu0 %v1122
    %1557 = vmatprep.subr.bf16.mxu0 %v1127
    %1558 = vmatpush1.bf16.msra.mxu0 %v1126
    %1559 = vmatprep.subr.bf16.mxu0 %v1131
    %1560 = vmatpush1.bf16.msra.mxu0 %v1130
    %1561 = vmatprep.mubr.bf16.mxu0 %v149
    %1562 = vmatmul.mubr.bf16.gmra.mrb[0].mxu0 %v148
    %v1563 = vpop.f32.mrb[0].mxu0
    %v1564 = vadd.f32 %v1523, %v1563
    %v1565 = vpop.f32.mrb[0].mxu0
    %v1566 = vadd.f32 %v1525, %v1565
    %v1567 = vpop.f32.mrb[0].mxu0
    %v1568 = vpop.f32.mrb[0].mxu0
    %1569 = vdwg.mxu0
    %v1570 = vmax.f32 %v1441, 0.0
    %v1571 = vmax.f32 %v1443, 0.0
    %v1572 = vmax.f32 %v1564, 0.0
    %v1573 = vmax.f32 %v1566, 0.0
    %v1574 = vand.u32 2147483647, %v1441
    %v1575 = vand.u32 2147483647, %v1443
    %v1576 = vand.u32 2147483647, %v1564
    %v1577 = vand.u32 2147483647, %v1566
    %v1578 = vsub.f32 0.0, %v1574
    %v1579 = vsub.f32 0.0, %v1575
    %v1580 = vsub.f32 0.0, %v1576
    %v1581 = vsub.f32 0.0, %v1577
    %v1582 = vmul.f32 %v1578, 1.442695
    %v1583 = vpow.pop %v1582
    %v1584 = vmul.f32 %v1579, 1.442695
    %v1585 = vpow.pop %v1584
    %v1586 = vmul.f32 %v1580, 1.442695
    %v1587 = vpow.pop %v1586
    %v1588 = vmul.f32 %v1581, 1.442695
    %v1589 = vpow.pop %v1588
    %v1590 = vadd.f32 %v1583, 1.0
    %v1591 = vlog2.pop %v1590
    %v1592 = vmul.f32 %v1591, 0.6931472
    %v1593 = vmul.f32 -0.5, %v1583
    %v1594 = vadd.f32 %v1593, 1.0
    %v1595 = vmul.f32 %v1594, %v1583
    %v1596 = vand.u32 2147483647, %v1583
    %vm1597 = vcmp.lt.f32.partialorder %v1596, 0.0004427343
    %v1598 = vsel %vm1597, %v1595, %v1592
    %v1599 = vadd.f32 %v1585, 1.0
    %v1600 = vlog2.pop %v1599
    %v1601 = vmul.f32 %v1600, 0.6931472
    %v1602 = vmul.f32 -0.5, %v1585
    %v1603 = vadd.f32 %v1602, 1.0
    %v1604 = vmul.f32 %v1603, %v1585
    %v1605 = vand.u32 2147483647, %v1585
    %vm1606 = vcmp.lt.f32.partialorder %v1605, 0.0004427343
    %v1607 = vsel %vm1606, %v1604, %v1601
    %v1608 = vadd.f32 %v1587, 1.0
    %v1609 = vlog2.pop %v1608
    %v1610 = vmul.f32 %v1609, 0.6931472
    %v1611 = vmul.f32 -0.5, %v1587
    %v1612 = vadd.f32 %v1611, 1.0
    %v1613 = vmul.f32 %v1612, %v1587
    %v1614 = vand.u32 2147483647, %v1587
    %vm1615 = vcmp.lt.f32.partialorder %v1614, 0.0004427343
    %v1616 = vsel %vm1615, %v1613, %v1610
    %v1617 = vadd.f32 %v1589, 1.0
    %v1618 = vlog2.pop %v1617
    %v1619 = vmul.f32 %v1618, 0.6931472
    %v1620 = vmul.f32 -0.5, %v1589
    %v1621 = vadd.f32 %v1620, 1.0
    %v1622 = vmul.f32 %v1621, %v1589
    %v1623 = vand.u32 2147483647, %v1589
    %vm1624 = vcmp.lt.f32.partialorder %v1623, 0.0004427343
    %v1625 = vsel %vm1624, %v1622, %v1619
    %v1626 = vadd.f32 %v1570, %v1598
    %v1627 = vadd.f32 %v1571, %v1607
    %v1628 = vadd.f32 %v1572, %v1616
    %v1629 = vadd.f32 %v1573, %v1625
    %v1630 = vpack.c.bf16 %v1626, %v1626
    %v1631 = vpack.c.bf16 %v1627, %v1627
    %v1632 = vpack.c.bf16 %v1628, %v1628
    %v1633 = vpack.c.bf16 %v1629, %v1629
    %v1634 = vld [vmem:[#allocation7] sm:$0xff]
    %v1635 = vld [vmem:[#allocation7 + $0x8] sm:$0xff]
    %v1636 = vld [vmem:[#allocation7 + $0x10] sm:$0xff]
    %v1637 = vld [vmem:[#allocation7 + $0x18] sm:$0xff]
    %v1638 = vld [vmem:[#allocation7 + $0x20] sm:$0xff]
    %v1639 = vld [vmem:[#allocation7 + $0x28] sm:$0xff]
    %v1640 = vld [vmem:[#allocation7 + $0x30] sm:$0xff]
    %v1641 = vld [vmem:[#allocation7 + $0x38] sm:$0xff]
    %v1642 = vld [vmem:[#allocation7 + $0x40] sm:$0xff]
    %v1643 = vld [vmem:[#allocation7 + $0x48] sm:$0xff]
    %v1644 = vld [vmem:[#allocation7 + $0x50] sm:$0xff]
    %v1645 = vld [vmem:[#allocation7 + $0x58] sm:$0xff]
    %v1646 = vld [vmem:[#allocation7 + $0x60] sm:$0xff]
    %v1647 = vld [vmem:[#allocation7 + $0x68] sm:$0xff]
    %v1648 = vld [vmem:[#allocation7 + $0x70] sm:$0xff]
    %v1649 = vld [vmem:[#allocation7 + $0x78] sm:$0xff]
    %v1650 = vld [vmem:[#allocation7 + $0x80] sm:$0xff]
    %v1651 = vld [vmem:[#allocation7 + $0x88] sm:$0xff]
    %v1652 = vld [vmem:[#allocation7 + $0x90] sm:$0xff]
    %v1653 = vld [vmem:[#allocation7 + $0x98] sm:$0xff]
    %v1654 = vld [vmem:[#allocation7 + $0xa0] sm:$0xff]
    %v1655 = vld [vmem:[#allocation7 + $0xa8] sm:$0xff]
    %v1656 = vld [vmem:[#allocation7 + $0xb0] sm:$0xff]
    %v1657 = vld [vmem:[#allocation7 + $0xb8] sm:$0xff]
    %v1658 = vld [vmem:[#allocation7 + $0xc0] sm:$0xff]
    %v1659 = vld [vmem:[#allocation7 + $0xc8] sm:$0xff]
    %v1660 = vld [vmem:[#allocation7 + $0xd0] sm:$0xff]
    %v1661 = vld [vmem:[#allocation7 + $0xd8] sm:$0xff]
    %v1662 = vld [vmem:[#allocation7 + $0xe0] sm:$0xff]
    %v1663 = vld [vmem:[#allocation7 + $0xe8] sm:$0xff]
    %v1664 = vld [vmem:[#allocation7 + $0xf0] sm:$0xff]
    %v1665 = vld [vmem:[#allocation7 + $0xf8] sm:$0xff]
    %v1666 = vld [vmem:[#allocation7 + $0x100] sm:$0xff]
    %v1667 = vld [vmem:[#allocation7 + $0x108] sm:$0xff]
    %v1668 = vld [vmem:[#allocation7 + $0x110] sm:$0xff]
    %v1669 = vld [vmem:[#allocation7 + $0x118] sm:$0xff]
    %v1670 = vld [vmem:[#allocation7 + $0x120] sm:$0xff]
    %v1671 = vld [vmem:[#allocation7 + $0x128] sm:$0xff]
    %v1672 = vld [vmem:[#allocation7 + $0x130] sm:$0xff]
    %v1673 = vld [vmem:[#allocation7 + $0x138] sm:$0xff]
    %v1674 = vld [vmem:[#allocation7 + $0x140] sm:$0xff]
    %v1675 = vld [vmem:[#allocation7 + $0x148] sm:$0xff]
    %v1676 = vld [vmem:[#allocation7 + $0x150] sm:$0xff]
    %v1677 = vld [vmem:[#allocation7 + $0x158] sm:$0xff]
    %v1678 = vld [vmem:[#allocation7 + $0x160] sm:$0xff]
    %v1679 = vld [vmem:[#allocation7 + $0x168] sm:$0xff]
    %v1680 = vld [vmem:[#allocation7 + $0x170] sm:$0xff]
    %v1681 = vld [vmem:[#allocation7 + $0x178] sm:$0xff]
    %v1682 = vld [vmem:[#allocation7 + $0x180] sm:$0xff]
    %v1683 = vld [vmem:[#allocation7 + $0x188] sm:$0xff]
    %v1684 = vld [vmem:[#allocation7 + $0x190] sm:$0xff]
    %v1685 = vld [vmem:[#allocation7 + $0x198] sm:$0xff]
    %v1686 = vld [vmem:[#allocation7 + $0x1a0] sm:$0xff]
    %v1687 = vld [vmem:[#allocation7 + $0x1a8] sm:$0xff]
    %v1688 = vld [vmem:[#allocation7 + $0x1b0] sm:$0xff]
    %v1689 = vld [vmem:[#allocation7 + $0x1b8] sm:$0xff]
    %v1690 = vld [vmem:[#allocation7 + $0x1c0] sm:$0xff]
    %v1691 = vld [vmem:[#allocation7 + $0x1c8] sm:$0xff]
    %v1692 = vld [vmem:[#allocation7 + $0x1d0] sm:$0xff]
    %v1693 = vld [vmem:[#allocation7 + $0x1d8] sm:$0xff]
    %v1694 = vld [vmem:[#allocation7 + $0x1e0] sm:$0xff]
    %v1695 = vld [vmem:[#allocation7 + $0x1e8] sm:$0xff]
    %v1696 = vld [vmem:[#allocation7 + $0x1f0] sm:$0xff]
    %v1697 = vld [vmem:[#allocation7 + $0x1f8] sm:$0xff]
    %v1698 = vld [vmem:[#allocation7 + $0x200] sm:$0xff]
    %v1699 = vld [vmem:[#allocation7 + $0x208] sm:$0xff]
    %v1700 = vld [vmem:[#allocation7 + $0x210] sm:$0xff]
    %v1701 = vld [vmem:[#allocation7 + $0x218] sm:$0xff]
    %v1702 = vld [vmem:[#allocation7 + $0x220] sm:$0xff]
    %v1703 = vld [vmem:[#allocation7 + $0x228] sm:$0xff]
    %v1704 = vld [vmem:[#allocation7 + $0x230] sm:$0xff]
    %v1705 = vld [vmem:[#allocation7 + $0x238] sm:$0xff]
    %v1706 = vld [vmem:[#allocation7 + $0x240] sm:$0xff]
    %v1707 = vld [vmem:[#allocation7 + $0x248] sm:$0xff]
    %v1708 = vld [vmem:[#allocation7 + $0x250] sm:$0xff]
    %v1709 = vld [vmem:[#allocation7 + $0x258] sm:$0xff]
    %v1710 = vld [vmem:[#allocation7 + $0x260] sm:$0xff]
    %v1711 = vld [vmem:[#allocation7 + $0x268] sm:$0xff]
    %v1712 = vld [vmem:[#allocation7 + $0x270] sm:$0xff]
    %v1713 = vld [vmem:[#allocation7 + $0x278] sm:$0xff]
    %v1714 = vld [vmem:[#allocation7 + $0x280] sm:$0xff]
    %v1715 = vld [vmem:[#allocation7 + $0x288] sm:$0xff]
    %v1716 = vld [vmem:[#allocation7 + $0x290] sm:$0xff]
    %v1717 = vld [vmem:[#allocation7 + $0x298] sm:$0xff]
    %v1718 = vld [vmem:[#allocation7 + $0x2a0] sm:$0xff]
    %v1719 = vld [vmem:[#allocation7 + $0x2a8] sm:$0xff]
    %v1720 = vld [vmem:[#allocation7 + $0x2b0] sm:$0xff]
    %v1721 = vld [vmem:[#allocation7 + $0x2b8] sm:$0xff]
    %v1722 = vld [vmem:[#allocation7 + $0x2c0] sm:$0xff]
    %v1723 = vld [vmem:[#allocation7 + $0x2c8] sm:$0xff]
    %v1724 = vld [vmem:[#allocation7 + $0x2d0] sm:$0xff]
    %v1725 = vld [vmem:[#allocation7 + $0x2d8] sm:$0xff]
    %v1726 = vld [vmem:[#allocation7 + $0x2e0] sm:$0xff]
    %v1727 = vld [vmem:[#allocation7 + $0x2e8] sm:$0xff]
    %v1728 = vld [vmem:[#allocation7 + $0x2f0] sm:$0xff]
    %v1729 = vld [vmem:[#allocation7 + $0x2f8] sm:$0xff]
    %v1730 = vld [vmem:[#allocation7 + $0x300] sm:$0xff]
    %v1731 = vld [vmem:[#allocation7 + $0x308] sm:$0xff]
    %v1732 = vld [vmem:[#allocation7 + $0x310] sm:$0xff]
    %v1733 = vld [vmem:[#allocation7 + $0x318] sm:$0xff]
    %v1734 = vld [vmem:[#allocation7 + $0x320] sm:$0xff]
    %v1735 = vld [vmem:[#allocation7 + $0x328] sm:$0xff]
    %v1736 = vld [vmem:[#allocation7 + $0x330] sm:$0xff]
    %v1737 = vld [vmem:[#allocation7 + $0x338] sm:$0xff]
    %v1738 = vld [vmem:[#allocation7 + $0x340] sm:$0xff]
    %v1739 = vld [vmem:[#allocation7 + $0x348] sm:$0xff]
    %v1740 = vld [vmem:[#allocation7 + $0x350] sm:$0xff]
    %v1741 = vld [vmem:[#allocation7 + $0x358] sm:$0xff]
    %v1742 = vld [vmem:[#allocation7 + $0x360] sm:$0xff]
    %v1743 = vld [vmem:[#allocation7 + $0x368] sm:$0xff]
    %v1744 = vld [vmem:[#allocation7 + $0x370] sm:$0xff]
    %v1745 = vld [vmem:[#allocation7 + $0x378] sm:$0xff]
    %v1746 = vld [vmem:[#allocation7 + $0x380] sm:$0xff]
    %v1747 = vld [vmem:[#allocation7 + $0x388] sm:$0xff]
    %v1748 = vld [vmem:[#allocation7 + $0x390] sm:$0xff]
    %v1749 = vld [vmem:[#allocation7 + $0x398] sm:$0xff]
    %v1750 = vld [vmem:[#allocation7 + $0x3a0] sm:$0xff]
    %v1751 = vld [vmem:[#allocation7 + $0x3a8] sm:$0xff]
    %v1752 = vld [vmem:[#allocation7 + $0x3b0] sm:$0xff]
    %v1753 = vld [vmem:[#allocation7 + $0x3b8] sm:$0xff]
    %v1754 = vld [vmem:[#allocation7 + $0x3c0] sm:$0xff]
    %v1755 = vld [vmem:[#allocation7 + $0x3c8] sm:$0xff]
    %v1756 = vld [vmem:[#allocation7 + $0x3d0] sm:$0xff]
    %v1757 = vld [vmem:[#allocation7 + $0x3d8] sm:$0xff]
    %v1758 = vld [vmem:[#allocation7 + $0x3e0] sm:$0xff]
    %v1759 = vld [vmem:[#allocation7 + $0x3e8] sm:$0xff]
    %v1760 = vld [vmem:[#allocation7 + $0x3f0] sm:$0xff]
    %v1761 = vld [vmem:[#allocation7 + $0x3f8] sm:$0xff]
    %s1762 = scalar_lea.vmem [#allocation14], 1
    %v1763 = vld [vmem:[%s1762] ss:$8 sm:$0xf]
    %v1765 = vlaneseq
    %v1766 = vshrl.u32 %v1765, 7
    %v1767 = vsub.s32 0, %v1766
    %v1768 = vrot.slane %v1763, %v1767
    %v1769 = vlaneseq
    %v1770 = vshrl.u32 %v1769, 7
    %v1771 = vsub.s32 1, %v1770
    %v1772 = vrot.slane %v1763, %v1771
    %v1773 = vlaneseq
    %v1774 = vshrl.u32 %v1773, 7
    %v1775 = vsub.s32 2, %v1774
    %v1776 = vrot.slane %v1763, %v1775
    %v1777 = vlaneseq
    %v1778 = vshrl.u32 %v1777, 7
    %v1779 = vsub.s32 3, %v1778
    %v1780 = vrot.slane %v1763, %v1779
    %v1913 = vunpack.c.l.b16 %v1634
    %v1914 = vunpack.c.h.b16 %v1634
    %v1915 = vunpack.c.l.b16 %v1635
    %v1916 = vunpack.c.h.b16 %v1635
    %v1917 = vunpack.c.l.b16 %v1636
    %v1918 = vunpack.c.h.b16 %v1636
    %v1919 = vunpack.c.l.b16 %v1637
    %v1920 = vunpack.c.h.b16 %v1637
    %v1921 = vunpack.c.l.b16 %v1638
    %v1922 = vunpack.c.h.b16 %v1638
    %v1923 = vunpack.c.l.b16 %v1639
    %v1924 = vunpack.c.h.b16 %v1639
    %v1925 = vunpack.c.l.b16 %v1640
    %v1926 = vunpack.c.h.b16 %v1640
    %v1927 = vunpack.c.l.b16 %v1641
    %v1928 = vunpack.c.h.b16 %v1641
    %v1929 = vunpack.c.l.b16 %v1642
    %v1930 = vunpack.c.h.b16 %v1642
    %v1931 = vunpack.c.l.b16 %v1643
    %v1932 = vunpack.c.h.b16 %v1643
    %v1933 = vunpack.c.l.b16 %v1644
    %v1934 = vunpack.c.h.b16 %v1644
    %v1935 = vunpack.c.l.b16 %v1645
    %v1936 = vunpack.c.h.b16 %v1645
    %v1937 = vunpack.c.l.b16 %v1646
    %v1938 = vunpack.c.h.b16 %v1646
    %v1939 = vunpack.c.l.b16 %v1647
    %v1940 = vunpack.c.h.b16 %v1647
    %v1941 = vunpack.c.l.b16 %v1648
    %v1942 = vunpack.c.h.b16 %v1648
    %v1943 = vunpack.c.l.b16 %v1649
    %v1944 = vunpack.c.h.b16 %v1649
    %v1945 = vunpack.c.l.b16 %v1650
    %v1946 = vunpack.c.h.b16 %v1650
    %v1947 = vunpack.c.l.b16 %v1651
    %v1948 = vunpack.c.h.b16 %v1651
    %v1949 = vunpack.c.l.b16 %v1652
    %v1950 = vunpack.c.h.b16 %v1652
    %v1951 = vunpack.c.l.b16 %v1653
    %v1952 = vunpack.c.h.b16 %v1653
    %v1953 = vunpack.c.l.b16 %v1654
    %v1954 = vunpack.c.h.b16 %v1654
    %v1955 = vunpack.c.l.b16 %v1655
    %v1956 = vunpack.c.h.b16 %v1655
    %v1957 = vunpack.c.l.b16 %v1656
    %v1958 = vunpack.c.h.b16 %v1656
    %v1959 = vunpack.c.l.b16 %v1657
    %v1960 = vunpack.c.h.b16 %v1657
    %v1961 = vunpack.c.l.b16 %v1658
    %v1962 = vunpack.c.h.b16 %v1658
    %v1963 = vunpack.c.l.b16 %v1659
    %v1964 = vunpack.c.h.b16 %v1659
    %v1965 = vunpack.c.l.b16 %v1660
    %v1966 = vunpack.c.h.b16 %v1660
    %v1967 = vunpack.c.l.b16 %v1661
    %v1968 = vunpack.c.h.b16 %v1661
    %v1969 = vunpack.c.l.b16 %v1662
    %v1970 = vunpack.c.h.b16 %v1662
    %v1971 = vunpack.c.l.b16 %v1663
    %v1972 = vunpack.c.h.b16 %v1663
    %v1973 = vunpack.c.l.b16 %v1664
    %v1974 = vunpack.c.h.b16 %v1664
    %v1975 = vunpack.c.l.b16 %v1665
    %v1976 = vunpack.c.h.b16 %v1665
    %v1977 = vunpack.c.l.b16 %v1666
    %v1978 = vunpack.c.h.b16 %v1666
    %v1979 = vunpack.c.l.b16 %v1667
    %v1980 = vunpack.c.h.b16 %v1667
    %v1981 = vunpack.c.l.b16 %v1668
    %v1982 = vunpack.c.h.b16 %v1668
    %v1983 = vunpack.c.l.b16 %v1669
    %v1984 = vunpack.c.h.b16 %v1669
    %v1985 = vunpack.c.l.b16 %v1670
    %v1986 = vunpack.c.h.b16 %v1670
    %v1987 = vunpack.c.l.b16 %v1671
    %v1988 = vunpack.c.h.b16 %v1671
    %v1989 = vunpack.c.l.b16 %v1672
    %v1990 = vunpack.c.h.b16 %v1672
    %v1991 = vunpack.c.l.b16 %v1673
    %v1992 = vunpack.c.h.b16 %v1673
    %v1993 = vunpack.c.l.b16 %v1674
    %v1994 = vunpack.c.h.b16 %v1674
    %v1995 = vunpack.c.l.b16 %v1675
    %v1996 = vunpack.c.h.b16 %v1675
    %v1997 = vunpack.c.l.b16 %v1676
    %v1998 = vunpack.c.h.b16 %v1676
    %v1999 = vunpack.c.l.b16 %v1677
    %v2000 = vunpack.c.h.b16 %v1677
    %v2001 = vunpack.c.l.b16 %v1678
    %v2002 = vunpack.c.h.b16 %v1678
    %v2003 = vunpack.c.l.b16 %v1679
    %v2004 = vunpack.c.h.b16 %v1679
    %v2005 = vunpack.c.l.b16 %v1680
    %v2006 = vunpack.c.h.b16 %v1680
    %v2007 = vunpack.c.l.b16 %v1681
    %v2008 = vunpack.c.h.b16 %v1681
    %v2009 = vunpack.c.l.b16 %v1682
    %v2010 = vunpack.c.h.b16 %v1682
    %v2011 = vunpack.c.l.b16 %v1683
    %v2012 = vunpack.c.h.b16 %v1683
    %v2013 = vunpack.c.l.b16 %v1684
    %v2014 = vunpack.c.h.b16 %v1684
    %v2015 = vunpack.c.l.b16 %v1685
    %v2016 = vunpack.c.h.b16 %v1685
    %v2017 = vunpack.c.l.b16 %v1686
    %v2018 = vunpack.c.h.b16 %v1686
    %v2019 = vunpack.c.l.b16 %v1687
    %v2020 = vunpack.c.h.b16 %v1687
    %v2021 = vunpack.c.l.b16 %v1688
    %v2022 = vunpack.c.h.b16 %v1688
    %v2023 = vunpack.c.l.b16 %v1689
    %v2024 = vunpack.c.h.b16 %v1689
    %v2025 = vunpack.c.l.b16 %v1690
    %v2026 = vunpack.c.h.b16 %v1690
    %v2027 = vunpack.c.l.b16 %v1691
    %v2028 = vunpack.c.h.b16 %v1691
    %v2029 = vunpack.c.l.b16 %v1692
    %v2030 = vunpack.c.h.b16 %v1692
    %v2031 = vunpack.c.l.b16 %v1693
    %v2032 = vunpack.c.h.b16 %v1693
    %v2033 = vunpack.c.l.b16 %v1694
    %v2034 = vunpack.c.h.b16 %v1694
    %v2035 = vunpack.c.l.b16 %v1695
    %v2036 = vunpack.c.h.b16 %v1695
    %v2037 = vunpack.c.l.b16 %v1696
    %v2038 = vunpack.c.h.b16 %v1696
    %v2039 = vunpack.c.l.b16 %v1697
    %v2040 = vunpack.c.h.b16 %v1697
    %v2041 = vunpack.c.l.b16 %v1698
    %v2042 = vunpack.c.h.b16 %v1698
    %v2043 = vunpack.c.l.b16 %v1699
    %v2044 = vunpack.c.h.b16 %v1699
    %v2045 = vunpack.c.l.b16 %v1700
    %v2046 = vunpack.c.h.b16 %v1700
    %v2047 = vunpack.c.l.b16 %v1701
    %v2048 = vunpack.c.h.b16 %v1701
    %v2049 = vunpack.c.l.b16 %v1702
    %v2050 = vunpack.c.h.b16 %v1702
    %v2051 = vunpack.c.l.b16 %v1703
    %v2052 = vunpack.c.h.b16 %v1703
    %v2053 = vunpack.c.l.b16 %v1704
    %v2054 = vunpack.c.h.b16 %v1704
    %v2055 = vunpack.c.l.b16 %v1705
    %v2056 = vunpack.c.h.b16 %v1705
    %v2057 = vunpack.c.l.b16 %v1706
    %v2058 = vunpack.c.h.b16 %v1706
    %v2059 = vunpack.c.l.b16 %v1707
    %v2060 = vunpack.c.h.b16 %v1707
    %v2061 = vunpack.c.l.b16 %v1708
    %v2062 = vunpack.c.h.b16 %v1708
    %v2063 = vunpack.c.l.b16 %v1709
    %v2064 = vunpack.c.h.b16 %v1709
    %v2065 = vunpack.c.l.b16 %v1710
    %v2066 = vunpack.c.h.b16 %v1710
    %v2067 = vunpack.c.l.b16 %v1711
    %v2068 = vunpack.c.h.b16 %v1711
    %v2069 = vunpack.c.l.b16 %v1712
    %v2070 = vunpack.c.h.b16 %v1712
    %v2071 = vunpack.c.l.b16 %v1713
    %v2072 = vunpack.c.h.b16 %v1713
    %v2073 = vunpack.c.l.b16 %v1714
    %v2074 = vunpack.c.h.b16 %v1714
    %v2075 = vunpack.c.l.b16 %v1715
    %v2076 = vunpack.c.h.b16 %v1715
    %v2077 = vunpack.c.l.b16 %v1716
    %v2078 = vunpack.c.h.b16 %v1716
    %v2079 = vunpack.c.l.b16 %v1717
    %v2080 = vunpack.c.h.b16 %v1717
    %v2081 = vunpack.c.l.b16 %v1718
    %v2082 = vunpack.c.h.b16 %v1718
    %v2083 = vunpack.c.l.b16 %v1719
    %v2084 = vunpack.c.h.b16 %v1719
    %v2085 = vunpack.c.l.b16 %v1720
    %v2086 = vunpack.c.h.b16 %v1720
    %v2087 = vunpack.c.l.b16 %v1721
    %v2088 = vunpack.c.h.b16 %v1721
    %v2089 = vunpack.c.l.b16 %v1722
    %v2090 = vunpack.c.h.b16 %v1722
    %v2091 = vunpack.c.l.b16 %v1723
    %v2092 = vunpack.c.h.b16 %v1723
    %v2093 = vunpack.c.l.b16 %v1724
    %v2094 = vunpack.c.h.b16 %v1724
    %v2095 = vunpack.c.l.b16 %v1725
    %v2096 = vunpack.c.h.b16 %v1725
    %v2097 = vunpack.c.l.b16 %v1726
    %v2098 = vunpack.c.h.b16 %v1726
    %v2099 = vunpack.c.l.b16 %v1727
    %v2100 = vunpack.c.h.b16 %v1727
    %v2101 = vunpack.c.l.b16 %v1728
    %v2102 = vunpack.c.h.b16 %v1728
    %v2103 = vunpack.c.l.b16 %v1729
    %v2104 = vunpack.c.h.b16 %v1729
    %v2105 = vunpack.c.l.b16 %v1730
    %v2106 = vunpack.c.h.b16 %v1730
    %v2107 = vunpack.c.l.b16 %v1731
    %v2108 = vunpack.c.h.b16 %v1731
    %v2109 = vunpack.c.l.b16 %v1732
    %v2110 = vunpack.c.h.b16 %v1732
    %v2111 = vunpack.c.l.b16 %v1733
    %v2112 = vunpack.c.h.b16 %v1733
    %v2113 = vunpack.c.l.b16 %v1734
    %v2114 = vunpack.c.h.b16 %v1734
    %v2115 = vunpack.c.l.b16 %v1735
    %v2116 = vunpack.c.h.b16 %v1735
    %v2117 = vunpack.c.l.b16 %v1736
    %v2118 = vunpack.c.h.b16 %v1736
    %v2119 = vunpack.c.l.b16 %v1737
    %v2120 = vunpack.c.h.b16 %v1737
    %v2121 = vunpack.c.l.b16 %v1738
    %v2122 = vunpack.c.h.b16 %v1738
    %v2123 = vunpack.c.l.b16 %v1739
    %v2124 = vunpack.c.h.b16 %v1739
    %v2125 = vunpack.c.l.b16 %v1740
    %v2126 = vunpack.c.h.b16 %v1740
    %v2127 = vunpack.c.l.b16 %v1741
    %v2128 = vunpack.c.h.b16 %v1741
    %v2129 = vunpack.c.l.b16 %v1742
    %v2130 = vunpack.c.h.b16 %v1742
    %v2131 = vunpack.c.l.b16 %v1743
    %v2132 = vunpack.c.h.b16 %v1743
    %v2133 = vunpack.c.l.b16 %v1744
    %v2134 = vunpack.c.h.b16 %v1744
    %v2135 = vunpack.c.l.b16 %v1745
    %v2136 = vunpack.c.h.b16 %v1745
    %v2137 = vunpack.c.l.b16 %v1746
    %v2138 = vunpack.c.h.b16 %v1746
    %v2139 = vunpack.c.l.b16 %v1747
    %v2140 = vunpack.c.h.b16 %v1747
    %v2141 = vunpack.c.l.b16 %v1748
    %v2142 = vunpack.c.h.b16 %v1748
    %v2143 = vunpack.c.l.b16 %v1749
    %v2144 = vunpack.c.h.b16 %v1749
    %v2145 = vunpack.c.l.b16 %v1750
    %v2146 = vunpack.c.h.b16 %v1750
    %v2147 = vunpack.c.l.b16 %v1751
    %v2148 = vunpack.c.h.b16 %v1751
    %v2149 = vunpack.c.l.b16 %v1752
    %v2150 = vunpack.c.h.b16 %v1752
    %v2151 = vunpack.c.l.b16 %v1753
    %v2152 = vunpack.c.h.b16 %v1753
    %v2153 = vunpack.c.l.b16 %v1754
    %v2154 = vunpack.c.h.b16 %v1754
    %v2155 = vunpack.c.l.b16 %v1755
    %v2156 = vunpack.c.h.b16 %v1755
    %v2157 = vunpack.c.l.b16 %v1756
    %v2158 = vunpack.c.h.b16 %v1756
    %v2159 = vunpack.c.l.b16 %v1757
    %v2160 = vunpack.c.h.b16 %v1757
    %v2161 = vunpack.c.l.b16 %v1758
    %v2162 = vunpack.c.h.b16 %v1758
    %v2163 = vunpack.c.l.b16 %v1759
    %v2164 = vunpack.c.h.b16 %v1759
    %v2165 = vunpack.c.l.b16 %v1760
    %v2166 = vunpack.c.h.b16 %v1760
    %v2167 = vunpack.c.l.b16 %v1761
    %v2168 = vunpack.c.h.b16 %v1761
    %v2169 = vpack.c.b16 %v1917, %v1913
    %v2170 = vpack.c.b16 %v1918, %v1914
    %v2171 = vpack.c.b16 %v1919, %v1915
    %v2172 = vpack.c.b16 %v1920, %v1916
    %v2173 = vpack.c.b16 %v1925, %v1921
    %v2174 = vpack.c.b16 %v1926, %v1922
    %v2175 = vpack.c.b16 %v1927, %v1923
    %v2176 = vpack.c.b16 %v1928, %v1924
    %v2177 = vpack.c.b16 %v1933, %v1929
    %v2178 = vpack.c.b16 %v1934, %v1930
    %v2179 = vpack.c.b16 %v1935, %v1931
    %v2180 = vpack.c.b16 %v1936, %v1932
    %v2181 = vpack.c.b16 %v1941, %v1937
    %v2182 = vpack.c.b16 %v1942, %v1938
    %v2183 = vpack.c.b16 %v1943, %v1939
    %v2184 = vpack.c.b16 %v1944, %v1940
    %v2185 = vpack.c.b16 %v1949, %v1945
    %v2186 = vpack.c.b16 %v1950, %v1946
    %v2187 = vpack.c.b16 %v1951, %v1947
    %v2188 = vpack.c.b16 %v1952, %v1948
    %v2189 = vpack.c.b16 %v1957, %v1953
    %v2190 = vpack.c.b16 %v1958, %v1954
    %v2191 = vpack.c.b16 %v1959, %v1955
    %v2192 = vpack.c.b16 %v1960, %v1956
    %v2193 = vpack.c.b16 %v1965, %v1961
    %v2194 = vpack.c.b16 %v1966, %v1962
    %v2195 = vpack.c.b16 %v1967, %v1963
    %v2196 = vpack.c.b16 %v1968, %v1964
    %v2197 = vpack.c.b16 %v1973, %v1969
    %v2198 = vpack.c.b16 %v1974, %v1970
    %v2199 = vpack.c.b16 %v1975, %v1971
    %v2200 = vpack.c.b16 %v1976, %v1972
    %v2201 = vpack.c.b16 %v1981, %v1977
    %v2202 = vpack.c.b16 %v1982, %v1978
    %v2203 = vpack.c.b16 %v1983, %v1979
    %v2204 = vpack.c.b16 %v1984, %v1980
    %v2205 = vpack.c.b16 %v1989, %v1985
    %v2206 = vpack.c.b16 %v1990, %v1986
    %v2207 = vpack.c.b16 %v1991, %v1987
    %v2208 = vpack.c.b16 %v1992, %v1988
    %v2209 = vpack.c.b16 %v1997, %v1993
    %v2210 = vpack.c.b16 %v1998, %v1994
    %v2211 = vpack.c.b16 %v1999, %v1995
    %v2212 = vpack.c.b16 %v2000, %v1996
    %v2213 = vpack.c.b16 %v2005, %v2001
    %v2214 = vpack.c.b16 %v2006, %v2002
    %v2215 = vpack.c.b16 %v2007, %v2003
    %v2216 = vpack.c.b16 %v2008, %v2004
    %v2217 = vpack.c.b16 %v2013, %v2009
    %v2218 = vpack.c.b16 %v2014, %v2010
    %v2219 = vpack.c.b16 %v2015, %v2011
    %v2220 = vpack.c.b16 %v2016, %v2012
    %v2221 = vpack.c.b16 %v2021, %v2017
    %v2222 = vpack.c.b16 %v2022, %v2018
    %v2223 = vpack.c.b16 %v2023, %v2019
    %v2224 = vpack.c.b16 %v2024, %v2020
    %v2225 = vpack.c.b16 %v2029, %v2025
    %v2226 = vpack.c.b16 %v2030, %v2026
    %v2227 = vpack.c.b16 %v2031, %v2027
    %v2228 = vpack.c.b16 %v2032, %v2028
    %v2229 = vpack.c.b16 %v2037, %v2033
    %v2230 = vpack.c.b16 %v2038, %v2034
    %v2231 = vpack.c.b16 %v2039, %v2035
    %v2232 = vpack.c.b16 %v2040, %v2036
    %v2233 = vpack.c.b16 %v2045, %v2041
    %v2234 = vpack.c.b16 %v2046, %v2042
    %v2235 = vpack.c.b16 %v2047, %v2043
    %v2236 = vpack.c.b16 %v2048, %v2044
    %v2237 = vpack.c.b16 %v2053, %v2049
    %v2238 = vpack.c.b16 %v2054, %v2050
    %v2239 = vpack.c.b16 %v2055, %v2051
    %v2240 = vpack.c.b16 %v2056, %v2052
    %v2241 = vpack.c.b16 %v2061, %v2057
    %v2242 = vpack.c.b16 %v2062, %v2058
    %v2243 = vpack.c.b16 %v2063, %v2059
    %v2244 = vpack.c.b16 %v2064, %v2060
    %v2245 = vpack.c.b16 %v2069, %v2065
    %v2246 = vpack.c.b16 %v2070, %v2066
    %v2247 = vpack.c.b16 %v2071, %v2067
    %v2248 = vpack.c.b16 %v2072, %v2068
    %v2249 = vpack.c.b16 %v2077, %v2073
    %v2250 = vpack.c.b16 %v2078, %v2074
    %v2251 = vpack.c.b16 %v2079, %v2075
    %v2252 = vpack.c.b16 %v2080, %v2076
    %v2253 = vpack.c.b16 %v2085, %v2081
    %v2254 = vpack.c.b16 %v2086, %v2082
    %v2255 = vpack.c.b16 %v2087, %v2083
    %v2256 = vpack.c.b16 %v2088, %v2084
    %v2257 = vpack.c.b16 %v2093, %v2089
    %v2258 = vpack.c.b16 %v2094, %v2090
    %v2259 = vpack.c.b16 %v2095, %v2091
    %v2260 = vpack.c.b16 %v2096, %v2092
    %v2261 = vpack.c.b16 %v2101, %v2097
    %v2262 = vpack.c.b16 %v2102, %v2098
    %v2263 = vpack.c.b16 %v2103, %v2099
    %v2264 = vpack.c.b16 %v2104, %v2100
    %v2265 = vpack.c.b16 %v2109, %v2105
    %v2266 = vpack.c.b16 %v2110, %v2106
    %v2267 = vpack.c.b16 %v2111, %v2107
    %v2268 = vpack.c.b16 %v2112, %v2108
    %v2269 = vpack.c.b16 %v2117, %v2113
    %v2270 = vpack.c.b16 %v2118, %v2114
    %v2271 = vpack.c.b16 %v2119, %v2115
    %v2272 = vpack.c.b16 %v2120, %v2116
    %v2273 = vpack.c.b16 %v2125, %v2121
    %v2274 = vpack.c.b16 %v2126, %v2122
    %v2275 = vpack.c.b16 %v2127, %v2123
    %v2276 = vpack.c.b16 %v2128, %v2124
    %v2277 = vpack.c.b16 %v2133, %v2129
    %v2278 = vpack.c.b16 %v2134, %v2130
    %v2279 = vpack.c.b16 %v2135, %v2131
    %v2280 = vpack.c.b16 %v2136, %v2132
    %v2281 = vpack.c.b16 %v2141, %v2137
    %v2282 = vpack.c.b16 %v2142, %v2138
    %v2283 = vpack.c.b16 %v2143, %v2139
    %v2284 = vpack.c.b16 %v2144, %v2140
    %v2285 = vpack.c.b16 %v2149, %v2145
    %v2286 = vpack.c.b16 %v2150, %v2146
    %v2287 = vpack.c.b16 %v2151, %v2147
    %v2288 = vpack.c.b16 %v2152, %v2148
    %v2289 = vpack.c.b16 %v2157, %v2153
    %v2290 = vpack.c.b16 %v2158, %v2154
    %v2291 = vpack.c.b16 %v2159, %v2155
    %v2292 = vpack.c.b16 %v2160, %v2156
    %v2293 = vpack.c.b16 %v2165, %v2161
    %v2294 = vpack.c.b16 %v2166, %v2162
    %v2295 = vpack.c.b16 %v2167, %v2163
    %v2296 = vpack.c.b16 %v2168, %v2164
    %2425 = vmatprep.subr.bf16.mxu0 %v2170
    %2426 = vmatpush1.bf16.msra.mxu0 %v2169
    %2427 = vmatprep.subr.bf16.mxu0 %v2174
    %2428 = vmatpush1.bf16.msra.mxu0 %v2173
    %2429 = vmatprep.subr.bf16.mxu0 %v2178
    %2430 = vmatpush1.bf16.msra.mxu0 %v2177
    %2431 = vmatprep.subr.bf16.mxu0 %v2182
    %2432 = vmatpush1.bf16.msra.mxu0 %v2181
    %2433 = vmatprep.subr.bf16.mxu0 %v2186
    %2434 = vmatpush1.bf16.msra.mxu0 %v2185
    %2435 = vmatprep.subr.bf16.mxu0 %v2190
    %2436 = vmatpush1.bf16.msra.mxu0 %v2189
    %2437 = vmatprep.subr.bf16.mxu0 %v2194
    %2438 = vmatpush1.bf16.msra.mxu0 %v2193
    %2439 = vmatprep.subr.bf16.mxu0 %v2198
    %2440 = vmatpush1.bf16.msra.mxu0 %v2197
    %2441 = vmatprep.subr.bf16.mxu0 %v2202
    %2442 = vmatpush1.bf16.msra.mxu0 %v2201
    %2443 = vmatprep.subr.bf16.mxu0 %v2206
    %2444 = vmatpush1.bf16.msra.mxu0 %v2205
    %2445 = vmatprep.subr.bf16.mxu0 %v2210
    %2446 = vmatpush1.bf16.msra.mxu0 %v2209
    %2447 = vmatprep.subr.bf16.mxu0 %v2214
    %2448 = vmatpush1.bf16.msra.mxu0 %v2213
    %2449 = vmatprep.subr.bf16.mxu0 %v2218
    %2450 = vmatpush1.bf16.msra.mxu0 %v2217
    %2451 = vmatprep.subr.bf16.mxu0 %v2222
    %2452 = vmatpush1.bf16.msra.mxu0 %v2221
    %2453 = vmatprep.subr.bf16.mxu0 %v2226
    %2454 = vmatpush1.bf16.msra.mxu0 %v2225
    %2455 = vmatprep.subr.bf16.mxu0 %v2230
    %2456 = vmatpush1.bf16.msra.mxu0 %v2229
    %2457 = vmatprep.mubr.bf16.mxu0 %v1631
    %2458 = vmatmul.mubr.bf16.gmra.mrb[0].mxu0 %v1630
    %v2459 = vpop.f32.mrb[0].mxu0
    %v2460 = vadd.f32 %v1768, %v2459
    %v2461 = vpop.f32.mrb[0].mxu0
    %v2462 = vadd.f32 %v1772, %v2461
    %v2463 = vpop.f32.mrb[0].mxu0
    %v2464 = vpop.f32.mrb[0].mxu0
    %2465 = vdwg.mxu0
    %2466 = vmatprep.subr.bf16.mxu0 %v2234
    %2467 = vmatpush1.bf16.msra.mxu0 %v2233
    %2468 = vmatprep.subr.bf16.mxu0 %v2238
    %2469 = vmatpush1.bf16.msra.mxu0 %v2237
    %2470 = vmatprep.subr.bf16.mxu0 %v2242
    %2471 = vmatpush1.bf16.msra.mxu0 %v2241
    %2472 = vmatprep.subr.bf16.mxu0 %v2246
    %2473 = vmatpush1.bf16.msra.mxu0 %v2245
    %2474 = vmatprep.subr.bf16.mxu0 %v2250
    %2475 = vmatpush1.bf16.msra.mxu0 %v2249
    %2476 = vmatprep.subr.bf16.mxu0 %v2254
    %2477 = vmatpush1.bf16.msra.mxu0 %v2253
    %2478 = vmatprep.subr.bf16.mxu0 %v2258
    %2479 = vmatpush1.bf16.msra.mxu0 %v2257
    %2480 = vmatprep.subr.bf16.mxu0 %v2262
    %2481 = vmatpush1.bf16.msra.mxu0 %v2261
    %2482 = vmatprep.subr.bf16.mxu0 %v2266
    %2483 = vmatpush1.bf16.msra.mxu0 %v2265
    %2484 = vmatprep.subr.bf16.mxu0 %v2270
    %2485 = vmatpush1.bf16.msra.mxu0 %v2269
    %2486 = vmatprep.subr.bf16.mxu0 %v2274
    %2487 = vmatpush1.bf16.msra.mxu0 %v2273
    %2488 = vmatprep.subr.bf16.mxu0 %v2278
    %2489 = vmatpush1.bf16.msra.mxu0 %v2277
    %2490 = vmatprep.subr.bf16.mxu0 %v2282
    %2491 = vmatpush1.bf16.msra.mxu0 %v2281
    %2492 = vmatprep.subr.bf16.mxu0 %v2286
    %2493 = vmatpush1.bf16.msra.mxu0 %v2285
    %2494 = vmatprep.subr.bf16.mxu0 %v2290
    %2495 = vmatpush1.bf16.msra.mxu0 %v2289
    %2496 = vmatprep.subr.bf16.mxu0 %v2294
    %2497 = vmatpush1.bf16.msra.mxu0 %v2293
    %2498 = vmatprep.mubr.bf16.mxu0 %v1633
    %2499 = vmatmul.mubr.bf16.gmra.mrb[0].mxu0 %v1632
    %v2500 = vpop.f32.mrb[0].mxu0
    %v2501 = vadd.f32 %v2460, %v2500
    %v2502 = vpop.f32.mrb[0].mxu0
    %v2503 = vadd.f32 %v2462, %v2502
    %v2504 = vpop.f32.mrb[0].mxu0
    %v2505 = vpop.f32.mrb[0].mxu0
    %2506 = vdwg.mxu0
    %2507 = vmatprep.subr.bf16.mxu0 %v2172
    %2508 = vmatpush1.bf16.msra.mxu0 %v2171
    %2509 = vmatprep.subr.bf16.mxu0 %v2176
    %2510 = vmatpush1.bf16.msra.mxu0 %v2175
    %2511 = vmatprep.subr.bf16.mxu0 %v2180
    %2512 = vmatpush1.bf16.msra.mxu0 %v2179
    %2513 = vmatprep.subr.bf16.mxu0 %v2184
    %2514 = vmatpush1.bf16.msra.mxu0 %v2183
    %2515 = vmatprep.subr.bf16.mxu0 %v2188
    %2516 = vmatpush1.bf16.msra.mxu0 %v2187
    %2517 = vmatprep.subr.bf16.mxu0 %v2192
    %2518 = vmatpush1.bf16.msra.mxu0 %v2191
    %2519 = vmatprep.subr.bf16.mxu0 %v2196
    %2520 = vmatpush1.bf16.msra.mxu0 %v2195
    %2521 = vmatprep.subr.bf16.mxu0 %v2200
    %2522 = vmatpush1.bf16.msra.mxu0 %v2199
    %2523 = vmatprep.subr.bf16.mxu0 %v2204
    %2524 = vmatpush1.bf16.msra.mxu0 %v2203
    %2525 = vmatprep.subr.bf16.mxu0 %v2208
    %2526 = vmatpush1.bf16.msra.mxu0 %v2207
    %2527 = vmatprep.subr.bf16.mxu0 %v2212
    %2528 = vmatpush1.bf16.msra.mxu0 %v2211
    %2529 = vmatprep.subr.bf16.mxu0 %v2216
    %2530 = vmatpush1.bf16.msra.mxu0 %v2215
    %2531 = vmatprep.subr.bf16.mxu0 %v2220
    %2532 = vmatpush1.bf16.msra.mxu0 %v2219
    %2533 = vmatprep.subr.bf16.mxu0 %v2224
    %2534 = vmatpush1.bf16.msra.mxu0 %v2223
    %2535 = vmatprep.subr.bf16.mxu0 %v2228
    %2536 = vmatpush1.bf16.msra.mxu0 %v2227
    %2537 = vmatprep.subr.bf16.mxu0 %v2232
    %2538 = vmatpush1.bf16.msra.mxu0 %v2231
    %2539 = vmatprep.mubr.bf16.mxu0 %v1631
    %2540 = vmatmul.mubr.bf16.gmra.mrb[0].mxu0 %v1630
    %v2541 = vpop.f32.mrb[0].mxu0
    %v2542 = vadd.f32 %v1776, %v2541
    %v2543 = vpop.f32.mrb[0].mxu0
    %v2544 = vadd.f32 %v1780, %v2543
    %v2545 = vpop.f32.mrb[0].mxu0
    %v2546 = vpop.f32.mrb[0].mxu0
    %2547 = vdwg.mxu0
    %2548 = vmatprep.subr.bf16.mxu0 %v2236
    %2549 = vmatpush1.bf16.msra.mxu0 %v2235
    %2550 = vmatprep.subr.bf16.mxu0 %v2240
    %2551 = vmatpush1.bf16.msra.mxu0 %v2239
    %2552 = vmatprep.subr.bf16.mxu0 %v2244
    %2553 = vmatpush1.bf16.msra.mxu0 %v2243
    %2554 = vmatprep.subr.bf16.mxu0 %v2248
    %2555 = vmatpush1.bf16.msra.mxu0 %v2247
    %2556 = vmatprep.subr.bf16.mxu0 %v2252
    %2557 = vmatpush1.bf16.msra.mxu0 %v2251
    %2558 = vmatprep.subr.bf16.mxu0 %v2256
    %2559 = vmatpush1.bf16.msra.mxu0 %v2255
    %2560 = vmatprep.subr.bf16.mxu0 %v2260
    %2561 = vmatpush1.bf16.msra.mxu0 %v2259
    %2562 = vmatprep.subr.bf16.mxu0 %v2264
    %2563 = vmatpush1.bf16.msra.mxu0 %v2263
    %2564 = vmatprep.subr.bf16.mxu0 %v2268
    %2565 = vmatpush1.bf16.msra.mxu0 %v2267
    %2566 = vmatprep.subr.bf16.mxu0 %v2272
    %2567 = vmatpush1.bf16.msra.mxu0 %v2271
    %2568 = vmatprep.subr.bf16.mxu0 %v2276
    %2569 = vmatpush1.bf16.msra.mxu0 %v2275
    %2570 = vmatprep.subr.bf16.mxu0 %v2280
    %2571 = vmatpush1.bf16.msra.mxu0 %v2279
    %2572 = vmatprep.subr.bf16.mxu0 %v2284
    %2573 = vmatpush1.bf16.msra.mxu0 %v2283
    %2574 = vmatprep.subr.bf16.mxu0 %v2288
    %2575 = vmatpush1.bf16.msra.mxu0 %v2287
    %2576 = vmatprep.subr.bf16.mxu0 %v2292
    %2577 = vmatpush1.bf16.msra.mxu0 %v2291
    %2578 = vmatprep.subr.bf16.mxu0 %v2296
    %2579 = vmatpush1.bf16.msra.mxu0 %v2295
    %2580 = vmatprep.mubr.bf16.mxu0 %v1633
    %2581 = vmatmul.mubr.bf16.gmra.mrb[0].mxu0 %v1632
    %v2582 = vpop.f32.mrb[0].mxu0
    %v2583 = vadd.f32 %v2542, %v2582
    %v2584 = vpop.f32.mrb[0].mxu0
    %v2585 = vadd.f32 %v2544, %v2584
    %v2586 = vpop.f32.mrb[0].mxu0
    %v2587 = vpop.f32.mrb[0].mxu0
    %2588 = vdwg.mxu0
    %v2589 = vmax.f32 %v2501, 0.0
    %v2590 = vmax.f32 %v2503, 0.0
    %v2591 = vmax.f32 %v2583, 0.0
    %v2592 = vmax.f32 %v2585, 0.0
    %v2593 = vand.u32 2147483647, %v2501
    %v2594 = vand.u32 2147483647, %v2503
    %v2595 = vand.u32 2147483647, %v2583
    %v2596 = vand.u32 2147483647, %v2585
    %v2597 = vsub.f32 0.0, %v2593
    %v2598 = vsub.f32 0.0, %v2594
    %v2599 = vsub.f32 0.0, %v2595
    %v2600 = vsub.f32 0.0, %v2596
    %v2601 = vmul.f32 %v2597, 1.442695
    %v2602 = vpow.pop %v2601
    %v2603 = vmul.f32 %v2598, 1.442695
    %v2604 = vpow.pop %v2603
    %v2605 = vmul.f32 %v2599, 1.442695
    %v2606 = vpow.pop %v2605
    %v2607 = vmul.f32 %v2600, 1.442695
    %v2608 = vpow.pop %v2607
    %v2609 = vadd.f32 %v2602, 1.0
    %v2610 = vlog2.pop %v2609
    %v2611 = vmul.f32 %v2610, 0.6931472
    %v2612 = vmul.f32 -0.5, %v2602
    %v2613 = vadd.f32 %v2612, 1.0
    %v2614 = vmul.f32 %v2613, %v2602
    %v2615 = vand.u32 2147483647, %v2602
    %vm2616 = vcmp.lt.f32.partialorder %v2615, 0.0004427343
    %v2617 = vsel %vm2616, %v2614, %v2611
    %v2618 = vadd.f32 %v2604, 1.0
    %v2619 = vlog2.pop %v2618
    %v2620 = vmul.f32 %v2619, 0.6931472
    %v2621 = vmul.f32 -0.5, %v2604
    %v2622 = vadd.f32 %v2621, 1.0
    %v2623 = vmul.f32 %v2622, %v2604
    %v2624 = vand.u32 2147483647, %v2604
    %vm2625 = vcmp.lt.f32.partialorder %v2624, 0.0004427343
    %v2626 = vsel %vm2625, %v2623, %v2620
    %v2627 = vadd.f32 %v2606, 1.0
    %v2628 = vlog2.pop %v2627
    %v2629 = vmul.f32 %v2628, 0.6931472
    %v2630 = vmul.f32 -0.5, %v2606
    %v2631 = vadd.f32 %v2630, 1.0
    %v2632 = vmul.f32 %v2631, %v2606
    %v2633 = vand.u32 2147483647, %v2606
    %vm2634 = vcmp.lt.f32.partialorder %v2633, 0.0004427343
    %v2635 = vsel %vm2634, %v2632, %v2629
    %v2636 = vadd.f32 %v2608, 1.0
    %v2637 = vlog2.pop %v2636
    %v2638 = vmul.f32 %v2637, 0.6931472
    %v2639 = vmul.f32 -0.5, %v2608
    %v2640 = vadd.f32 %v2639, 1.0
    %v2641 = vmul.f32 %v2640, %v2608
    %v2642 = vand.u32 2147483647, %v2608
    %vm2643 = vcmp.lt.f32.partialorder %v2642, 0.0004427343
    %v2644 = vsel %vm2643, %v2641, %v2638
    %v2645 = vadd.f32 %v2589, %v2617
    %v2646 = vadd.f32 %v2590, %v2626
    %v2647 = vadd.f32 %v2591, %v2635
    %v2648 = vadd.f32 %v2592, %v2644
    %v2649 = vpack.c.bf16 %v2645, %v2645
    %v2650 = vpack.c.bf16 %v2646, %v2646
    %v2651 = vpack.c.bf16 %v2647, %v2647
    %v2652 = vpack.c.bf16 %v2648, %v2648
    %v2653 = vld [vmem:[#allocation8] sm:$0xff]
    %v2654 = vld [vmem:[#allocation8 + $0x8] sm:$0xff]
    %v2655 = vld [vmem:[#allocation8 + $0x10] sm:$0xff]
    %v2656 = vld [vmem:[#allocation8 + $0x18] sm:$0xff]
    %v2657 = vld [vmem:[#allocation8 + $0x20] sm:$0xff]
    %v2658 = vld [vmem:[#allocation8 + $0x28] sm:$0xff]
    %v2659 = vld [vmem:[#allocation8 + $0x30] sm:$0xff]
    %v2660 = vld [vmem:[#allocation8 + $0x38] sm:$0xff]
    %v2661 = vld [vmem:[#allocation8 + $0x40] sm:$0xff]
    %v2662 = vld [vmem:[#allocation8 + $0x48] sm:$0xff]
    %v2663 = vld [vmem:[#allocation8 + $0x50] sm:$0xff]
    %v2664 = vld [vmem:[#allocation8 + $0x58] sm:$0xff]
    %v2665 = vld [vmem:[#allocation8 + $0x60] sm:$0xff]
    %v2666 = vld [vmem:[#allocation8 + $0x68] sm:$0xff]
    %v2667 = vld [vmem:[#allocation8 + $0x70] sm:$0xff]
    %v2668 = vld [vmem:[#allocation8 + $0x78] sm:$0xff]
    %v2669 = vld [vmem:[#allocation8 + $0x80] sm:$0xff]
    %v2670 = vld [vmem:[#allocation8 + $0x88] sm:$0xff]
    %v2671 = vld [vmem:[#allocation8 + $0x90] sm:$0xff]
    %v2672 = vld [vmem:[#allocation8 + $0x98] sm:$0xff]
    %v2673 = vld [vmem:[#allocation8 + $0xa0] sm:$0xff]
    %v2674 = vld [vmem:[#allocation8 + $0xa8] sm:$0xff]
    %v2675 = vld [vmem:[#allocation8 + $0xb0] sm:$0xff]
    %v2676 = vld [vmem:[#allocation8 + $0xb8] sm:$0xff]
    %v2677 = vld [vmem:[#allocation8 + $0xc0] sm:$0xff]
    %v2678 = vld [vmem:[#allocation8 + $0xc8] sm:$0xff]
    %v2679 = vld [vmem:[#allocation8 + $0xd0] sm:$0xff]
    %v2680 = vld [vmem:[#allocation8 + $0xd8] sm:$0xff]
    %v2681 = vld [vmem:[#allocation8 + $0xe0] sm:$0xff]
    %v2682 = vld [vmem:[#allocation8 + $0xe8] sm:$0xff]
    %v2683 = vld [vmem:[#allocation8 + $0xf0] sm:$0xff]
    %v2684 = vld [vmem:[#allocation8 + $0xf8] sm:$0xff]
    %v2685 = vld [vmem:[#allocation8 + $0x100] sm:$0xff]
    %v2686 = vld [vmem:[#allocation8 + $0x108] sm:$0xff]
    %v2687 = vld [vmem:[#allocation8 + $0x110] sm:$0xff]
    %v2688 = vld [vmem:[#allocation8 + $0x118] sm:$0xff]
    %v2689 = vld [vmem:[#allocation8 + $0x120] sm:$0xff]
    %v2690 = vld [vmem:[#allocation8 + $0x128] sm:$0xff]
    %v2691 = vld [vmem:[#allocation8 + $0x130] sm:$0xff]
    %v2692 = vld [vmem:[#allocation8 + $0x138] sm:$0xff]
    %v2693 = vld [vmem:[#allocation8 + $0x140] sm:$0xff]
    %v2694 = vld [vmem:[#allocation8 + $0x148] sm:$0xff]
    %v2695 = vld [vmem:[#allocation8 + $0x150] sm:$0xff]
    %v2696 = vld [vmem:[#allocation8 + $0x158] sm:$0xff]
    %v2697 = vld [vmem:[#allocation8 + $0x160] sm:$0xff]
    %v2698 = vld [vmem:[#allocation8 + $0x168] sm:$0xff]
    %v2699 = vld [vmem:[#allocation8 + $0x170] sm:$0xff]
    %v2700 = vld [vmem:[#allocation8 + $0x178] sm:$0xff]
    %v2701 = vld [vmem:[#allocation8 + $0x180] sm:$0xff]
    %v2702 = vld [vmem:[#allocation8 + $0x188] sm:$0xff]
    %v2703 = vld [vmem:[#allocation8 + $0x190] sm:$0xff]
    %v2704 = vld [vmem:[#allocation8 + $0x198] sm:$0xff]
    %v2705 = vld [vmem:[#allocation8 + $0x1a0] sm:$0xff]
    %v2706 = vld [vmem:[#allocation8 + $0x1a8] sm:$0xff]
    %v2707 = vld [vmem:[#allocation8 + $0x1b0] sm:$0xff]
    %v2708 = vld [vmem:[#allocation8 + $0x1b8] sm:$0xff]
    %v2709 = vld [vmem:[#allocation8 + $0x1c0] sm:$0xff]
    %v2710 = vld [vmem:[#allocation8 + $0x1c8] sm:$0xff]
    %v2711 = vld [vmem:[#allocation8 + $0x1d0] sm:$0xff]
    %v2712 = vld [vmem:[#allocation8 + $0x1d8] sm:$0xff]
    %v2713 = vld [vmem:[#allocation8 + $0x1e0] sm:$0xff]
    %v2714 = vld [vmem:[#allocation8 + $0x1e8] sm:$0xff]
    %v2715 = vld [vmem:[#allocation8 + $0x1f0] sm:$0xff]
    %v2716 = vld [vmem:[#allocation8 + $0x1f8] sm:$0xff]
    %v2717 = vld [vmem:[#allocation8 + $0x200] sm:$0xff]
    %v2718 = vld [vmem:[#allocation8 + $0x208] sm:$0xff]
    %v2719 = vld [vmem:[#allocation8 + $0x210] sm:$0xff]
    %v2720 = vld [vmem:[#allocation8 + $0x218] sm:$0xff]
    %v2721 = vld [vmem:[#allocation8 + $0x220] sm:$0xff]
    %v2722 = vld [vmem:[#allocation8 + $0x228] sm:$0xff]
    %v2723 = vld [vmem:[#allocation8 + $0x230] sm:$0xff]
    %v2724 = vld [vmem:[#allocation8 + $0x238] sm:$0xff]
    %v2725 = vld [vmem:[#allocation8 + $0x240] sm:$0xff]
    %v2726 = vld [vmem:[#allocation8 + $0x248] sm:$0xff]
    %v2727 = vld [vmem:[#allocation8 + $0x250] sm:$0xff]
    %v2728 = vld [vmem:[#allocation8 + $0x258] sm:$0xff]
    %v2729 = vld [vmem:[#allocation8 + $0x260] sm:$0xff]
    %v2730 = vld [vmem:[#allocation8 + $0x268] sm:$0xff]
    %v2731 = vld [vmem:[#allocation8 + $0x270] sm:$0xff]
    %v2732 = vld [vmem:[#allocation8 + $0x278] sm:$0xff]
    %v2733 = vld [vmem:[#allocation8 + $0x280] sm:$0xff]
    %v2734 = vld [vmem:[#allocation8 + $0x288] sm:$0xff]
    %v2735 = vld [vmem:[#allocation8 + $0x290] sm:$0xff]
    %v2736 = vld [vmem:[#allocation8 + $0x298] sm:$0xff]
    %v2737 = vld [vmem:[#allocation8 + $0x2a0] sm:$0xff]
    %v2738 = vld [vmem:[#allocation8 + $0x2a8] sm:$0xff]
    %v2739 = vld [vmem:[#allocation8 + $0x2b0] sm:$0xff]
    %v2740 = vld [vmem:[#allocation8 + $0x2b8] sm:$0xff]
    %v2741 = vld [vmem:[#allocation8 + $0x2c0] sm:$0xff]
    %v2742 = vld [vmem:[#allocation8 + $0x2c8] sm:$0xff]
    %v2743 = vld [vmem:[#allocation8 + $0x2d0] sm:$0xff]
    %v2744 = vld [vmem:[#allocation8 + $0x2d8] sm:$0xff]
    %v2745 = vld [vmem:[#allocation8 + $0x2e0] sm:$0xff]
    %v2746 = vld [vmem:[#allocation8 + $0x2e8] sm:$0xff]
    %v2747 = vld [vmem:[#allocation8 + $0x2f0] sm:$0xff]
    %v2748 = vld [vmem:[#allocation8 + $0x2f8] sm:$0xff]
    %v2749 = vld [vmem:[#allocation8 + $0x300] sm:$0xff]
    %v2750 = vld [vmem:[#allocation8 + $0x308] sm:$0xff]
    %v2751 = vld [vmem:[#allocation8 + $0x310] sm:$0xff]
    %v2752 = vld [vmem:[#allocation8 + $0x318] sm:$0xff]
    %v2753 = vld [vmem:[#allocation8 + $0x320] sm:$0xff]
    %v2754 = vld [vmem:[#allocation8 + $0x328] sm:$0xff]
    %v2755 = vld [vmem:[#allocation8 + $0x330] sm:$0xff]
    %v2756 = vld [vmem:[#allocation8 + $0x338] sm:$0xff]
    %v2757 = vld [vmem:[#allocation8 + $0x340] sm:$0xff]
    %v2758 = vld [vmem:[#allocation8 + $0x348] sm:$0xff]
    %v2759 = vld [vmem:[#allocation8 + $0x350] sm:$0xff]
    %v2760 = vld [vmem:[#allocation8 + $0x358] sm:$0xff]
    %v2761 = vld [vmem:[#allocation8 + $0x360] sm:$0xff]
    %v2762 = vld [vmem:[#allocation8 + $0x368] sm:$0xff]
    %v2763 = vld [vmem:[#allocation8 + $0x370] sm:$0xff]
    %v2764 = vld [vmem:[#allocation8 + $0x378] sm:$0xff]
    %v2765 = vld [vmem:[#allocation8 + $0x380] sm:$0xff]
    %v2766 = vld [vmem:[#allocation8 + $0x388] sm:$0xff]
    %v2767 = vld [vmem:[#allocation8 + $0x390] sm:$0xff]
    %v2768 = vld [vmem:[#allocation8 + $0x398] sm:$0xff]
    %v2769 = vld [vmem:[#allocation8 + $0x3a0] sm:$0xff]
    %v2770 = vld [vmem:[#allocation8 + $0x3a8] sm:$0xff]
    %v2771 = vld [vmem:[#allocation8 + $0x3b0] sm:$0xff]
    %v2772 = vld [vmem:[#allocation8 + $0x3b8] sm:$0xff]
    %v2773 = vld [vmem:[#allocation8 + $0x3c0] sm:$0xff]
    %v2774 = vld [vmem:[#allocation8 + $0x3c8] sm:$0xff]
    %v2775 = vld [vmem:[#allocation8 + $0x3d0] sm:$0xff]
    %v2776 = vld [vmem:[#allocation8 + $0x3d8] sm:$0xff]
    %v2777 = vld [vmem:[#allocation8 + $0x3e0] sm:$0xff]
    %v2778 = vld [vmem:[#allocation8 + $0x3e8] sm:$0xff]
    %v2779 = vld [vmem:[#allocation8 + $0x3f0] sm:$0xff]
    %v2780 = vld [vmem:[#allocation8 + $0x3f8] sm:$0xff]
    %s2781 = scalar_lea.vmem [#allocation14], 2
    %v2782 = vld [vmem:[%s2781] ss:$8 sm:$0xf]
    %v2784 = vlaneseq
    %v2785 = vshrl.u32 %v2784, 7
    %v2786 = vsub.s32 0, %v2785
    %v2787 = vrot.slane %v2782, %v2786
    %v2788 = vlaneseq
    %v2789 = vshrl.u32 %v2788, 7
    %v2790 = vsub.s32 1, %v2789
    %v2791 = vrot.slane %v2782, %v2790
    %v2792 = vlaneseq
    %v2793 = vshrl.u32 %v2792, 7
    %v2794 = vsub.s32 2, %v2793
    %v2795 = vrot.slane %v2782, %v2794
    %v2796 = vlaneseq
    %v2797 = vshrl.u32 %v2796, 7
    %v2798 = vsub.s32 3, %v2797
    %v2799 = vrot.slane %v2782, %v2798
    %v2932 = vunpack.c.l.b16 %v2653
    %v2933 = vunpack.c.h.b16 %v2653
    %v2934 = vunpack.c.l.b16 %v2654
    %v2935 = vunpack.c.h.b16 %v2654
    %v2936 = vunpack.c.l.b16 %v2655
    %v2937 = vunpack.c.h.b16 %v2655
    %v2938 = vunpack.c.l.b16 %v2656
    %v2939 = vunpack.c.h.b16 %v2656
    %v2940 = vunpack.c.l.b16 %v2657
    %v2941 = vunpack.c.h.b16 %v2657
    %v2942 = vunpack.c.l.b16 %v2658
    %v2943 = vunpack.c.h.b16 %v2658
    %v2944 = vunpack.c.l.b16 %v2659
    %v2945 = vunpack.c.h.b16 %v2659
    %v2946 = vunpack.c.l.b16 %v2660
    %v2947 = vunpack.c.h.b16 %v2660
    %v2948 = vunpack.c.l.b16 %v2661
    %v2949 = vunpack.c.h.b16 %v2661
    %v2950 = vunpack.c.l.b16 %v2662
    %v2951 = vunpack.c.h.b16 %v2662
    %v2952 = vunpack.c.l.b16 %v2663
    %v2953 = vunpack.c.h.b16 %v2663
    %v2954 = vunpack.c.l.b16 %v2664
    %v2955 = vunpack.c.h.b16 %v2664
    %v2956 = vunpack.c.l.b16 %v2665
    %v2957 = vunpack.c.h.b16 %v2665
    %v2958 = vunpack.c.l.b16 %v2666
    %v2959 = vunpack.c.h.b16 %v2666
    %v2960 = vunpack.c.l.b16 %v2667
    %v2961 = vunpack.c.h.b16 %v2667
    %v2962 = vunpack.c.l.b16 %v2668
    %v2963 = vunpack.c.h.b16 %v2668
    %v2964 = vunpack.c.l.b16 %v2669
    %v2965 = vunpack.c.h.b16 %v2669
    %v2966 = vunpack.c.l.b16 %v2670
    %v2967 = vunpack.c.h.b16 %v2670
    %v2968 = vunpack.c.l.b16 %v2671
    %v2969 = vunpack.c.h.b16 %v2671
    %v2970 = vunpack.c.l.b16 %v2672
    %v2971 = vunpack.c.h.b16 %v2672
    %v2972 = vunpack.c.l.b16 %v2673
    %v2973 = vunpack.c.h.b16 %v2673
    %v2974 = vunpack.c.l.b16 %v2674
    %v2975 = vunpack.c.h.b16 %v2674
    %v2976 = vunpack.c.l.b16 %v2675
    %v2977 = vunpack.c.h.b16 %v2675
    %v2978 = vunpack.c.l.b16 %v2676
    %v2979 = vunpack.c.h.b16 %v2676
    %v2980 = vunpack.c.l.b16 %v2677
    %v2981 = vunpack.c.h.b16 %v2677
    %v2982 = vunpack.c.l.b16 %v2678
    %v2983 = vunpack.c.h.b16 %v2678
    %v2984 = vunpack.c.l.b16 %v2679
    %v2985 = vunpack.c.h.b16 %v2679
    %v2986 = vunpack.c.l.b16 %v2680
    %v2987 = vunpack.c.h.b16 %v2680
    %v2988 = vunpack.c.l.b16 %v2681
    %v2989 = vunpack.c.h.b16 %v2681
    %v2990 = vunpack.c.l.b16 %v2682
    %v2991 = vunpack.c.h.b16 %v2682
    %v2992 = vunpack.c.l.b16 %v2683
    %v2993 = vunpack.c.h.b16 %v2683
    %v2994 = vunpack.c.l.b16 %v2684
    %v2995 = vunpack.c.h.b16 %v2684
    %v2996 = vunpack.c.l.b16 %v2685
    %v2997 = vunpack.c.h.b16 %v2685
    %v2998 = vunpack.c.l.b16 %v2686
    %v2999 = vunpack.c.h.b16 %v2686
    %v3000 = vunpack.c.l.b16 %v2687
    %v3001 = vunpack.c.h.b16 %v2687
    %v3002 = vunpack.c.l.b16 %v2688
    %v3003 = vunpack.c.h.b16 %v2688
    %v3004 = vunpack.c.l.b16 %v2689
    %v3005 = vunpack.c.h.b16 %v2689
    %v3006 = vunpack.c.l.b16 %v2690
    %v3007 = vunpack.c.h.b16 %v2690
    %v3008 = vunpack.c.l.b16 %v2691
    %v3009 = vunpack.c.h.b16 %v2691
    %v3010 = vunpack.c.l.b16 %v2692
    %v3011 = vunpack.c.h.b16 %v2692
    %v3012 = vunpack.c.l.b16 %v2693
    %v3013 = vunpack.c.h.b16 %v2693
    %v3014 = vunpack.c.l.b16 %v2694
    %v3015 = vunpack.c.h.b16 %v2694
    %v3016 = vunpack.c.l.b16 %v2695
    %v3017 = vunpack.c.h.b16 %v2695
    %v3018 = vunpack.c.l.b16 %v2696
    %v3019 = vunpack.c.h.b16 %v2696
    %v3020 = vunpack.c.l.b16 %v2697
    %v3021 = vunpack.c.h.b16 %v2697
    %v3022 = vunpack.c.l.b16 %v2698
    %v3023 = vunpack.c.h.b16 %v2698
    %v3024 = vunpack.c.l.b16 %v2699
    %v3025 = vunpack.c.h.b16 %v2699
    %v3026 = vunpack.c.l.b16 %v2700
    %v3027 = vunpack.c.h.b16 %v2700
    %v3028 = vunpack.c.l.b16 %v2701
    %v3029 = vunpack.c.h.b16 %v2701
    %v3030 = vunpack.c.l.b16 %v2702
    %v3031 = vunpack.c.h.b16 %v2702
    %v3032 = vunpack.c.l.b16 %v2703
    %v3033 = vunpack.c.h.b16 %v2703
    %v3034 = vunpack.c.l.b16 %v2704
    %v3035 = vunpack.c.h.b16 %v2704
    %v3036 = vunpack.c.l.b16 %v2705
    %v3037 = vunpack.c.h.b16 %v2705
    %v3038 = vunpack.c.l.b16 %v2706
    %v3039 = vunpack.c.h.b16 %v2706
    %v3040 = vunpack.c.l.b16 %v2707
    %v3041 = vunpack.c.h.b16 %v2707
    %v3042 = vunpack.c.l.b16 %v2708
    %v3043 = vunpack.c.h.b16 %v2708
    %v3044 = vunpack.c.l.b16 %v2709
    %v3045 = vunpack.c.h.b16 %v2709
    %v3046 = vunpack.c.l.b16 %v2710
    %v3047 = vunpack.c.h.b16 %v2710
    %v3048 = vunpack.c.l.b16 %v2711
    %v3049 = vunpack.c.h.b16 %v2711
    %v3050 = vunpack.c.l.b16 %v2712
    %v3051 = vunpack.c.h.b16 %v2712
    %v3052 = vunpack.c.l.b16 %v2713
    %v3053 = vunpack.c.h.b16 %v2713
    %v3054 = vunpack.c.l.b16 %v2714
    %v3055 = vunpack.c.h.b16 %v2714
    %v3056 = vunpack.c.l.b16 %v2715
    %v3057 = vunpack.c.h.b16 %v2715
    %v3058 = vunpack.c.l.b16 %v2716
    %v3059 = vunpack.c.h.b16 %v2716
    %v3060 = vunpack.c.l.b16 %v2717
    %v3061 = vunpack.c.h.b16 %v2717
    %v3062 = vunpack.c.l.b16 %v2718
    %v3063 = vunpack.c.h.b16 %v2718
    %v3064 = vunpack.c.l.b16 %v2719
    %v3065 = vunpack.c.h.b16 %v2719
    %v3066 = vunpack.c.l.b16 %v2720
    %v3067 = vunpack.c.h.b16 %v2720
    %v3068 = vunpack.c.l.b16 %v2721
    %v3069 = vunpack.c.h.b16 %v2721
    %v3070 = vunpack.c.l.b16 %v2722
    %v3071 = vunpack.c.h.b16 %v2722
    %v3072 = vunpack.c.l.b16 %v2723
    %v3073 = vunpack.c.h.b16 %v2723
    %v3074 = vunpack.c.l.b16 %v2724
    %v3075 = vunpack.c.h.b16 %v2724
    %v3076 = vunpack.c.l.b16 %v2725
    %v3077 = vunpack.c.h.b16 %v2725
    %v3078 = vunpack.c.l.b16 %v2726
    %v3079 = vunpack.c.h.b16 %v2726
    %v3080 = vunpack.c.l.b16 %v2727
    %v3081 = vunpack.c.h.b16 %v2727
    %v3082 = vunpack.c.l.b16 %v2728
    %v3083 = vunpack.c.h.b16 %v2728
    %v3084 = vunpack.c.l.b16 %v2729
    %v3085 = vunpack.c.h.b16 %v2729
    %v3086 = vunpack.c.l.b16 %v2730
    %v3087 = vunpack.c.h.b16 %v2730
    %v3088 = vunpack.c.l.b16 %v2731
    %v3089 = vunpack.c.h.b16 %v2731
    %v3090 = vunpack.c.l.b16 %v2732
    %v3091 = vunpack.c.h.b16 %v2732
    %v3092 = vunpack.c.l.b16 %v2733
    %v3093 = vunpack.c.h.b16 %v2733
    %v3094 = vunpack.c.l.b16 %v2734
    %v3095 = vunpack.c.h.b16 %v2734
    %v3096 = vunpack.c.l.b16 %v2735
    %v3097 = vunpack.c.h.b16 %v2735
    %v3098 = vunpack.c.l.b16 %v2736
    %v3099 = vunpack.c.h.b16 %v2736
    %v3100 = vunpack.c.l.b16 %v2737
    %v3101 = vunpack.c.h.b16 %v2737
    %v3102 = vunpack.c.l.b16 %v2738
    %v3103 = vunpack.c.h.b16 %v2738
    %v3104 = vunpack.c.l.b16 %v2739
    %v3105 = vunpack.c.h.b16 %v2739
    %v3106 = vunpack.c.l.b16 %v2740
    %v3107 = vunpack.c.h.b16 %v2740
    %v3108 = vunpack.c.l.b16 %v2741
    %v3109 = vunpack.c.h.b16 %v2741
    %v3110 = vunpack.c.l.b16 %v2742
    %v3111 = vunpack.c.h.b16 %v2742
    %v3112 = vunpack.c.l.b16 %v2743
    %v3113 = vunpack.c.h.b16 %v2743
    %v3114 = vunpack.c.l.b16 %v2744
    %v3115 = vunpack.c.h.b16 %v2744
    %v3116 = vunpack.c.l.b16 %v2745
    %v3117 = vunpack.c.h.b16 %v2745
    %v3118 = vunpack.c.l.b16 %v2746
    %v3119 = vunpack.c.h.b16 %v2746
    %v3120 = vunpack.c.l.b16 %v2747
    %v3121 = vunpack.c.h.b16 %v2747
    %v3122 = vunpack.c.l.b16 %v2748
    %v3123 = vunpack.c.h.b16 %v2748
    %v3124 = vunpack.c.l.b16 %v2749
    %v3125 = vunpack.c.h.b16 %v2749
    %v3126 = vunpack.c.l.b16 %v2750
    %v3127 = vunpack.c.h.b16 %v2750
    %v3128 = vunpack.c.l.b16 %v2751
    %v3129 = vunpack.c.h.b16 %v2751
    %v3130 = vunpack.c.l.b16 %v2752
    %v3131 = vunpack.c.h.b16 %v2752
    %v3132 = vunpack.c.l.b16 %v2753
    %v3133 = vunpack.c.h.b16 %v2753
    %v3134 = vunpack.c.l.b16 %v2754
    %v3135 = vunpack.c.h.b16 %v2754
    %v3136 = vunpack.c.l.b16 %v2755
    %v3137 = vunpack.c.h.b16 %v2755
    %v3138 = vunpack.c.l.b16 %v2756
    %v3139 = vunpack.c.h.b16 %v2756
    %v3140 = vunpack.c.l.b16 %v2757
    %v3141 = vunpack.c.h.b16 %v2757
    %v3142 = vunpack.c.l.b16 %v2758
    %v3143 = vunpack.c.h.b16 %v2758
    %v3144 = vunpack.c.l.b16 %v2759
    %v3145 = vunpack.c.h.b16 %v2759
    %v3146 = vunpack.c.l.b16 %v2760
    %v3147 = vunpack.c.h.b16 %v2760
    %v3148 = vunpack.c.l.b16 %v2761
    %v3149 = vunpack.c.h.b16 %v2761
    %v3150 = vunpack.c.l.b16 %v2762
    %v3151 = vunpack.c.h.b16 %v2762
    %v3152 = vunpack.c.l.b16 %v2763
    %v3153 = vunpack.c.h.b16 %v2763
    %v3154 = vunpack.c.l.b16 %v2764
    %v3155 = vunpack.c.h.b16 %v2764
    %v3156 = vunpack.c.l.b16 %v2765
    %v3157 = vunpack.c.h.b16 %v2765
    %v3158 = vunpack.c.l.b16 %v2766
    %v3159 = vunpack.c.h.b16 %v2766
    %v3160 = vunpack.c.l.b16 %v2767
    %v3161 = vunpack.c.h.b16 %v2767
    %v3162 = vunpack.c.l.b16 %v2768
    %v3163 = vunpack.c.h.b16 %v2768
    %v3164 = vunpack.c.l.b16 %v2769
    %v3165 = vunpack.c.h.b16 %v2769
    %v3166 = vunpack.c.l.b16 %v2770
    %v3167 = vunpack.c.h.b16 %v2770
    %v3168 = vunpack.c.l.b16 %v2771
    %v3169 = vunpack.c.h.b16 %v2771
    %v3170 = vunpack.c.l.b16 %v2772
    %v3171 = vunpack.c.h.b16 %v2772
    %v3172 = vunpack.c.l.b16 %v2773
    %v3173 = vunpack.c.h.b16 %v2773
    %v3174 = vunpack.c.l.b16 %v2774
    %v3175 = vunpack.c.h.b16 %v2774
    %v3176 = vunpack.c.l.b16 %v2775
    %v3177 = vunpack.c.h.b16 %v2775
    %v3178 = vunpack.c.l.b16 %v2776
    %v3179 = vunpack.c.h.b16 %v2776
    %v3180 = vunpack.c.l.b16 %v2777
    %v3181 = vunpack.c.h.b16 %v2777
    %v3182 = vunpack.c.l.b16 %v2778
    %v3183 = vunpack.c.h.b16 %v2778
    %v3184 = vunpack.c.l.b16 %v2779
    %v3185 = vunpack.c.h.b16 %v2779
    %v3186 = vunpack.c.l.b16 %v2780
    %v3187 = vunpack.c.h.b16 %v2780
    %v3188 = vpack.c.b16 %v2936, %v2932
    %v3189 = vpack.c.b16 %v2937, %v2933
    %v3190 = vpack.c.b16 %v2938, %v2934
    %v3191 = vpack.c.b16 %v2939, %v2935
    %v3192 = vpack.c.b16 %v2944, %v2940
    %v3193 = vpack.c.b16 %v2945, %v2941
    %v3194 = vpack.c.b16 %v2946, %v2942
    %v3195 = vpack.c.b16 %v2947, %v2943
    %v3196 = vpack.c.b16 %v2952, %v2948
    %v3197 = vpack.c.b16 %v2953, %v2949
    %v3198 = vpack.c.b16 %v2954, %v2950
    %v3199 = vpack.c.b16 %v2955, %v2951
    %v3200 = vpack.c.b16 %v2960, %v2956
    %v3201 = vpack.c.b16 %v2961, %v2957
    %v3202 = vpack.c.b16 %v2962, %v2958
    %v3203 = vpack.c.b16 %v2963, %v2959
    %v3204 = vpack.c.b16 %v2968, %v2964
    %v3205 = vpack.c.b16 %v2969, %v2965
    %v3206 = vpack.c.b16 %v2970, %v2966
    %v3207 = vpack.c.b16 %v2971, %v2967
    %v3208 = vpack.c.b16 %v2976, %v2972
    %v3209 = vpack.c.b16 %v2977, %v2973
    %v3210 = vpack.c.b16 %v2978, %v2974
    %v3211 = vpack.c.b16 %v2979, %v2975
    %v3212 = vpack.c.b16 %v2984, %v2980
    %v3213 = vpack.c.b16 %v2985, %v2981
    %v3214 = vpack.c.b16 %v2986, %v2982
    %v3215 = vpack.c.b16 %v2987, %v2983
    %v3216 = vpack.c.b16 %v2992, %v2988
    %v3217 = vpack.c.b16 %v2993, %v2989
    %v3218 = vpack.c.b16 %v2994, %v2990
    %v3219 = vpack.c.b16 %v2995, %v2991
    %v3220 = vpack.c.b16 %v3000, %v2996
    %v3221 = vpack.c.b16 %v3001, %v2997
    %v3222 = vpack.c.b16 %v3002, %v2998
    %v3223 = vpack.c.b16 %v3003, %v2999
    %v3224 = vpack.c.b16 %v3008, %v3004
    %v3225 = vpack.c.b16 %v3009, %v3005
    %v3226 = vpack.c.b16 %v3010, %v3006
    %v3227 = vpack.c.b16 %v3011, %v3007
    %v3228 = vpack.c.b16 %v3016, %v3012
    %v3229 = vpack.c.b16 %v3017, %v3013
    %v3230 = vpack.c.b16 %v3018, %v3014
    %v3231 = vpack.c.b16 %v3019, %v3015
    %v3232 = vpack.c.b16 %v3024, %v3020
    %v3233 = vpack.c.b16 %v3025, %v3021
    %v3234 = vpack.c.b16 %v3026, %v3022
    %v3235 = vpack.c.b16 %v3027, %v3023
    %v3236 = vpack.c.b16 %v3032, %v3028
    %v3237 = vpack.c.b16 %v3033, %v3029
    %v3238 = vpack.c.b16 %v3034, %v3030
    %v3239 = vpack.c.b16 %v3035, %v3031
    %v3240 = vpack.c.b16 %v3040, %v3036
    %v3241 = vpack.c.b16 %v3041, %v3037
    %v3242 = vpack.c.b16 %v3042, %v3038
    %v3243 = vpack.c.b16 %v3043, %v3039
    %v3244 = vpack.c.b16 %v3048, %v3044
    %v3245 = vpack.c.b16 %v3049, %v3045
    %v3246 = vpack.c.b16 %v3050, %v3046
    %v3247 = vpack.c.b16 %v3051, %v3047
    %v3248 = vpack.c.b16 %v3056, %v3052
    %v3249 = vpack.c.b16 %v3057, %v3053
    %v3250 = vpack.c.b16 %v3058, %v3054
    %v3251 = vpack.c.b16 %v3059, %v3055
    %v3252 = vpack.c.b16 %v3064, %v3060
    %v3253 = vpack.c.b16 %v3065, %v3061
    %v3254 = vpack.c.b16 %v3066, %v3062
    %v3255 = vpack.c.b16 %v3067, %v3063
    %v3256 = vpack.c.b16 %v3072, %v3068
    %v3257 = vpack.c.b16 %v3073, %v3069
    %v3258 = vpack.c.b16 %v3074, %v3070
    %v3259 = vpack.c.b16 %v3075, %v3071
    %v3260 = vpack.c.b16 %v3080, %v3076
    %v3261 = vpack.c.b16 %v3081, %v3077
    %v3262 = vpack.c.b16 %v3082, %v3078
    %v3263 = vpack.c.b16 %v3083, %v3079
    %v3264 = vpack.c.b16 %v3088, %v3084
    %v3265 = vpack.c.b16 %v3089, %v3085
    %v3266 = vpack.c.b16 %v3090, %v3086
    %v3267 = vpack.c.b16 %v3091, %v3087
    %v3268 = vpack.c.b16 %v3096, %v3092
    %v3269 = vpack.c.b16 %v3097, %v3093
    %v3270 = vpack.c.b16 %v3098, %v3094
    %v3271 = vpack.c.b16 %v3099, %v3095
    %v3272 = vpack.c.b16 %v3104, %v3100
    %v3273 = vpack.c.b16 %v3105, %v3101
    %v3274 = vpack.c.b16 %v3106, %v3102
    %v3275 = vpack.c.b16 %v3107, %v3103
    %v3276 = vpack.c.b16 %v3112, %v3108
    %v3277 = vpack.c.b16 %v3113, %v3109
    %v3278 = vpack.c.b16 %v3114, %v3110
    %v3279 = vpack.c.b16 %v3115, %v3111
    %v3280 = vpack.c.b16 %v3120, %v3116
    %v3281 = vpack.c.b16 %v3121, %v3117
    %v3282 = vpack.c.b16 %v3122, %v3118
    %v3283 = vpack.c.b16 %v3123, %v3119
    %v3284 = vpack.c.b16 %v3128, %v3124
    %v3285 = vpack.c.b16 %v3129, %v3125
    %v3286 = vpack.c.b16 %v3130, %v3126
    %v3287 = vpack.c.b16 %v3131, %v3127
    %v3288 = vpack.c.b16 %v3136, %v3132
    %v3289 = vpack.c.b16 %v3137, %v3133
    %v3290 = vpack.c.b16 %v3138, %v3134
    %v3291 = vpack.c.b16 %v3139, %v3135
    %v3292 = vpack.c.b16 %v3144, %v3140
    %v3293 = vpack.c.b16 %v3145, %v3141
    %v3294 = vpack.c.b16 %v3146, %v3142
    %v3295 = vpack.c.b16 %v3147, %v3143
    %v3296 = vpack.c.b16 %v3152, %v3148
    %v3297 = vpack.c.b16 %v3153, %v3149
    %v3298 = vpack.c.b16 %v3154, %v3150
    %v3299 = vpack.c.b16 %v3155, %v3151
    %v3300 = vpack.c.b16 %v3160, %v3156
    %v3301 = vpack.c.b16 %v3161, %v3157
    %v3302 = vpack.c.b16 %v3162, %v3158
    %v3303 = vpack.c.b16 %v3163, %v3159
    %v3304 = vpack.c.b16 %v3168, %v3164
    %v3305 = vpack.c.b16 %v3169, %v3165
    %v3306 = vpack.c.b16 %v3170, %v3166
    %v3307 = vpack.c.b16 %v3171, %v3167
    %v3308 = vpack.c.b16 %v3176, %v3172
    %v3309 = vpack.c.b16 %v3177, %v3173
    %v3310 = vpack.c.b16 %v3178, %v3174
    %v3311 = vpack.c.b16 %v3179, %v3175
    %v3312 = vpack.c.b16 %v3184, %v3180
    %v3313 = vpack.c.b16 %v3185, %v3181
    %v3314 = vpack.c.b16 %v3186, %v3182
    %v3315 = vpack.c.b16 %v3187, %v3183
    %3444 = vmatprep.subr.bf16.mxu0 %v3189
    %3445 = vmatpush1.bf16.msra.mxu0 %v3188
    %3446 = vmatprep.subr.bf16.mxu0 %v3193
    %3447 = vmatpush1.bf16.msra.mxu0 %v3192
    %3448 = vmatprep.subr.bf16.mxu0 %v3197
    %3449 = vmatpush1.bf16.msra.mxu0 %v3196
    %3450 = vmatprep.subr.bf16.mxu0 %v3201
    %3451 = vmatpush1.bf16.msra.mxu0 %v3200
    %3452 = vmatprep.subr.bf16.mxu0 %v3205
    %3453 = vmatpush1.bf16.msra.mxu0 %v3204
    %3454 = vmatprep.subr.bf16.mxu0 %v3209
    %3455 = vmatpush1.bf16.msra.mxu0 %v3208
    %3456 = vmatprep.subr.bf16.mxu0 %v3213
    %3457 = vmatpush1.bf16.msra.mxu0 %v3212
    %3458 = vmatprep.subr.bf16.mxu0 %v3217
    %3459 = vmatpush1.bf16.msra.mxu0 %v3216
    %3460 = vmatprep.subr.bf16.mxu0 %v3221
    %3461 = vmatpush1.bf16.msra.mxu0 %v3220
    %3462 = vmatprep.subr.bf16.mxu0 %v3225
    %3463 = vmatpush1.bf16.msra.mxu0 %v3224
    %3464 = vmatprep.subr.bf16.mxu0 %v3229
    %3465 = vmatpush1.bf16.msra.mxu0 %v3228
    %3466 = vmatprep.subr.bf16.mxu0 %v3233
    %3467 = vmatpush1.bf16.msra.mxu0 %v3232
    %3468 = vmatprep.subr.bf16.mxu0 %v3237
    %3469 = vmatpush1.bf16.msra.mxu0 %v3236
    %3470 = vmatprep.subr.bf16.mxu0 %v3241
    %3471 = vmatpush1.bf16.msra.mxu0 %v3240
    %3472 = vmatprep.subr.bf16.mxu0 %v3245
    %3473 = vmatpush1.bf16.msra.mxu0 %v3244
    %3474 = vmatprep.subr.bf16.mxu0 %v3249
    %3475 = vmatpush1.bf16.msra.mxu0 %v3248
    %3476 = vmatprep.mubr.bf16.mxu0 %v2650
    %3477 = vmatmul.mubr.bf16.gmra.mrb[0].mxu0 %v2649
    %v3478 = vpop.f32.mrb[0].mxu0
    %v3479 = vadd.f32 %v2787, %v3478
    %v3480 = vpop.f32.mrb[0].mxu0
    %v3481 = vadd.f32 %v2791, %v3480
    %v3482 = vpop.f32.mrb[0].mxu0
    %v3483 = vpop.f32.mrb[0].mxu0
    %3484 = vdwg.mxu0
    %3485 = vmatprep.subr.bf16.mxu0 %v3253
    %3486 = vmatpush1.bf16.msra.mxu0 %v3252
    %3487 = vmatprep.subr.bf16.mxu0 %v3257
    %3488 = vmatpush1.bf16.msra.mxu0 %v3256
    %3489 = vmatprep.subr.bf16.mxu0 %v3261
    %3490 = vmatpush1.bf16.msra.mxu0 %v3260
    %3491 = vmatprep.subr.bf16.mxu0 %v3265
    %3492 = vmatpush1.bf16.msra.mxu0 %v3264
    %3493 = vmatprep.subr.bf16.mxu0 %v3269
    %3494 = vmatpush1.bf16.msra.mxu0 %v3268
    %3495 = vmatprep.subr.bf16.mxu0 %v3273
    %3496 = vmatpush1.bf16.msra.mxu0 %v3272
    %3497 = vmatprep.subr.bf16.mxu0 %v3277
    %3498 = vmatpush1.bf16.msra.mxu0 %v3276
    %3499 = vmatprep.subr.bf16.mxu0 %v3281
    %3500 = vmatpush1.bf16.msra.mxu0 %v3280
    %3501 = vmatprep.subr.bf16.mxu0 %v3285
    %3502 = vmatpush1.bf16.msra.mxu0 %v3284
    %3503 = vmatprep.subr.bf16.mxu0 %v3289
    %3504 = vmatpush1.bf16.msra.mxu0 %v3288
    %3505 = vmatprep.subr.bf16.mxu0 %v3293
    %3506 = vmatpush1.bf16.msra.mxu0 %v3292
    %3507 = vmatprep.subr.bf16.mxu0 %v3297
    %3508 = vmatpush1.bf16.msra.mxu0 %v3296
    %3509 = vmatprep.subr.bf16.mxu0 %v3301
    %3510 = vmatpush1.bf16.msra.mxu0 %v3300
    %3511 = vmatprep.subr.bf16.mxu0 %v3305
    %3512 = vmatpush1.bf16.msra.mxu0 %v3304
    %3513 = vmatprep.subr.bf16.mxu0 %v3309
    %3514 = vmatpush1.bf16.msra.mxu0 %v3308
    %3515 = vmatprep.subr.bf16.mxu0 %v3313
    %3516 = vmatpush1.bf16.msra.mxu0 %v3312
    %3517 = vmatprep.mubr.bf16.mxu0 %v2652
    %3518 = vmatmul.mubr.bf16.gmra.mrb[0].mxu0 %v2651
    %v3519 = vpop.f32.mrb[0].mxu0
    %v3520 = vadd.f32 %v3479, %v3519
    %v3521 = vpop.f32.mrb[0].mxu0
    %v3522 = vadd.f32 %v3481, %v3521
    %v3523 = vpop.f32.mrb[0].mxu0
    %v3524 = vpop.f32.mrb[0].mxu0
    %3525 = vdwg.mxu0
    %3526 = vmatprep.subr.bf16.mxu0 %v3191
    %3527 = vmatpush1.bf16.msra.mxu0 %v3190
    %3528 = vmatprep.subr.bf16.mxu0 %v3195
    %3529 = vmatpush1.bf16.msra.mxu0 %v3194
    %3530 = vmatprep.subr.bf16.mxu0 %v3199
    %3531 = vmatpush1.bf16.msra.mxu0 %v3198
    %3532 = vmatprep.subr.bf16.mxu0 %v3203
    %3533 = vmatpush1.bf16.msra.mxu0 %v3202
    %3534 = vmatprep.subr.bf16.mxu0 %v3207
    %3535 = vmatpush1.bf16.msra.mxu0 %v3206
    %3536 = vmatprep.subr.bf16.mxu0 %v3211
    %3537 = vmatpush1.bf16.msra.mxu0 %v3210
    %3538 = vmatprep.subr.bf16.mxu0 %v3215
    %3539 = vmatpush1.bf16.msra.mxu0 %v3214
    %3540 = vmatprep.subr.bf16.mxu0 %v3219
    %3541 = vmatpush1.bf16.msra.mxu0 %v3218
    %3542 = vmatprep.subr.bf16.mxu0 %v3223
    %3543 = vmatpush1.bf16.msra.mxu0 %v3222
    %3544 = vmatprep.subr.bf16.mxu0 %v3227
    %3545 = vmatpush1.bf16.msra.mxu0 %v3226
    %3546 = vmatprep.subr.bf16.mxu0 %v3231
    %3547 = vmatpush1.bf16.msra.mxu0 %v3230
    %3548 = vmatprep.subr.bf16.mxu0 %v3235
    %3549 = vmatpush1.bf16.msra.mxu0 %v3234
    %3550 = vmatprep.subr.bf16.mxu0 %v3239
    %3551 = vmatpush1.bf16.msra.mxu0 %v3238
    %3552 = vmatprep.subr.bf16.mxu0 %v3243
    %3553 = vmatpush1.bf16.msra.mxu0 %v3242
    %3554 = vmatprep.subr.bf16.mxu0 %v3247
    %3555 = vmatpush1.bf16.msra.mxu0 %v3246
    %3556 = vmatprep.subr.bf16.mxu0 %v3251
    %3557 = vmatpush1.bf16.msra.mxu0 %v3250
    %3558 = vmatprep.mubr.bf16.mxu0 %v2650
    %3559 = vmatmul.mubr.bf16.gmra.mrb[0].mxu0 %v2649
    %v3560 = vpop.f32.mrb[0].mxu0
    %v3561 = vadd.f32 %v2795, %v3560
    %v3562 = vpop.f32.mrb[0].mxu0
    %v3563 = vadd.f32 %v2799, %v3562
    %v3564 = vpop.f32.mrb[0].mxu0
    %v3565 = vpop.f32.mrb[0].mxu0
    %3566 = vdwg.mxu0
    %3567 = vmatprep.subr.bf16.mxu0 %v3255
    %3568 = vmatpush1.bf16.msra.mxu0 %v3254
    %3569 = vmatprep.subr.bf16.mxu0 %v3259
    %3570 = vmatpush1.bf16.msra.mxu0 %v3258
    %3571 = vmatprep.subr.bf16.mxu0 %v3263
    %3572 = vmatpush1.bf16.msra.mxu0 %v3262
    %3573 = vmatprep.subr.bf16.mxu0 %v3267
    %3574 = vmatpush1.bf16.msra.mxu0 %v3266
    %3575 = vmatprep.subr.bf16.mxu0 %v3271
    %3576 = vmatpush1.bf16.msra.mxu0 %v3270
    %3577 = vmatprep.subr.bf16.mxu0 %v3275
    %3578 = vmatpush1.bf16.msra.mxu0 %v3274
    %3579 = vmatprep.subr.bf16.mxu0 %v3279
    %3580 = vmatpush1.bf16.msra.mxu0 %v3278
    %3581 = vmatprep.subr.bf16.mxu0 %v3283
    %3582 = vmatpush1.bf16.msra.mxu0 %v3282
    %3583 = vmatprep.subr.bf16.mxu0 %v3287
    %3584 = vmatpush1.bf16.msra.mxu0 %v3286
    %3585 = vmatprep.subr.bf16.mxu0 %v3291
    %3586 = vmatpush1.bf16.msra.mxu0 %v3290
    %3587 = vmatprep.subr.bf16.mxu0 %v3295
    %3588 = vmatpush1.bf16.msra.mxu0 %v3294
    %3589 = vmatprep.subr.bf16.mxu0 %v3299
    %3590 = vmatpush1.bf16.msra.mxu0 %v3298
    %3591 = vmatprep.subr.bf16.mxu0 %v3303
    %3592 = vmatpush1.bf16.msra.mxu0 %v3302
    %3593 = vmatprep.subr.bf16.mxu0 %v3307
    %3594 = vmatpush1.bf16.msra.mxu0 %v3306
    %3595 = vmatprep.subr.bf16.mxu0 %v3311
    %3596 = vmatpush1.bf16.msra.mxu0 %v3310
    %3597 = vmatprep.subr.bf16.mxu0 %v3315
    %3598 = vmatpush1.bf16.msra.mxu0 %v3314
    %3599 = vmatprep.mubr.bf16.mxu0 %v2652
    %3600 = vmatmul.mubr.bf16.gmra.mrb[0].mxu0 %v2651
    %v3601 = vpop.f32.mrb[0].mxu0
    %v3602 = vadd.f32 %v3561, %v3601
    %v3603 = vpop.f32.mrb[0].mxu0
    %v3604 = vadd.f32 %v3563, %v3603
    %v3605 = vpop.f32.mrb[0].mxu0
    %v3606 = vpop.f32.mrb[0].mxu0
    %3607 = vdwg.mxu0
    %v3608 = vmax.f32 %v3520, 0.0
    %v3609 = vmax.f32 %v3522, 0.0
    %v3610 = vmax.f32 %v3602, 0.0
    %v3611 = vmax.f32 %v3604, 0.0
    %v3612 = vand.u32 2147483647, %v3520
    %v3613 = vand.u32 2147483647, %v3522
    %v3614 = vand.u32 2147483647, %v3602
    %v3615 = vand.u32 2147483647, %v3604
    %v3616 = vsub.f32 0.0, %v3612
    %v3617 = vsub.f32 0.0, %v3613
    %v3618 = vsub.f32 0.0, %v3614
    %v3619 = vsub.f32 0.0, %v3615
    %v3620 = vmul.f32 %v3616, 1.442695
    %v3621 = vpow.pop %v3620
    %v3622 = vmul.f32 %v3617, 1.442695
    %v3623 = vpow.pop %v3622
    %v3624 = vmul.f32 %v3618, 1.442695
    %v3625 = vpow.pop %v3624
    %v3626 = vmul.f32 %v3619, 1.442695
    %v3627 = vpow.pop %v3626
    %v3628 = vadd.f32 %v3621, 1.0
    %v3629 = vlog2.pop %v3628
    %v3630 = vmul.f32 %v3629, 0.6931472
    %v3631 = vmul.f32 -0.5, %v3621
    %v3632 = vadd.f32 %v3631, 1.0
    %v3633 = vmul.f32 %v3632, %v3621
    %v3634 = vand.u32 2147483647, %v3621
    %vm3635 = vcmp.lt.f32.partialorder %v3634, 0.0004427343
    %v3636 = vsel %vm3635, %v3633, %v3630
    %v3637 = vadd.f32 %v3623, 1.0
    %v3638 = vlog2.pop %v3637
    %v3639 = vmul.f32 %v3638, 0.6931472
    %v3640 = vmul.f32 -0.5, %v3623
    %v3641 = vadd.f32 %v3640, 1.0
    %v3642 = vmul.f32 %v3641, %v3623
    %v3643 = vand.u32 2147483647, %v3623
    %vm3644 = vcmp.lt.f32.partialorder %v3643, 0.0004427343
    %v3645 = vsel %vm3644, %v3642, %v3639
    %v3646 = vadd.f32 %v3625, 1.0
    %v3647 = vlog2.pop %v3646
    %v3648 = vmul.f32 %v3647, 0.6931472
    %v3649 = vmul.f32 -0.5, %v3625
    %v3650 = vadd.f32 %v3649, 1.0
    %v3651 = vmul.f32 %v3650, %v3625
    %v3652 = vand.u32 2147483647, %v3625
    %vm3653 = vcmp.lt.f32.partialorder %v3652, 0.0004427343
    %v3654 = vsel %vm3653, %v3651, %v3648
    %v3655 = vadd.f32 %v3627, 1.0
    %v3656 = vlog2.pop %v3655
    %v3657 = vmul.f32 %v3656, 0.6931472
    %v3658 = vmul.f32 -0.5, %v3627
    %v3659 = vadd.f32 %v3658, 1.0
    %v3660 = vmul.f32 %v3659, %v3627
    %v3661 = vand.u32 2147483647, %v3627
    %vm3662 = vcmp.lt.f32.partialorder %v3661, 0.0004427343
    %v3663 = vsel %vm3662, %v3660, %v3657
    %v3664 = vadd.f32 %v3608, %v3636
    %v3665 = vadd.f32 %v3609, %v3645
    %v3666 = vadd.f32 %v3610, %v3654
    %v3667 = vadd.f32 %v3611, %v3663
    %v3668 = vpack.c.bf16 %v3664, %v3664
    %v3669 = vpack.c.bf16 %v3665, %v3665
    %v3670 = vpack.c.bf16 %v3666, %v3666
    %v3671 = vpack.c.bf16 %v3667, %v3667
    %v3672 = vld [vmem:[#allocation10] sm:$0xff]
    %v3673 = vld [vmem:[#allocation10 + $0x8] sm:$0xff]
    %v3674 = vld [vmem:[#allocation10 + $0x10] sm:$0xff]
    %v3675 = vld [vmem:[#allocation10 + $0x18] sm:$0xff]
    %v3676 = vld [vmem:[#allocation10 + $0x20] sm:$0xff]
    %v3677 = vld [vmem:[#allocation10 + $0x28] sm:$0xff]
    %v3678 = vld [vmem:[#allocation10 + $0x30] sm:$0xff]
    %v3679 = vld [vmem:[#allocation10 + $0x38] sm:$0xff]
    %v3680 = vld [vmem:[#allocation10 + $0x40] sm:$0xff]
    %v3681 = vld [vmem:[#allocation10 + $0x48] sm:$0xff]
    %v3682 = vld [vmem:[#allocation10 + $0x50] sm:$0xff]
    %v3683 = vld [vmem:[#allocation10 + $0x58] sm:$0xff]
    %v3684 = vld [vmem:[#allocation10 + $0x60] sm:$0xff]
    %v3685 = vld [vmem:[#allocation10 + $0x68] sm:$0xff]
    %v3686 = vld [vmem:[#allocation10 + $0x70] sm:$0xff]
    %v3687 = vld [vmem:[#allocation10 + $0x78] sm:$0xff]
    %v3688 = vld [vmem:[#allocation10 + $0x80] sm:$0xff]
    %v3689 = vld [vmem:[#allocation10 + $0x88] sm:$0xff]
    %v3690 = vld [vmem:[#allocation10 + $0x90] sm:$0xff]
    %v3691 = vld [vmem:[#allocation10 + $0x98] sm:$0xff]
    %v3692 = vld [vmem:[#allocation10 + $0xa0] sm:$0xff]
    %v3693 = vld [vmem:[#allocation10 + $0xa8] sm:$0xff]
    %v3694 = vld [vmem:[#allocation10 + $0xb0] sm:$0xff]
    %v3695 = vld [vmem:[#allocation10 + $0xb8] sm:$0xff]
    %v3696 = vld [vmem:[#allocation10 + $0xc0] sm:$0xff]
    %v3697 = vld [vmem:[#allocation10 + $0xc8] sm:$0xff]
    %v3698 = vld [vmem:[#allocation10 + $0xd0] sm:$0xff]
    %v3699 = vld [vmem:[#allocation10 + $0xd8] sm:$0xff]
    %v3700 = vld [vmem:[#allocation10 + $0xe0] sm:$0xff]
    %v3701 = vld [vmem:[#allocation10 + $0xe8] sm:$0xff]
    %v3702 = vld [vmem:[#allocation10 + $0xf0] sm:$0xff]
    %v3703 = vld [vmem:[#allocation10 + $0xf8] sm:$0xff]
    %v3704 = vld [vmem:[#allocation10 + $0x100] sm:$0xff]
    %v3705 = vld [vmem:[#allocation10 + $0x108] sm:$0xff]
    %v3706 = vld [vmem:[#allocation10 + $0x110] sm:$0xff]
    %v3707 = vld [vmem:[#allocation10 + $0x118] sm:$0xff]
    %v3708 = vld [vmem:[#allocation10 + $0x120] sm:$0xff]
    %v3709 = vld [vmem:[#allocation10 + $0x128] sm:$0xff]
    %v3710 = vld [vmem:[#allocation10 + $0x130] sm:$0xff]
    %v3711 = vld [vmem:[#allocation10 + $0x138] sm:$0xff]
    %v3712 = vld [vmem:[#allocation10 + $0x140] sm:$0xff]
    %v3713 = vld [vmem:[#allocation10 + $0x148] sm:$0xff]
    %v3714 = vld [vmem:[#allocation10 + $0x150] sm:$0xff]
    %v3715 = vld [vmem:[#allocation10 + $0x158] sm:$0xff]
    %v3716 = vld [vmem:[#allocation10 + $0x160] sm:$0xff]
    %v3717 = vld [vmem:[#allocation10 + $0x168] sm:$0xff]
    %v3718 = vld [vmem:[#allocation10 + $0x170] sm:$0xff]
    %v3719 = vld [vmem:[#allocation10 + $0x178] sm:$0xff]
    %v3720 = vld [vmem:[#allocation10 + $0x180] sm:$0xff]
    %v3721 = vld [vmem:[#allocation10 + $0x188] sm:$0xff]
    %v3722 = vld [vmem:[#allocation10 + $0x190] sm:$0xff]
    %v3723 = vld [vmem:[#allocation10 + $0x198] sm:$0xff]
    %v3724 = vld [vmem:[#allocation10 + $0x1a0] sm:$0xff]
    %v3725 = vld [vmem:[#allocation10 + $0x1a8] sm:$0xff]
    %v3726 = vld [vmem:[#allocation10 + $0x1b0] sm:$0xff]
    %v3727 = vld [vmem:[#allocation10 + $0x1b8] sm:$0xff]
    %v3728 = vld [vmem:[#allocation10 + $0x1c0] sm:$0xff]
    %v3729 = vld [vmem:[#allocation10 + $0x1c8] sm:$0xff]
    %v3730 = vld [vmem:[#allocation10 + $0x1d0] sm:$0xff]
    %v3731 = vld [vmem:[#allocation10 + $0x1d8] sm:$0xff]
    %v3732 = vld [vmem:[#allocation10 + $0x1e0] sm:$0xff]
    %v3733 = vld [vmem:[#allocation10 + $0x1e8] sm:$0xff]
    %v3734 = vld [vmem:[#allocation10 + $0x1f0] sm:$0xff]
    %v3735 = vld [vmem:[#allocation10 + $0x1f8] sm:$0xff]
    %s3736 = scalar_lea.vmem [#allocation14], 3
    %v3737 = vld [vmem:[%s3736] ss:$8 sm:$0x3]
    %v3739 = vlaneseq
    %v3740 = vshrl.u32 %v3739, 7
    %v3741 = vsub.s32 0, %v3740
    %v3742 = vrot.slane %v3737, %v3741
    %v3743 = vlaneseq
    %v3744 = vshrl.u32 %v3743, 7
    %v3745 = vsub.s32 1, %v3744
    %v3746 = vrot.slane %v3737, %v3745
    %v3813 = vunpack.c.l.b16 %v3672
    %v3814 = vunpack.c.h.b16 %v3672
    %v3815 = vunpack.c.l.b16 %v3673
    %v3816 = vunpack.c.h.b16 %v3673
    %v3817 = vunpack.c.l.b16 %v3674
    %v3818 = vunpack.c.h.b16 %v3674
    %v3819 = vunpack.c.l.b16 %v3675
    %v3820 = vunpack.c.h.b16 %v3675
    %v3821 = vunpack.c.l.b16 %v3676
    %v3822 = vunpack.c.h.b16 %v3676
    %v3823 = vunpack.c.l.b16 %v3677
    %v3824 = vunpack.c.h.b16 %v3677
    %v3825 = vunpack.c.l.b16 %v3678
    %v3826 = vunpack.c.h.b16 %v3678
    %v3827 = vunpack.c.l.b16 %v3679
    %v3828 = vunpack.c.h.b16 %v3679
    %v3829 = vunpack.c.l.b16 %v3680
    %v3830 = vunpack.c.h.b16 %v3680
    %v3831 = vunpack.c.l.b16 %v3681
    %v3832 = vunpack.c.h.b16 %v3681
    %v3833 = vunpack.c.l.b16 %v3682
    %v3834 = vunpack.c.h.b16 %v3682
    %v3835 = vunpack.c.l.b16 %v3683
    %v3836 = vunpack.c.h.b16 %v3683
    %v3837 = vunpack.c.l.b16 %v3684
    %v3838 = vunpack.c.h.b16 %v3684
    %v3839 = vunpack.c.l.b16 %v3685
    %v3840 = vunpack.c.h.b16 %v3685
    %v3841 = vunpack.c.l.b16 %v3686
    %v3842 = vunpack.c.h.b16 %v3686
    %v3843 = vunpack.c.l.b16 %v3687
    %v3844 = vunpack.c.h.b16 %v3687
    %v3845 = vunpack.c.l.b16 %v3688
    %v3846 = vunpack.c.h.b16 %v3688
    %v3847 = vunpack.c.l.b16 %v3689
    %v3848 = vunpack.c.h.b16 %v3689
    %v3849 = vunpack.c.l.b16 %v3690
    %v3850 = vunpack.c.h.b16 %v3690
    %v3851 = vunpack.c.l.b16 %v3691
    %v3852 = vunpack.c.h.b16 %v3691
    %v3853 = vunpack.c.l.b16 %v3692
    %v3854 = vunpack.c.h.b16 %v3692
    %v3855 = vunpack.c.l.b16 %v3693
    %v3856 = vunpack.c.h.b16 %v3693
    %v3857 = vunpack.c.l.b16 %v3694
    %v3858 = vunpack.c.h.b16 %v3694
    %v3859 = vunpack.c.l.b16 %v3695
    %v3860 = vunpack.c.h.b16 %v3695
    %v3861 = vunpack.c.l.b16 %v3696
    %v3862 = vunpack.c.h.b16 %v3696
    %v3863 = vunpack.c.l.b16 %v3697
    %v3864 = vunpack.c.h.b16 %v3697
    %v3865 = vunpack.c.l.b16 %v3698
    %v3866 = vunpack.c.h.b16 %v3698
    %v3867 = vunpack.c.l.b16 %v3699
    %v3868 = vunpack.c.h.b16 %v3699
    %v3869 = vunpack.c.l.b16 %v3700
    %v3870 = vunpack.c.h.b16 %v3700
    %v3871 = vunpack.c.l.b16 %v3701
    %v3872 = vunpack.c.h.b16 %v3701
    %v3873 = vunpack.c.l.b16 %v3702
    %v3874 = vunpack.c.h.b16 %v3702
    %v3875 = vunpack.c.l.b16 %v3703
    %v3876 = vunpack.c.h.b16 %v3703
    %v3877 = vunpack.c.l.b16 %v3704
    %v3878 = vunpack.c.h.b16 %v3704
    %v3879 = vunpack.c.l.b16 %v3705
    %v3880 = vunpack.c.h.b16 %v3705
    %v3881 = vunpack.c.l.b16 %v3706
    %v3882 = vunpack.c.h.b16 %v3706
    %v3883 = vunpack.c.l.b16 %v3707
    %v3884 = vunpack.c.h.b16 %v3707
    %v3885 = vunpack.c.l.b16 %v3708
    %v3886 = vunpack.c.h.b16 %v3708
    %v3887 = vunpack.c.l.b16 %v3709
    %v3888 = vunpack.c.h.b16 %v3709
    %v3889 = vunpack.c.l.b16 %v3710
    %v3890 = vunpack.c.h.b16 %v3710
    %v3891 = vunpack.c.l.b16 %v3711
    %v3892 = vunpack.c.h.b16 %v3711
    %v3893 = vunpack.c.l.b16 %v3712
    %v3894 = vunpack.c.h.b16 %v3712
    %v3895 = vunpack.c.l.b16 %v3713
    %v3896 = vunpack.c.h.b16 %v3713
    %v3897 = vunpack.c.l.b16 %v3714
    %v3898 = vunpack.c.h.b16 %v3714
    %v3899 = vunpack.c.l.b16 %v3715
    %v3900 = vunpack.c.h.b16 %v3715
    %v3901 = vunpack.c.l.b16 %v3716
    %v3902 = vunpack.c.h.b16 %v3716
    %v3903 = vunpack.c.l.b16 %v3717
    %v3904 = vunpack.c.h.b16 %v3717
    %v3905 = vunpack.c.l.b16 %v3718
    %v3906 = vunpack.c.h.b16 %v3718
    %v3907 = vunpack.c.l.b16 %v3719
    %v3908 = vunpack.c.h.b16 %v3719
    %v3909 = vunpack.c.l.b16 %v3720
    %v3910 = vunpack.c.h.b16 %v3720
    %v3911 = vunpack.c.l.b16 %v3721
    %v3912 = vunpack.c.h.b16 %v3721
    %v3913 = vunpack.c.l.b16 %v3722
    %v3914 = vunpack.c.h.b16 %v3722
    %v3915 = vunpack.c.l.b16 %v3723
    %v3916 = vunpack.c.h.b16 %v3723
    %v3917 = vunpack.c.l.b16 %v3724
    %v3918 = vunpack.c.h.b16 %v3724
    %v3919 = vunpack.c.l.b16 %v3725
    %v3920 = vunpack.c.h.b16 %v3725
    %v3921 = vunpack.c.l.b16 %v3726
    %v3922 = vunpack.c.h.b16 %v3726
    %v3923 = vunpack.c.l.b16 %v3727
    %v3924 = vunpack.c.h.b16 %v3727
    %v3925 = vunpack.c.l.b16 %v3728
    %v3926 = vunpack.c.h.b16 %v3728
    %v3927 = vunpack.c.l.b16 %v3729
    %v3928 = vunpack.c.h.b16 %v3729
    %v3929 = vunpack.c.l.b16 %v3730
    %v3930 = vunpack.c.h.b16 %v3730
    %v3931 = vunpack.c.l.b16 %v3731
    %v3932 = vunpack.c.h.b16 %v3731
    %v3933 = vunpack.c.l.b16 %v3732
    %v3934 = vunpack.c.h.b16 %v3732
    %v3935 = vunpack.c.l.b16 %v3733
    %v3936 = vunpack.c.h.b16 %v3733
    %v3937 = vunpack.c.l.b16 %v3734
    %v3938 = vunpack.c.h.b16 %v3734
    %v3939 = vunpack.c.l.b16 %v3735
    %v3940 = vunpack.c.h.b16 %v3735
    %v3941 = vpack.c.b16 %v3815, %v3813
    %v3942 = vpack.c.b16 %v3816, %v3814
    %v3943 = vpack.c.b16 %v3819, %v3817
    %v3944 = vpack.c.b16 %v3820, %v3818
    %v3945 = vpack.c.b16 %v3823, %v3821
    %v3946 = vpack.c.b16 %v3824, %v3822
    %v3947 = vpack.c.b16 %v3827, %v3825
    %v3948 = vpack.c.b16 %v3828, %v3826
    %v3949 = vpack.c.b16 %v3831, %v3829
    %v3950 = vpack.c.b16 %v3832, %v3830
    %v3951 = vpack.c.b16 %v3835, %v3833
    %v3952 = vpack.c.b16 %v3836, %v3834
    %v3953 = vpack.c.b16 %v3839, %v3837
    %v3954 = vpack.c.b16 %v3840, %v3838
    %v3955 = vpack.c.b16 %v3843, %v3841
    %v3956 = vpack.c.b16 %v3844, %v3842
    %v3957 = vpack.c.b16 %v3847, %v3845
    %v3958 = vpack.c.b16 %v3848, %v3846
    %v3959 = vpack.c.b16 %v3851, %v3849
    %v3960 = vpack.c.b16 %v3852, %v3850
    %v3961 = vpack.c.b16 %v3855, %v3853
    %v3962 = vpack.c.b16 %v3856, %v3854
    %v3963 = vpack.c.b16 %v3859, %v3857
    %v3964 = vpack.c.b16 %v3860, %v3858
    %v3965 = vpack.c.b16 %v3863, %v3861
    %v3966 = vpack.c.b16 %v3864, %v3862
    %v3967 = vpack.c.b16 %v3867, %v3865
    %v3968 = vpack.c.b16 %v3868, %v3866
    %v3969 = vpack.c.b16 %v3871, %v3869
    %v3970 = vpack.c.b16 %v3872, %v3870
    %v3971 = vpack.c.b16 %v3875, %v3873
    %v3972 = vpack.c.b16 %v3876, %v3874
    %v3973 = vpack.c.b16 %v3879, %v3877
    %v3974 = vpack.c.b16 %v3880, %v3878
    %v3975 = vpack.c.b16 %v3883, %v3881
    %v3976 = vpack.c.b16 %v3884, %v3882
    %v3977 = vpack.c.b16 %v3887, %v3885
    %v3978 = vpack.c.b16 %v3888, %v3886
    %v3979 = vpack.c.b16 %v3891, %v3889
    %v3980 = vpack.c.b16 %v3892, %v3890
    %v3981 = vpack.c.b16 %v3895, %v3893
    %v3982 = vpack.c.b16 %v3896, %v3894
    %v3983 = vpack.c.b16 %v3899, %v3897
    %v3984 = vpack.c.b16 %v3900, %v3898
    %v3985 = vpack.c.b16 %v3903, %v3901
    %v3986 = vpack.c.b16 %v3904, %v3902
    %v3987 = vpack.c.b16 %v3907, %v3905
    %v3988 = vpack.c.b16 %v3908, %v3906
    %v3989 = vpack.c.b16 %v3911, %v3909
    %v3990 = vpack.c.b16 %v3912, %v3910
    %v3991 = vpack.c.b16 %v3915, %v3913
    %v3992 = vpack.c.b16 %v3916, %v3914
    %v3993 = vpack.c.b16 %v3919, %v3917
    %v3994 = vpack.c.b16 %v3920, %v3918
    %v3995 = vpack.c.b16 %v3923, %v3921
    %v3996 = vpack.c.b16 %v3924, %v3922
    %v3997 = vpack.c.b16 %v3927, %v3925
    %v3998 = vpack.c.b16 %v3928, %v3926
    %v3999 = vpack.c.b16 %v3931, %v3929
    %v4000 = vpack.c.b16 %v3932, %v3930
    %v4001 = vpack.c.b16 %v3935, %v3933
    %v4002 = vpack.c.b16 %v3936, %v3934
    %v4003 = vpack.c.b16 %v3939, %v3937
    %v4004 = vpack.c.b16 %v3940, %v3938
    %4069 = vmatprep.subr.bf16.mxu0 %v3942
    %4070 = vmatpush1.bf16.msra.mxu0 %v3941
    %4071 = vmatprep.subr.bf16.mxu0 %v3944
    %4072 = vmatpush1.bf16.msra.mxu0 %v3943
    %4073 = vmatprep.subr.bf16.mxu0 %v3946
    %4074 = vmatpush1.bf16.msra.mxu0 %v3945
    %4075 = vmatprep.subr.bf16.mxu0 %v3948
    %4076 = vmatpush1.bf16.msra.mxu0 %v3947
    %4077 = vmatprep.subr.bf16.mxu0 %v3950
    %4078 = vmatpush1.bf16.msra.mxu0 %v3949
    %4079 = vmatprep.subr.bf16.mxu0 %v3952
    %4080 = vmatpush1.bf16.msra.mxu0 %v3951
    %4081 = vmatprep.subr.bf16.mxu0 %v3954
    %4082 = vmatpush1.bf16.msra.mxu0 %v3953
    %4083 = vmatprep.subr.bf16.mxu0 %v3956
    %4084 = vmatpush1.bf16.msra.mxu0 %v3955
    %4085 = vmatprep.subr.bf16.mxu0 %v3958
    %4086 = vmatpush1.bf16.msra.mxu0 %v3957
    %4087 = vmatprep.subr.bf16.mxu0 %v3960
    %4088 = vmatpush1.bf16.msra.mxu0 %v3959
    %4089 = vmatprep.subr.bf16.mxu0 %v3962
    %4090 = vmatpush1.bf16.msra.mxu0 %v3961
    %4091 = vmatprep.subr.bf16.mxu0 %v3964
    %4092 = vmatpush1.bf16.msra.mxu0 %v3963
    %4093 = vmatprep.subr.bf16.mxu0 %v3966
    %4094 = vmatpush1.bf16.msra.mxu0 %v3965
    %4095 = vmatprep.subr.bf16.mxu0 %v3968
    %4096 = vmatpush1.bf16.msra.mxu0 %v3967
    %4097 = vmatprep.subr.bf16.mxu0 %v3970
    %4098 = vmatpush1.bf16.msra.mxu0 %v3969
    %4099 = vmatprep.subr.bf16.mxu0 %v3972
    %4100 = vmatpush1.bf16.msra.mxu0 %v3971
    %4101 = vmatprep.mubr.bf16.mxu0 %v3669
    %4102 = vmatmul.mubr.bf16.gmra.mrb[0].mxu0 %v3668
    %v4103 = vpop.f32.mrb[0].mxu0
    %v4104 = vadd.f32 %v3742, %v4103
    %v4105 = vpop.f32.mrb[0].mxu0
    %v4106 = vadd.f32 %v3746, %v4105
    %v4107 = vpop.f32.mrb[0].mxu0
    %v4108 = vpop.f32.mrb[0].mxu0
    %4109 = vdwg.mxu0
    %4110 = vmatprep.subr.bf16.mxu0 %v3974
    %4111 = vmatpush1.bf16.msra.mxu0 %v3973
    %4112 = vmatprep.subr.bf16.mxu0 %v3976
    %4113 = vmatpush1.bf16.msra.mxu0 %v3975
    %4114 = vmatprep.subr.bf16.mxu0 %v3978
    %4115 = vmatpush1.bf16.msra.mxu0 %v3977
    %4116 = vmatprep.subr.bf16.mxu0 %v3980
    %4117 = vmatpush1.bf16.msra.mxu0 %v3979
    %4118 = vmatprep.subr.bf16.mxu0 %v3982
    %4119 = vmatpush1.bf16.msra.mxu0 %v3981
    %4120 = vmatprep.subr.bf16.mxu0 %v3984
    %4121 = vmatpush1.bf16.msra.mxu0 %v3983
    %4122 = vmatprep.subr.bf16.mxu0 %v3986
    %4123 = vmatpush1.bf16.msra.mxu0 %v3985
    %4124 = vmatprep.subr.bf16.mxu0 %v3988
    %4125 = vmatpush1.bf16.msra.mxu0 %v3987
    %4126 = vmatprep.subr.bf16.mxu0 %v3990
    %4127 = vmatpush1.bf16.msra.mxu0 %v3989
    %4128 = vmatprep.subr.bf16.mxu0 %v3992
    %4129 = vmatpush1.bf16.msra.mxu0 %v3991
    %4130 = vmatprep.subr.bf16.mxu0 %v3994
    %4131 = vmatpush1.bf16.msra.mxu0 %v3993
    %4132 = vmatprep.subr.bf16.mxu0 %v3996
    %4133 = vmatpush1.bf16.msra.mxu0 %v3995
    %4134 = vmatprep.subr.bf16.mxu0 %v3998
    %4135 = vmatpush1.bf16.msra.mxu0 %v3997
    %4136 = vmatprep.subr.bf16.mxu0 %v4000
    %4137 = vmatpush1.bf16.msra.mxu0 %v3999
    %4138 = vmatprep.subr.bf16.mxu0 %v4002
    %4139 = vmatpush1.bf16.msra.mxu0 %v4001
    %4140 = vmatprep.subr.bf16.mxu0 %v4004
    %4141 = vmatpush1.bf16.msra.mxu0 %v4003
    %4142 = vmatprep.mubr.bf16.mxu0 %v3671
    %4143 = vmatmul.mubr.bf16.gmra.mrb[0].mxu0 %v3670
    %v4144 = vpop.f32.mrb[0].mxu0
    %v4145 = vadd.f32 %v4104, %v4144
    %v4146 = vpop.f32.mrb[0].mxu0
    %v4147 = vadd.f32 %v4106, %v4146
    %v4148 = vpop.f32.mrb[0].mxu0
    %v4149 = vpop.f32.mrb[0].mxu0
    %4150 = vdwg.mxu0
    %v4151 = vmax.f32 %v4145, 0.0
    %v4152 = vmax.f32 %v4147, 0.0
    %v4153 = vand.u32 2147483647, %v4145
    %v4154 = vand.u32 2147483647, %v4147
    %v4155 = vsub.f32 0.0, %v4153
    %v4156 = vsub.f32 0.0, %v4154
    %v4157 = vmul.f32 %v4155, 1.442695
    %v4158 = vpow.pop %v4157
    %v4159 = vmul.f32 %v4156, 1.442695
    %v4160 = vpow.pop %v4159
    %v4161 = vadd.f32 %v4158, 1.0
    %v4162 = vlog2.pop %v4161
    %v4163 = vmul.f32 %v4162, 0.6931472
    %v4164 = vmul.f32 -0.5, %v4158
    %v4165 = vadd.f32 %v4164, 1.0
    %v4166 = vmul.f32 %v4165, %v4158
    %v4167 = vand.u32 2147483647, %v4158
    %vm4168 = vcmp.lt.f32.partialorder %v4167, 0.0004427343
    %v4169 = vsel %vm4168, %v4166, %v4163
    %v4170 = vadd.f32 %v4160, 1.0
    %v4171 = vlog2.pop %v4170
    %v4172 = vmul.f32 %v4171, 0.6931472
    %v4173 = vmul.f32 -0.5, %v4160
    %v4174 = vadd.f32 %v4173, 1.0
    %v4175 = vmul.f32 %v4174, %v4160
    %v4176 = vand.u32 2147483647, %v4160
    %vm4177 = vcmp.lt.f32.partialorder %v4176, 0.0004427343
    %v4178 = vsel %vm4177, %v4175, %v4172
    %v4179 = vadd.f32 %v4151, %v4169
    %v4180 = vadd.f32 %v4152, %v4178
    %v4181 = vpack.c.bf16 %v4179, %v4179
    %v4182 = vpack.c.bf16 %v4180, %v4180
    %v4183 = vld [vmem:[#allocation11] sm:$0xff]
    %v4184 = vld [vmem:[#allocation11 + $0x8] sm:$0xff]
    %v4185 = vld [vmem:[#allocation11 + $0x10] sm:$0xff]
    %v4186 = vld [vmem:[#allocation11 + $0x18] sm:$0xff]
    %v4187 = vld [vmem:[#allocation11 + $0x20] sm:$0xff]
    %v4188 = vld [vmem:[#allocation11 + $0x28] sm:$0xff]
    %v4189 = vld [vmem:[#allocation11 + $0x30] sm:$0xff]
    %v4190 = vld [vmem:[#allocation11 + $0x38] sm:$0xff]
    %v4191 = vld [vmem:[#allocation11 + $0x40] sm:$0xff]
    %v4192 = vld [vmem:[#allocation11 + $0x48] sm:$0xff]
    %v4193 = vld [vmem:[#allocation11 + $0x50] sm:$0xff]
    %v4194 = vld [vmem:[#allocation11 + $0x58] sm:$0xff]
    %v4195 = vld [vmem:[#allocation11 + $0x60] sm:$0xff]
    %v4196 = vld [vmem:[#allocation11 + $0x68] sm:$0xff]
    %v4197 = vld [vmem:[#allocation11 + $0x70] sm:$0xff]
    %v4198 = vld [vmem:[#allocation11 + $0x78] sm:$0xff]
    %v4199 = vld [vmem:[#allocation11 + $0x80] sm:$0xff]
    %v4200 = vld [vmem:[#allocation11 + $0x88] sm:$0xff]
    %v4201 = vld [vmem:[#allocation11 + $0x90] sm:$0xff]
    %v4202 = vld [vmem:[#allocation11 + $0x98] sm:$0xff]
    %v4203 = vld [vmem:[#allocation11 + $0xa0] sm:$0xff]
    %v4204 = vld [vmem:[#allocation11 + $0xa8] sm:$0xff]
    %v4205 = vld [vmem:[#allocation11 + $0xb0] sm:$0xff]
    %v4206 = vld [vmem:[#allocation11 + $0xb8] sm:$0xff]
    %v4207 = vld [vmem:[#allocation11 + $0xc0] sm:$0xff]
    %v4208 = vld [vmem:[#allocation11 + $0xc8] sm:$0xff]
    %v4209 = vld [vmem:[#allocation11 + $0xd0] sm:$0xff]
    %v4210 = vld [vmem:[#allocation11 + $0xd8] sm:$0xff]
    %v4211 = vld [vmem:[#allocation11 + $0xe0] sm:$0xff]
    %v4212 = vld [vmem:[#allocation11 + $0xe8] sm:$0xff]
    %v4213 = vld [vmem:[#allocation11 + $0xf0] sm:$0xff]
    %v4214 = vld [vmem:[#allocation11 + $0xf8] sm:$0xff]
    %v4215 = vld [vmem:[#allocation11 + $0x100] sm:$0xff]
    %v4216 = vld [vmem:[#allocation11 + $0x108] sm:$0xff]
    %v4217 = vld [vmem:[#allocation11 + $0x110] sm:$0xff]
    %v4218 = vld [vmem:[#allocation11 + $0x118] sm:$0xff]
    %v4219 = vld [vmem:[#allocation11 + $0x120] sm:$0xff]
    %v4220 = vld [vmem:[#allocation11 + $0x128] sm:$0xff]
    %v4221 = vld [vmem:[#allocation11 + $0x130] sm:$0xff]
    %v4222 = vld [vmem:[#allocation11 + $0x138] sm:$0xff]
    %v4223 = vld [vmem:[#allocation11 + $0x140] sm:$0xff]
    %v4224 = vld [vmem:[#allocation11 + $0x148] sm:$0xff]
    %v4225 = vld [vmem:[#allocation11 + $0x150] sm:$0xff]
    %v4226 = vld [vmem:[#allocation11 + $0x158] sm:$0xff]
    %v4227 = vld [vmem:[#allocation11 + $0x160] sm:$0xff]
    %v4228 = vld [vmem:[#allocation11 + $0x168] sm:$0xff]
    %v4229 = vld [vmem:[#allocation11 + $0x170] sm:$0xff]
    %v4230 = vld [vmem:[#allocation11 + $0x178] sm:$0xff]
    %v4231 = vld [vmem:[#allocation11 + $0x180] sm:$0xff]
    %v4232 = vld [vmem:[#allocation11 + $0x188] sm:$0xff]
    %v4233 = vld [vmem:[#allocation11 + $0x190] sm:$0xff]
    %v4234 = vld [vmem:[#allocation11 + $0x198] sm:$0xff]
    %v4235 = vld [vmem:[#allocation11 + $0x1a0] sm:$0xff]
    %v4236 = vld [vmem:[#allocation11 + $0x1a8] sm:$0xff]
    %v4237 = vld [vmem:[#allocation11 + $0x1b0] sm:$0xff]
    %v4238 = vld [vmem:[#allocation11 + $0x1b8] sm:$0xff]
    %v4239 = vld [vmem:[#allocation11 + $0x1c0] sm:$0xff]
    %v4240 = vld [vmem:[#allocation11 + $0x1c8] sm:$0xff]
    %v4241 = vld [vmem:[#allocation11 + $0x1d0] sm:$0xff]
    %v4242 = vld [vmem:[#allocation11 + $0x1d8] sm:$0xff]
    %v4243 = vld [vmem:[#allocation11 + $0x1e0] sm:$0xff]
    %v4244 = vld [vmem:[#allocation11 + $0x1e8] sm:$0xff]
    %v4245 = vld [vmem:[#allocation11 + $0x1f0] sm:$0xff]
    %v4246 = vld [vmem:[#allocation11 + $0x1f8] sm:$0xff]
    %s4247 = scalar_lea.vmem [#allocation14], 4
    %v4248 = vld [vmem:[%s4247] ss:$8 sm:$0xf]
    %v4250 = vlaneseq
    %v4251 = vshrl.u32 %v4250, 7
    %v4252 = vsub.s32 0, %v4251
    %v4253 = vrot.slane %v4248, %v4252
    %v4254 = vlaneseq
    %v4255 = vshrl.u32 %v4254, 7
    %v4256 = vsub.s32 1, %v4255
    %v4257 = vrot.slane %v4248, %v4256
    %v4258 = vlaneseq
    %v4259 = vshrl.u32 %v4258, 7
    %v4260 = vsub.s32 2, %v4259
    %v4261 = vrot.slane %v4248, %v4260
    %v4262 = vlaneseq
    %v4263 = vshrl.u32 %v4262, 7
    %v4264 = vsub.s32 3, %v4263
    %v4265 = vrot.slane %v4248, %v4264
    %v4334 = vunpack.c.l.b16 %v4183
    %v4335 = vunpack.c.h.b16 %v4183
    %v4336 = vunpack.c.l.b16 %v4184
    %v4337 = vunpack.c.h.b16 %v4184
    %v4338 = vunpack.c.l.b16 %v4185
    %v4339 = vunpack.c.h.b16 %v4185
    %v4340 = vunpack.c.l.b16 %v4186
    %v4341 = vunpack.c.h.b16 %v4186
    %v4342 = vunpack.c.l.b16 %v4187
    %v4343 = vunpack.c.h.b16 %v4187
    %v4344 = vunpack.c.l.b16 %v4188
    %v4345 = vunpack.c.h.b16 %v4188
    %v4346 = vunpack.c.l.b16 %v4189
    %v4347 = vunpack.c.h.b16 %v4189
    %v4348 = vunpack.c.l.b16 %v4190
    %v4349 = vunpack.c.h.b16 %v4190
    %v4350 = vunpack.c.l.b16 %v4191
    %v4351 = vunpack.c.h.b16 %v4191
    %v4352 = vunpack.c.l.b16 %v4192
    %v4353 = vunpack.c.h.b16 %v4192
    %v4354 = vunpack.c.l.b16 %v4193
    %v4355 = vunpack.c.h.b16 %v4193
    %v4356 = vunpack.c.l.b16 %v4194
    %v4357 = vunpack.c.h.b16 %v4194
    %v4358 = vunpack.c.l.b16 %v4195
    %v4359 = vunpack.c.h.b16 %v4195
    %v4360 = vunpack.c.l.b16 %v4196
    %v4361 = vunpack.c.h.b16 %v4196
    %v4362 = vunpack.c.l.b16 %v4197
    %v4363 = vunpack.c.h.b16 %v4197
    %v4364 = vunpack.c.l.b16 %v4198
    %v4365 = vunpack.c.h.b16 %v4198
    %v4366 = vunpack.c.l.b16 %v4199
    %v4367 = vunpack.c.h.b16 %v4199
    %v4368 = vunpack.c.l.b16 %v4200
    %v4369 = vunpack.c.h.b16 %v4200
    %v4370 = vunpack.c.l.b16 %v4201
    %v4371 = vunpack.c.h.b16 %v4201
    %v4372 = vunpack.c.l.b16 %v4202
    %v4373 = vunpack.c.h.b16 %v4202
    %v4374 = vunpack.c.l.b16 %v4203
    %v4375 = vunpack.c.h.b16 %v4203
    %v4376 = vunpack.c.l.b16 %v4204
    %v4377 = vunpack.c.h.b16 %v4204
    %v4378 = vunpack.c.l.b16 %v4205
    %v4379 = vunpack.c.h.b16 %v4205
    %v4380 = vunpack.c.l.b16 %v4206
    %v4381 = vunpack.c.h.b16 %v4206
    %v4382 = vunpack.c.l.b16 %v4207
    %v4383 = vunpack.c.h.b16 %v4207
    %v4384 = vunpack.c.l.b16 %v4208
    %v4385 = vunpack.c.h.b16 %v4208
    %v4386 = vunpack.c.l.b16 %v4209
    %v4387 = vunpack.c.h.b16 %v4209
    %v4388 = vunpack.c.l.b16 %v4210
    %v4389 = vunpack.c.h.b16 %v4210
    %v4390 = vunpack.c.l.b16 %v4211
    %v4391 = vunpack.c.h.b16 %v4211
    %v4392 = vunpack.c.l.b16 %v4212
    %v4393 = vunpack.c.h.b16 %v4212
    %v4394 = vunpack.c.l.b16 %v4213
    %v4395 = vunpack.c.h.b16 %v4213
    %v4396 = vunpack.c.l.b16 %v4214
    %v4397 = vunpack.c.h.b16 %v4214
    %v4398 = vunpack.c.l.b16 %v4215
    %v4399 = vunpack.c.h.b16 %v4215
    %v4400 = vunpack.c.l.b16 %v4216
    %v4401 = vunpack.c.h.b16 %v4216
    %v4402 = vunpack.c.l.b16 %v4217
    %v4403 = vunpack.c.h.b16 %v4217
    %v4404 = vunpack.c.l.b16 %v4218
    %v4405 = vunpack.c.h.b16 %v4218
    %v4406 = vunpack.c.l.b16 %v4219
    %v4407 = vunpack.c.h.b16 %v4219
    %v4408 = vunpack.c.l.b16 %v4220
    %v4409 = vunpack.c.h.b16 %v4220
    %v4410 = vunpack.c.l.b16 %v4221
    %v4411 = vunpack.c.h.b16 %v4221
    %v4412 = vunpack.c.l.b16 %v4222
    %v4413 = vunpack.c.h.b16 %v4222
    %v4414 = vunpack.c.l.b16 %v4223
    %v4415 = vunpack.c.h.b16 %v4223
    %v4416 = vunpack.c.l.b16 %v4224
    %v4417 = vunpack.c.h.b16 %v4224
    %v4418 = vunpack.c.l.b16 %v4225
    %v4419 = vunpack.c.h.b16 %v4225
    %v4420 = vunpack.c.l.b16 %v4226
    %v4421 = vunpack.c.h.b16 %v4226
    %v4422 = vunpack.c.l.b16 %v4227
    %v4423 = vunpack.c.h.b16 %v4227
    %v4424 = vunpack.c.l.b16 %v4228
    %v4425 = vunpack.c.h.b16 %v4228
    %v4426 = vunpack.c.l.b16 %v4229
    %v4427 = vunpack.c.h.b16 %v4229
    %v4428 = vunpack.c.l.b16 %v4230
    %v4429 = vunpack.c.h.b16 %v4230
    %v4430 = vunpack.c.l.b16 %v4231
    %v4431 = vunpack.c.h.b16 %v4231
    %v4432 = vunpack.c.l.b16 %v4232
    %v4433 = vunpack.c.h.b16 %v4232
    %v4434 = vunpack.c.l.b16 %v4233
    %v4435 = vunpack.c.h.b16 %v4233
    %v4436 = vunpack.c.l.b16 %v4234
    %v4437 = vunpack.c.h.b16 %v4234
    %v4438 = vunpack.c.l.b16 %v4235
    %v4439 = vunpack.c.h.b16 %v4235
    %v4440 = vunpack.c.l.b16 %v4236
    %v4441 = vunpack.c.h.b16 %v4236
    %v4442 = vunpack.c.l.b16 %v4237
    %v4443 = vunpack.c.h.b16 %v4237
    %v4444 = vunpack.c.l.b16 %v4238
    %v4445 = vunpack.c.h.b16 %v4238
    %v4446 = vunpack.c.l.b16 %v4239
    %v4447 = vunpack.c.h.b16 %v4239
    %v4448 = vunpack.c.l.b16 %v4240
    %v4449 = vunpack.c.h.b16 %v4240
    %v4450 = vunpack.c.l.b16 %v4241
    %v4451 = vunpack.c.h.b16 %v4241
    %v4452 = vunpack.c.l.b16 %v4242
    %v4453 = vunpack.c.h.b16 %v4242
    %v4454 = vunpack.c.l.b16 %v4243
    %v4455 = vunpack.c.h.b16 %v4243
    %v4456 = vunpack.c.l.b16 %v4244
    %v4457 = vunpack.c.h.b16 %v4244
    %v4458 = vunpack.c.l.b16 %v4245
    %v4459 = vunpack.c.h.b16 %v4245
    %v4460 = vunpack.c.l.b16 %v4246
    %v4461 = vunpack.c.h.b16 %v4246
    %v4462 = vpack.c.b16 %v4338, %v4334
    %v4463 = vpack.c.b16 %v4339, %v4335
    %v4464 = vpack.c.b16 %v4340, %v4336
    %v4465 = vpack.c.b16 %v4341, %v4337
    %v4466 = vpack.c.b16 %v4346, %v4342
    %v4467 = vpack.c.b16 %v4347, %v4343
    %v4468 = vpack.c.b16 %v4348, %v4344
    %v4469 = vpack.c.b16 %v4349, %v4345
    %v4470 = vpack.c.b16 %v4354, %v4350
    %v4471 = vpack.c.b16 %v4355, %v4351
    %v4472 = vpack.c.b16 %v4356, %v4352
    %v4473 = vpack.c.b16 %v4357, %v4353
    %v4474 = vpack.c.b16 %v4362, %v4358
    %v4475 = vpack.c.b16 %v4363, %v4359
    %v4476 = vpack.c.b16 %v4364, %v4360
    %v4477 = vpack.c.b16 %v4365, %v4361
    %v4478 = vpack.c.b16 %v4370, %v4366
    %v4479 = vpack.c.b16 %v4371, %v4367
    %v4480 = vpack.c.b16 %v4372, %v4368
    %v4481 = vpack.c.b16 %v4373, %v4369
    %v4482 = vpack.c.b16 %v4378, %v4374
    %v4483 = vpack.c.b16 %v4379, %v4375
    %v4484 = vpack.c.b16 %v4380, %v4376
    %v4485 = vpack.c.b16 %v4381, %v4377
    %v4486 = vpack.c.b16 %v4386, %v4382
    %v4487 = vpack.c.b16 %v4387, %v4383
    %v4488 = vpack.c.b16 %v4388, %v4384
    %v4489 = vpack.c.b16 %v4389, %v4385
    %v4490 = vpack.c.b16 %v4394, %v4390
    %v4491 = vpack.c.b16 %v4395, %v4391
    %v4492 = vpack.c.b16 %v4396, %v4392
    %v4493 = vpack.c.b16 %v4397, %v4393
    %v4494 = vpack.c.b16 %v4402, %v4398
    %v4495 = vpack.c.b16 %v4403, %v4399
    %v4496 = vpack.c.b16 %v4404, %v4400
    %v4497 = vpack.c.b16 %v4405, %v4401
    %v4498 = vpack.c.b16 %v4410, %v4406
    %v4499 = vpack.c.b16 %v4411, %v4407
    %v4500 = vpack.c.b16 %v4412, %v4408
    %v4501 = vpack.c.b16 %v4413, %v4409
    %v4502 = vpack.c.b16 %v4418, %v4414
    %v4503 = vpack.c.b16 %v4419, %v4415
    %v4504 = vpack.c.b16 %v4420, %v4416
    %v4505 = vpack.c.b16 %v4421, %v4417
    %v4506 = vpack.c.b16 %v4426, %v4422
    %v4507 = vpack.c.b16 %v4427, %v4423
    %v4508 = vpack.c.b16 %v4428, %v4424
    %v4509 = vpack.c.b16 %v4429, %v4425
    %v4510 = vpack.c.b16 %v4434, %v4430
    %v4511 = vpack.c.b16 %v4435, %v4431
    %v4512 = vpack.c.b16 %v4436, %v4432
    %v4513 = vpack.c.b16 %v4437, %v4433
    %v4514 = vpack.c.b16 %v4442, %v4438
    %v4515 = vpack.c.b16 %v4443, %v4439
    %v4516 = vpack.c.b16 %v4444, %v4440
    %v4517 = vpack.c.b16 %v4445, %v4441
    %v4518 = vpack.c.b16 %v4450, %v4446
    %v4519 = vpack.c.b16 %v4451, %v4447
    %v4520 = vpack.c.b16 %v4452, %v4448
    %v4521 = vpack.c.b16 %v4453, %v4449
    %v4522 = vpack.c.b16 %v4458, %v4454
    %v4523 = vpack.c.b16 %v4459, %v4455
    %v4524 = vpack.c.b16 %v4460, %v4456
    %v4525 = vpack.c.b16 %v4461, %v4457
    %4590 = vmatprep.subr.bf16.mxu0 %v4463
    %4591 = vmatpush1.bf16.msra.mxu0 %v4462
    %4592 = vmatprep.subr.bf16.mxu0 %v4467
    %4593 = vmatpush1.bf16.msra.mxu0 %v4466
    %4594 = vmatprep.subr.bf16.mxu0 %v4471
    %4595 = vmatpush1.bf16.msra.mxu0 %v4470
    %4596 = vmatprep.subr.bf16.mxu0 %v4475
    %4597 = vmatpush1.bf16.msra.mxu0 %v4474
    %4598 = vmatprep.subr.bf16.mxu0 %v4479
    %4599 = vmatpush1.bf16.msra.mxu0 %v4478
    %4600 = vmatprep.subr.bf16.mxu0 %v4483
    %4601 = vmatpush1.bf16.msra.mxu0 %v4482
    %4602 = vmatprep.subr.bf16.mxu0 %v4487
    %4603 = vmatpush1.bf16.msra.mxu0 %v4486
    %4604 = vmatprep.subr.bf16.mxu0 %v4491
    %4605 = vmatpush1.bf16.msra.mxu0 %v4490
    %4606 = vmatprep.subr.bf16.mxu0 %v4495
    %4607 = vmatpush1.bf16.msra.mxu0 %v4494
    %4608 = vmatprep.subr.bf16.mxu0 %v4499
    %4609 = vmatpush1.bf16.msra.mxu0 %v4498
    %4610 = vmatprep.subr.bf16.mxu0 %v4503
    %4611 = vmatpush1.bf16.msra.mxu0 %v4502
    %4612 = vmatprep.subr.bf16.mxu0 %v4507
    %4613 = vmatpush1.bf16.msra.mxu0 %v4506
    %4614 = vmatprep.subr.bf16.mxu0 %v4511
    %4615 = vmatpush1.bf16.msra.mxu0 %v4510
    %4616 = vmatprep.subr.bf16.mxu0 %v4515
    %4617 = vmatpush1.bf16.msra.mxu0 %v4514
    %4618 = vmatprep.subr.bf16.mxu0 %v4519
    %4619 = vmatpush1.bf16.msra.mxu0 %v4518
    %4620 = vmatprep.subr.bf16.mxu0 %v4523
    %4621 = vmatpush1.bf16.msra.mxu0 %v4522
    %4622 = vmatprep.mubr.bf16.mxu0 %v4182
    %4623 = vmatmul.mubr.bf16.gmra.mrb[0].mxu0 %v4181
    %v4624 = vpop.f32.mrb[0].mxu0
    %v4625 = vadd.f32 %v4253, %v4624
    %v4626 = vpop.f32.mrb[0].mxu0
    %v4627 = vadd.f32 %v4257, %v4626
    %v4628 = vpop.f32.mrb[0].mxu0
    %v4629 = vpop.f32.mrb[0].mxu0
    %4630 = vdwg.mxu0
    %4631 = vmatprep.subr.bf16.mxu0 %v4465
    %4632 = vmatpush1.bf16.msra.mxu0 %v4464
    %4633 = vmatprep.subr.bf16.mxu0 %v4469
    %4634 = vmatpush1.bf16.msra.mxu0 %v4468
    %4635 = vmatprep.subr.bf16.mxu0 %v4473
    %4636 = vmatpush1.bf16.msra.mxu0 %v4472
    %4637 = vmatprep.subr.bf16.mxu0 %v4477
    %4638 = vmatpush1.bf16.msra.mxu0 %v4476
    %4639 = vmatprep.subr.bf16.mxu0 %v4481
    %4640 = vmatpush1.bf16.msra.mxu0 %v4480
    %4641 = vmatprep.subr.bf16.mxu0 %v4485
    %4642 = vmatpush1.bf16.msra.mxu0 %v4484
    %4643 = vmatprep.subr.bf16.mxu0 %v4489
    %4644 = vmatpush1.bf16.msra.mxu0 %v4488
    %4645 = vmatprep.subr.bf16.mxu0 %v4493
    %4646 = vmatpush1.bf16.msra.mxu0 %v4492
    %4647 = vmatprep.subr.bf16.mxu0 %v4497
    %4648 = vmatpush1.bf16.msra.mxu0 %v4496
    %4649 = vmatprep.subr.bf16.mxu0 %v4501
    %4650 = vmatpush1.bf16.msra.mxu0 %v4500
    %4651 = vmatprep.subr.bf16.mxu0 %v4505
    %4652 = vmatpush1.bf16.msra.mxu0 %v4504
    %4653 = vmatprep.subr.bf16.mxu0 %v4509
    %4654 = vmatpush1.bf16.msra.mxu0 %v4508
    %4655 = vmatprep.subr.bf16.mxu0 %v4513
    %4656 = vmatpush1.bf16.msra.mxu0 %v4512
    %4657 = vmatprep.subr.bf16.mxu0 %v4517
    %4658 = vmatpush1.bf16.msra.mxu0 %v4516
    %4659 = vmatprep.subr.bf16.mxu0 %v4521
    %4660 = vmatpush1.bf16.msra.mxu0 %v4520
    %4661 = vmatprep.subr.bf16.mxu0 %v4525
    %4662 = vmatpush1.bf16.msra.mxu0 %v4524
    %4663 = vmatprep.mubr.bf16.mxu0 %v4182
    %4664 = vmatmul.mubr.bf16.gmra.mrb[0].mxu0 %v4181
    %v4665 = vpop.f32.mrb[0].mxu0
    %v4666 = vadd.f32 %v4261, %v4665
    %v4667 = vpop.f32.mrb[0].mxu0
    %v4668 = vadd.f32 %v4265, %v4667
    %v4669 = vpop.f32.mrb[0].mxu0
    %v4670 = vpop.f32.mrb[0].mxu0
    %4671 = vdwg.mxu0
    %v4672 = vmax.f32 %v4625, 0.0
    %v4673 = vmax.f32 %v4627, 0.0
    %v4674 = vmax.f32 %v4666, 0.0
    %v4675 = vmax.f32 %v4668, 0.0
    %v4676 = vand.u32 2147483647, %v4625
    %v4677 = vand.u32 2147483647, %v4627
    %v4678 = vand.u32 2147483647, %v4666
    %v4679 = vand.u32 2147483647, %v4668
    %v4680 = vsub.f32 0.0, %v4676
    %v4681 = vsub.f32 0.0, %v4677
    %v4682 = vsub.f32 0.0, %v4678
    %v4683 = vsub.f32 0.0, %v4679
    %v4684 = vmul.f32 %v4680, 1.442695
    %v4685 = vpow.pop %v4684
    %v4686 = vmul.f32 %v4681, 1.442695
    %v4687 = vpow.pop %v4686
    %v4688 = vmul.f32 %v4682, 1.442695
    %v4689 = vpow.pop %v4688
    %v4690 = vmul.f32 %v4683, 1.442695
    %v4691 = vpow.pop %v4690
    %v4692 = vadd.f32 %v4685, 1.0
    %v4693 = vlog2.pop %v4692
    %v4694 = vmul.f32 %v4693, 0.6931472
    %v4695 = vmul.f32 -0.5, %v4685
    %v4696 = vadd.f32 %v4695, 1.0
    %v4697 = vmul.f32 %v4696, %v4685
    %v4698 = vand.u32 2147483647, %v4685
    %vm4699 = vcmp.lt.f32.partialorder %v4698, 0.0004427343
    %v4700 = vsel %vm4699, %v4697, %v4694
    %v4701 = vadd.f32 %v4687, 1.0
    %v4702 = vlog2.pop %v4701
    %v4703 = vmul.f32 %v4702, 0.6931472
    %v4704 = vmul.f32 -0.5, %v4687
    %v4705 = vadd.f32 %v4704, 1.0
    %v4706 = vmul.f32 %v4705, %v4687
    %v4707 = vand.u32 2147483647, %v4687
    %vm4708 = vcmp.lt.f32.partialorder %v4707, 0.0004427343
    %v4709 = vsel %vm4708, %v4706, %v4703
    %v4710 = vadd.f32 %v4689, 1.0
    %v4711 = vlog2.pop %v4710
    %v4712 = vmul.f32 %v4711, 0.6931472
    %v4713 = vmul.f32 -0.5, %v4689
    %v4714 = vadd.f32 %v4713, 1.0
    %v4715 = vmul.f32 %v4714, %v4689
    %v4716 = vand.u32 2147483647, %v4689
    %vm4717 = vcmp.lt.f32.partialorder %v4716, 0.0004427343
    %v4718 = vsel %vm4717, %v4715, %v4712
    %v4719 = vadd.f32 %v4691, 1.0
    %v4720 = vlog2.pop %v4719
    %v4721 = vmul.f32 %v4720, 0.6931472
    %v4722 = vmul.f32 -0.5, %v4691
    %v4723 = vadd.f32 %v4722, 1.0
    %v4724 = vmul.f32 %v4723, %v4691
    %v4725 = vand.u32 2147483647, %v4691
    %vm4726 = vcmp.lt.f32.partialorder %v4725, 0.0004427343
    %v4727 = vsel %vm4726, %v4724, %v4721
    %v4728 = vadd.f32 %v4672, %v4700
    %v4729 = vadd.f32 %v4673, %v4709
    %v4730 = vadd.f32 %v4674, %v4718
    %v4731 = vadd.f32 %v4675, %v4727
    %v4732 = vpack.c.bf16 %v4728, %v4728
    %v4733 = vpack.c.bf16 %v4729, %v4729
    %v4734 = vpack.c.bf16 %v4730, %v4730
    %v4735 = vpack.c.bf16 %v4731, %v4731
    %v4736 = vld [vmem:[#allocation13] sm:$0xff]
    %v4737 = vld [vmem:[#allocation13 + $0x8] sm:$0xff]
    %v4738 = vld [vmem:[#allocation13 + $0x10] sm:$0xff]
    %v4739 = vld [vmem:[#allocation13 + $0x18] sm:$0xff]
    %v4740 = vld [vmem:[#allocation13 + $0x20] sm:$0xff]
    %v4741 = vld [vmem:[#allocation13 + $0x28] sm:$0xff]
    %v4742 = vld [vmem:[#allocation13 + $0x30] sm:$0xff]
    %v4743 = vld [vmem:[#allocation13 + $0x38] sm:$0xff]
    %v4744 = vld [vmem:[#allocation13 + $0x40] sm:$0xff]
    %v4745 = vld [vmem:[#allocation13 + $0x48] sm:$0xff]
    %v4746 = vld [vmem:[#allocation13 + $0x50] sm:$0xff]
    %v4747 = vld [vmem:[#allocation13 + $0x58] sm:$0xff]
    %v4748 = vld [vmem:[#allocation13 + $0x60] sm:$0xff]
    %v4749 = vld [vmem:[#allocation13 + $0x68] sm:$0xff]
    %v4750 = vld [vmem:[#allocation13 + $0x70] sm:$0xff]
    %v4751 = vld [vmem:[#allocation13 + $0x78] sm:$0xff]
    %v4752 = vld [vmem:[#allocation13 + $0x80] sm:$0xff]
    %v4753 = vld [vmem:[#allocation13 + $0x88] sm:$0xff]
    %v4754 = vld [vmem:[#allocation13 + $0x90] sm:$0xff]
    %v4755 = vld [vmem:[#allocation13 + $0x98] sm:$0xff]
    %v4756 = vld [vmem:[#allocation13 + $0xa0] sm:$0xff]
    %v4757 = vld [vmem:[#allocation13 + $0xa8] sm:$0xff]
    %v4758 = vld [vmem:[#allocation13 + $0xb0] sm:$0xff]
    %v4759 = vld [vmem:[#allocation13 + $0xb8] sm:$0xff]
    %v4760 = vld [vmem:[#allocation13 + $0xc0] sm:$0xff]
    %v4761 = vld [vmem:[#allocation13 + $0xc8] sm:$0xff]
    %v4762 = vld [vmem:[#allocation13 + $0xd0] sm:$0xff]
    %v4763 = vld [vmem:[#allocation13 + $0xd8] sm:$0xff]
    %v4764 = vld [vmem:[#allocation13 + $0xe0] sm:$0xff]
    %v4765 = vld [vmem:[#allocation13 + $0xe8] sm:$0xff]
    %v4766 = vld [vmem:[#allocation13 + $0xf0] sm:$0xff]
    %v4767 = vld [vmem:[#allocation13 + $0xf8] sm:$0xff]
    %v4768 = vld [vmem:[#allocation13 + $0x100] sm:$0xff]
    %v4769 = vld [vmem:[#allocation13 + $0x108] sm:$0xff]
    %v4770 = vld [vmem:[#allocation13 + $0x110] sm:$0xff]
    %v4771 = vld [vmem:[#allocation13 + $0x118] sm:$0xff]
    %v4772 = vld [vmem:[#allocation13 + $0x120] sm:$0xff]
    %v4773 = vld [vmem:[#allocation13 + $0x128] sm:$0xff]
    %v4774 = vld [vmem:[#allocation13 + $0x130] sm:$0xff]
    %v4775 = vld [vmem:[#allocation13 + $0x138] sm:$0xff]
    %v4776 = vld [vmem:[#allocation13 + $0x140] sm:$0xff]
    %v4777 = vld [vmem:[#allocation13 + $0x148] sm:$0xff]
    %v4778 = vld [vmem:[#allocation13 + $0x150] sm:$0xff]
    %v4779 = vld [vmem:[#allocation13 + $0x158] sm:$0xff]
    %v4780 = vld [vmem:[#allocation13 + $0x160] sm:$0xff]
    %v4781 = vld [vmem:[#allocation13 + $0x168] sm:$0xff]
    %v4782 = vld [vmem:[#allocation13 + $0x170] sm:$0xff]
    %v4783 = vld [vmem:[#allocation13 + $0x178] sm:$0xff]
    %v4784 = vld [vmem:[#allocation13 + $0x180] sm:$0xff]
    %v4785 = vld [vmem:[#allocation13 + $0x188] sm:$0xff]
    %v4786 = vld [vmem:[#allocation13 + $0x190] sm:$0xff]
    %v4787 = vld [vmem:[#allocation13 + $0x198] sm:$0xff]
    %v4788 = vld [vmem:[#allocation13 + $0x1a0] sm:$0xff]
    %v4789 = vld [vmem:[#allocation13 + $0x1a8] sm:$0xff]
    %v4790 = vld [vmem:[#allocation13 + $0x1b0] sm:$0xff]
    %v4791 = vld [vmem:[#allocation13 + $0x1b8] sm:$0xff]
    %v4792 = vld [vmem:[#allocation13 + $0x1c0] sm:$0xff]
    %v4793 = vld [vmem:[#allocation13 + $0x1c8] sm:$0xff]
    %v4794 = vld [vmem:[#allocation13 + $0x1d0] sm:$0xff]
    %v4795 = vld [vmem:[#allocation13 + $0x1d8] sm:$0xff]
    %v4796 = vld [vmem:[#allocation13 + $0x1e0] sm:$0xff]
    %v4797 = vld [vmem:[#allocation13 + $0x1e8] sm:$0xff]
    %v4798 = vld [vmem:[#allocation13 + $0x1f0] sm:$0xff]
    %v4799 = vld [vmem:[#allocation13 + $0x1f8] sm:$0xff]
    %v4800 = vld [vmem:[#allocation13 + $0x200] sm:$0xff]
    %v4801 = vld [vmem:[#allocation13 + $0x208] sm:$0xff]
    %v4802 = vld [vmem:[#allocation13 + $0x210] sm:$0xff]
    %v4803 = vld [vmem:[#allocation13 + $0x218] sm:$0xff]
    %v4804 = vld [vmem:[#allocation13 + $0x220] sm:$0xff]
    %v4805 = vld [vmem:[#allocation13 + $0x228] sm:$0xff]
    %v4806 = vld [vmem:[#allocation13 + $0x230] sm:$0xff]
    %v4807 = vld [vmem:[#allocation13 + $0x238] sm:$0xff]
    %v4808 = vld [vmem:[#allocation13 + $0x240] sm:$0xff]
    %v4809 = vld [vmem:[#allocation13 + $0x248] sm:$0xff]
    %v4810 = vld [vmem:[#allocation13 + $0x250] sm:$0xff]
    %v4811 = vld [vmem:[#allocation13 + $0x258] sm:$0xff]
    %v4812 = vld [vmem:[#allocation13 + $0x260] sm:$0xff]
    %v4813 = vld [vmem:[#allocation13 + $0x268] sm:$0xff]
    %v4814 = vld [vmem:[#allocation13 + $0x270] sm:$0xff]
    %v4815 = vld [vmem:[#allocation13 + $0x278] sm:$0xff]
    %v4816 = vld [vmem:[#allocation13 + $0x280] sm:$0xff]
    %v4817 = vld [vmem:[#allocation13 + $0x288] sm:$0xff]
    %v4818 = vld [vmem:[#allocation13 + $0x290] sm:$0xff]
    %v4819 = vld [vmem:[#allocation13 + $0x298] sm:$0xff]
    %v4820 = vld [vmem:[#allocation13 + $0x2a0] sm:$0xff]
    %v4821 = vld [vmem:[#allocation13 + $0x2a8] sm:$0xff]
    %v4822 = vld [vmem:[#allocation13 + $0x2b0] sm:$0xff]
    %v4823 = vld [vmem:[#allocation13 + $0x2b8] sm:$0xff]
    %v4824 = vld [vmem:[#allocation13 + $0x2c0] sm:$0xff]
    %v4825 = vld [vmem:[#allocation13 + $0x2c8] sm:$0xff]
    %v4826 = vld [vmem:[#allocation13 + $0x2d0] sm:$0xff]
    %v4827 = vld [vmem:[#allocation13 + $0x2d8] sm:$0xff]
    %v4828 = vld [vmem:[#allocation13 + $0x2e0] sm:$0xff]
    %v4829 = vld [vmem:[#allocation13 + $0x2e8] sm:$0xff]
    %v4830 = vld [vmem:[#allocation13 + $0x2f0] sm:$0xff]
    %v4831 = vld [vmem:[#allocation13 + $0x2f8] sm:$0xff]
    %v4832 = vld [vmem:[#allocation13 + $0x300] sm:$0xff]
    %v4833 = vld [vmem:[#allocation13 + $0x308] sm:$0xff]
    %v4834 = vld [vmem:[#allocation13 + $0x310] sm:$0xff]
    %v4835 = vld [vmem:[#allocation13 + $0x318] sm:$0xff]
    %v4836 = vld [vmem:[#allocation13 + $0x320] sm:$0xff]
    %v4837 = vld [vmem:[#allocation13 + $0x328] sm:$0xff]
    %v4838 = vld [vmem:[#allocation13 + $0x330] sm:$0xff]
    %v4839 = vld [vmem:[#allocation13 + $0x338] sm:$0xff]
    %v4840 = vld [vmem:[#allocation13 + $0x340] sm:$0xff]
    %v4841 = vld [vmem:[#allocation13 + $0x348] sm:$0xff]
    %v4842 = vld [vmem:[#allocation13 + $0x350] sm:$0xff]
    %v4843 = vld [vmem:[#allocation13 + $0x358] sm:$0xff]
    %v4844 = vld [vmem:[#allocation13 + $0x360] sm:$0xff]
    %v4845 = vld [vmem:[#allocation13 + $0x368] sm:$0xff]
    %v4846 = vld [vmem:[#allocation13 + $0x370] sm:$0xff]
    %v4847 = vld [vmem:[#allocation13 + $0x378] sm:$0xff]
    %v4848 = vld [vmem:[#allocation13 + $0x380] sm:$0xff]
    %v4849 = vld [vmem:[#allocation13 + $0x388] sm:$0xff]
    %v4850 = vld [vmem:[#allocation13 + $0x390] sm:$0xff]
    %v4851 = vld [vmem:[#allocation13 + $0x398] sm:$0xff]
    %v4852 = vld [vmem:[#allocation13 + $0x3a0] sm:$0xff]
    %v4853 = vld [vmem:[#allocation13 + $0x3a8] sm:$0xff]
    %v4854 = vld [vmem:[#allocation13 + $0x3b0] sm:$0xff]
    %v4855 = vld [vmem:[#allocation13 + $0x3b8] sm:$0xff]
    %v4856 = vld [vmem:[#allocation13 + $0x3c0] sm:$0xff]
    %v4857 = vld [vmem:[#allocation13 + $0x3c8] sm:$0xff]
    %v4858 = vld [vmem:[#allocation13 + $0x3d0] sm:$0xff]
    %v4859 = vld [vmem:[#allocation13 + $0x3d8] sm:$0xff]
    %v4860 = vld [vmem:[#allocation13 + $0x3e0] sm:$0xff]
    %v4861 = vld [vmem:[#allocation13 + $0x3e8] sm:$0xff]
    %v4862 = vld [vmem:[#allocation13 + $0x3f0] sm:$0xff]
    %v4863 = vld [vmem:[#allocation13 + $0x3f8] sm:$0xff]
    %v4864 = vld [vmem:[#allocation13 + $0x400] sm:$0xff]
    %v4865 = vld [vmem:[#allocation13 + $0x408] sm:$0xff]
    %v4866 = vld [vmem:[#allocation13 + $0x410] sm:$0xff]
    %v4867 = vld [vmem:[#allocation13 + $0x418] sm:$0xff]
    %v4868 = vld [vmem:[#allocation13 + $0x420] sm:$0xff]
    %v4869 = vld [vmem:[#allocation13 + $0x428] sm:$0xff]
    %v4870 = vld [vmem:[#allocation13 + $0x430] sm:$0xff]
    %v4871 = vld [vmem:[#allocation13 + $0x438] sm:$0xff]
    %v4872 = vld [vmem:[#allocation13 + $0x440] sm:$0xff]
    %v4873 = vld [vmem:[#allocation13 + $0x448] sm:$0xff]
    %v4874 = vld [vmem:[#allocation13 + $0x450] sm:$0xff]
    %v4875 = vld [vmem:[#allocation13 + $0x458] sm:$0xff]
    %v4876 = vld [vmem:[#allocation13 + $0x460] sm:$0xff]
    %v4877 = vld [vmem:[#allocation13 + $0x468] sm:$0xff]
    %v4878 = vld [vmem:[#allocation13 + $0x470] sm:$0xff]
    %v4879 = vld [vmem:[#allocation13 + $0x478] sm:$0xff]
    %v4880 = vld [vmem:[#allocation13 + $0x480] sm:$0xff]
    %v4881 = vld [vmem:[#allocation13 + $0x488] sm:$0xff]
    %v4882 = vld [vmem:[#allocation13 + $0x490] sm:$0xff]
    %v4883 = vld [vmem:[#allocation13 + $0x498] sm:$0xff]
    %v4884 = vld [vmem:[#allocation13 + $0x4a0] sm:$0xff]
    %v4885 = vld [vmem:[#allocation13 + $0x4a8] sm:$0xff]
    %v4886 = vld [vmem:[#allocation13 + $0x4b0] sm:$0xff]
    %v4887 = vld [vmem:[#allocation13 + $0x4b8] sm:$0xff]
    %v4888 = vld [vmem:[#allocation13 + $0x4c0] sm:$0xff]
    %v4889 = vld [vmem:[#allocation13 + $0x4c8] sm:$0xff]
    %v4890 = vld [vmem:[#allocation13 + $0x4d0] sm:$0xff]
    %v4891 = vld [vmem:[#allocation13 + $0x4d8] sm:$0xff]
    %v4892 = vld [vmem:[#allocation13 + $0x4e0] sm:$0xff]
    %v4893 = vld [vmem:[#allocation13 + $0x4e8] sm:$0xff]
    %v4894 = vld [vmem:[#allocation13 + $0x4f0] sm:$0xff]
    %v4895 = vld [vmem:[#allocation13 + $0x4f8] sm:$0xff]
    %v4896 = vld [vmem:[#allocation13 + $0x500] sm:$0xff]
    %v4897 = vld [vmem:[#allocation13 + $0x508] sm:$0xff]
    %v4898 = vld [vmem:[#allocation13 + $0x510] sm:$0xff]
    %v4899 = vld [vmem:[#allocation13 + $0x518] sm:$0xff]
    %v4900 = vld [vmem:[#allocation13 + $0x520] sm:$0xff]
    %v4901 = vld [vmem:[#allocation13 + $0x528] sm:$0xff]
    %v4902 = vld [vmem:[#allocation13 + $0x530] sm:$0xff]
    %v4903 = vld [vmem:[#allocation13 + $0x538] sm:$0xff]
    %v4904 = vld [vmem:[#allocation13 + $0x540] sm:$0xff]
    %v4905 = vld [vmem:[#allocation13 + $0x548] sm:$0xff]
    %v4906 = vld [vmem:[#allocation13 + $0x550] sm:$0xff]
    %v4907 = vld [vmem:[#allocation13 + $0x558] sm:$0xff]
    %v4908 = vld [vmem:[#allocation13 + $0x560] sm:$0xff]
    %v4909 = vld [vmem:[#allocation13 + $0x568] sm:$0xff]
    %v4910 = vld [vmem:[#allocation13 + $0x570] sm:$0xff]
    %v4911 = vld [vmem:[#allocation13 + $0x578] sm:$0xff]
    %v4912 = vld [vmem:[#allocation13 + $0x580] sm:$0xff]
    %v4913 = vld [vmem:[#allocation13 + $0x588] sm:$0xff]
    %v4914 = vld [vmem:[#allocation13 + $0x590] sm:$0xff]
    %v4915 = vld [vmem:[#allocation13 + $0x598] sm:$0xff]
    %v4916 = vld [vmem:[#allocation13 + $0x5a0] sm:$0xff]
    %v4917 = vld [vmem:[#allocation13 + $0x5a8] sm:$0xff]
    %v4918 = vld [vmem:[#allocation13 + $0x5b0] sm:$0xff]
    %v4919 = vld [vmem:[#allocation13 + $0x5b8] sm:$0xff]
    %v4920 = vld [vmem:[#allocation13 + $0x5c0] sm:$0xff]
    %v4921 = vld [vmem:[#allocation13 + $0x5c8] sm:$0xff]
    %v4922 = vld [vmem:[#allocation13 + $0x5d0] sm:$0xff]
    %v4923 = vld [vmem:[#allocation13 + $0x5d8] sm:$0xff]
    %v4924 = vld [vmem:[#allocation13 + $0x5e0] sm:$0xff]
    %v4925 = vld [vmem:[#allocation13 + $0x5e8] sm:$0xff]
    %v4926 = vld [vmem:[#allocation13 + $0x5f0] sm:$0xff]
    %v4927 = vld [vmem:[#allocation13 + $0x5f8] sm:$0xff]
    %s4928 = scalar_lea.vmem [#allocation14], 5
    %v4929 = vld [vmem:[%s4928] ss:$8 sm:$0xf]
    %v4930 = vld [vmem:[%s4928] ss:$8 sm:$0x30]
    %v4931 = vor.u32 %v4929, %v4930
    %v4933 = vlaneseq
    %v4934 = vshrl.u32 %v4933, 7
    %v4935 = vsub.s32 0, %v4934
    %v4936 = vrot.slane %v4931, %v4935
    %v4937 = vlaneseq
    %v4938 = vshrl.u32 %v4937, 7
    %v4939 = vsub.s32 1, %v4938
    %v4940 = vrot.slane %v4931, %v4939
    %v4941 = vlaneseq
    %v4942 = vshrl.u32 %v4941, 7
    %v4943 = vsub.s32 2, %v4942
    %v4944 = vrot.slane %v4931, %v4943
    %v4945 = vlaneseq
    %v4946 = vshrl.u32 %v4945, 7
    %v4947 = vsub.s32 3, %v4946
    %v4948 = vrot.slane %v4931, %v4947
    %v4949 = vlaneseq
    %v4950 = vshrl.u32 %v4949, 7
    %v4951 = vsub.s32 4, %v4950
    %v4952 = vrot.slane %v4931, %v4951
    %v4953 = vlaneseq
    %v4954 = vshrl.u32 %v4953, 7
    %v4955 = vsub.s32 5, %v4954
    %v4956 = vrot.slane %v4931, %v4955
    %v5155 = vunpack.c.l.b16 %v4736
    %v5156 = vunpack.c.h.b16 %v4736
    %v5157 = vunpack.c.l.b16 %v4737
    %v5158 = vunpack.c.h.b16 %v4737
    %v5159 = vunpack.c.l.b16 %v4738
    %v5160 = vunpack.c.h.b16 %v4738
    %v5161 = vunpack.c.l.b16 %v4739
    %v5162 = vunpack.c.h.b16 %v4739
    %v5163 = vunpack.c.l.b16 %v4740
    %v5164 = vunpack.c.h.b16 %v4740
    %v5165 = vunpack.c.l.b16 %v4741
    %v5166 = vunpack.c.h.b16 %v4741
    %v5167 = vunpack.c.l.b16 %v4742
    %v5168 = vunpack.c.h.b16 %v4742
    %v5169 = vunpack.c.l.b16 %v4743
    %v5170 = vunpack.c.h.b16 %v4743
    %v5171 = vunpack.c.l.b16 %v4744
    %v5172 = vunpack.c.h.b16 %v4744
    %v5173 = vunpack.c.l.b16 %v4745
    %v5174 = vunpack.c.h.b16 %v4745
    %v5175 = vunpack.c.l.b16 %v4746
    %v5176 = vunpack.c.h.b16 %v4746
    %v5177 = vunpack.c.l.b16 %v4747
    %v5178 = vunpack.c.h.b16 %v4747
    %v5179 = vunpack.c.l.b16 %v4748
    %v5180 = vunpack.c.h.b16 %v4748
    %v5181 = vunpack.c.l.b16 %v4749
    %v5182 = vunpack.c.h.b16 %v4749
    %v5183 = vunpack.c.l.b16 %v4750
    %v5184 = vunpack.c.h.b16 %v4750
    %v5185 = vunpack.c.l.b16 %v4751
    %v5186 = vunpack.c.h.b16 %v4751
    %v5187 = vunpack.c.l.b16 %v4752
    %v5188 = vunpack.c.h.b16 %v4752
    %v5189 = vunpack.c.l.b16 %v4753
    %v5190 = vunpack.c.h.b16 %v4753
    %v5191 = vunpack.c.l.b16 %v4754
    %v5192 = vunpack.c.h.b16 %v4754
    %v5193 = vunpack.c.l.b16 %v4755
    %v5194 = vunpack.c.h.b16 %v4755
    %v5195 = vunpack.c.l.b16 %v4756
    %v5196 = vunpack.c.h.b16 %v4756
    %v5197 = vunpack.c.l.b16 %v4757
    %v5198 = vunpack.c.h.b16 %v4757
    %v5199 = vunpack.c.l.b16 %v4758
    %v5200 = vunpack.c.h.b16 %v4758
    %v5201 = vunpack.c.l.b16 %v4759
    %v5202 = vunpack.c.h.b16 %v4759
    %v5203 = vunpack.c.l.b16 %v4760
    %v5204 = vunpack.c.h.b16 %v4760
    %v5205 = vunpack.c.l.b16 %v4761
    %v5206 = vunpack.c.h.b16 %v4761
    %v5207 = vunpack.c.l.b16 %v4762
    %v5208 = vunpack.c.h.b16 %v4762
    %v5209 = vunpack.c.l.b16 %v4763
    %v5210 = vunpack.c.h.b16 %v4763
    %v5211 = vunpack.c.l.b16 %v4764
    %v5212 = vunpack.c.h.b16 %v4764
    %v5213 = vunpack.c.l.b16 %v4765
    %v5214 = vunpack.c.h.b16 %v4765
    %v5215 = vunpack.c.l.b16 %v4766
    %v5216 = vunpack.c.h.b16 %v4766
    %v5217 = vunpack.c.l.b16 %v4767
    %v5218 = vunpack.c.h.b16 %v4767
    %v5219 = vunpack.c.l.b16 %v4768
    %v5220 = vunpack.c.h.b16 %v4768
    %v5221 = vunpack.c.l.b16 %v4769
    %v5222 = vunpack.c.h.b16 %v4769
    %v5223 = vunpack.c.l.b16 %v4770
    %v5224 = vunpack.c.h.b16 %v4770
    %v5225 = vunpack.c.l.b16 %v4771
    %v5226 = vunpack.c.h.b16 %v4771
    %v5227 = vunpack.c.l.b16 %v4772
    %v5228 = vunpack.c.h.b16 %v4772
    %v5229 = vunpack.c.l.b16 %v4773
    %v5230 = vunpack.c.h.b16 %v4773
    %v5231 = vunpack.c.l.b16 %v4774
    %v5232 = vunpack.c.h.b16 %v4774
    %v5233 = vunpack.c.l.b16 %v4775
    %v5234 = vunpack.c.h.b16 %v4775
    %v5235 = vunpack.c.l.b16 %v4776
    %v5236 = vunpack.c.h.b16 %v4776
    %v5237 = vunpack.c.l.b16 %v4777
    %v5238 = vunpack.c.h.b16 %v4777
    %v5239 = vunpack.c.l.b16 %v4778
    %v5240 = vunpack.c.h.b16 %v4778
    %v5241 = vunpack.c.l.b16 %v4779
    %v5242 = vunpack.c.h.b16 %v4779
    %v5243 = vunpack.c.l.b16 %v4780
    %v5244 = vunpack.c.h.b16 %v4780
    %v5245 = vunpack.c.l.b16 %v4781
    %v5246 = vunpack.c.h.b16 %v4781
    %v5247 = vunpack.c.l.b16 %v4782
    %v5248 = vunpack.c.h.b16 %v4782
    %v5249 = vunpack.c.l.b16 %v4783
    %v5250 = vunpack.c.h.b16 %v4783
    %v5251 = vunpack.c.l.b16 %v4784
    %v5252 = vunpack.c.h.b16 %v4784
    %v5253 = vunpack.c.l.b16 %v4785
    %v5254 = vunpack.c.h.b16 %v4785
    %v5255 = vunpack.c.l.b16 %v4786
    %v5256 = vunpack.c.h.b16 %v4786
    %v5257 = vunpack.c.l.b16 %v4787
    %v5258 = vunpack.c.h.b16 %v4787
    %v5259 = vunpack.c.l.b16 %v4788
    %v5260 = vunpack.c.h.b16 %v4788
    %v5261 = vunpack.c.l.b16 %v4789
    %v5262 = vunpack.c.h.b16 %v4789
    %v5263 = vunpack.c.l.b16 %v4790
    %v5264 = vunpack.c.h.b16 %v4790
    %v5265 = vunpack.c.l.b16 %v4791
    %v5266 = vunpack.c.h.b16 %v4791
    %v5267 = vunpack.c.l.b16 %v4792
    %v5268 = vunpack.c.h.b16 %v4792
    %v5269 = vunpack.c.l.b16 %v4793
    %v5270 = vunpack.c.h.b16 %v4793
    %v5271 = vunpack.c.l.b16 %v4794
    %v5272 = vunpack.c.h.b16 %v4794
    %v5273 = vunpack.c.l.b16 %v4795
    %v5274 = vunpack.c.h.b16 %v4795
    %v5275 = vunpack.c.l.b16 %v4796
    %v5276 = vunpack.c.h.b16 %v4796
    %v5277 = vunpack.c.l.b16 %v4797
    %v5278 = vunpack.c.h.b16 %v4797
    %v5279 = vunpack.c.l.b16 %v4798
    %v5280 = vunpack.c.h.b16 %v4798
    %v5281 = vunpack.c.l.b16 %v4799
    %v5282 = vunpack.c.h.b16 %v4799
    %v5283 = vunpack.c.l.b16 %v4800
    %v5284 = vunpack.c.h.b16 %v4800
    %v5285 = vunpack.c.l.b16 %v4801
    %v5286 = vunpack.c.h.b16 %v4801
    %v5287 = vunpack.c.l.b16 %v4802
    %v5288 = vunpack.c.h.b16 %v4802
    %v5289 = vunpack.c.l.b16 %v4803
    %v5290 = vunpack.c.h.b16 %v4803
    %v5291 = vunpack.c.l.b16 %v4804
    %v5292 = vunpack.c.h.b16 %v4804
    %v5293 = vunpack.c.l.b16 %v4805
    %v5294 = vunpack.c.h.b16 %v4805
    %v5295 = vunpack.c.l.b16 %v4806
    %v5296 = vunpack.c.h.b16 %v4806
    %v5297 = vunpack.c.l.b16 %v4807
    %v5298 = vunpack.c.h.b16 %v4807
    %v5299 = vunpack.c.l.b16 %v4808
    %v5300 = vunpack.c.h.b16 %v4808
    %v5301 = vunpack.c.l.b16 %v4809
    %v5302 = vunpack.c.h.b16 %v4809
    %v5303 = vunpack.c.l.b16 %v4810
    %v5304 = vunpack.c.h.b16 %v4810
    %v5305 = vunpack.c.l.b16 %v4811
    %v5306 = vunpack.c.h.b16 %v4811
    %v5307 = vunpack.c.l.b16 %v4812
    %v5308 = vunpack.c.h.b16 %v4812
    %v5309 = vunpack.c.l.b16 %v4813
    %v5310 = vunpack.c.h.b16 %v4813
    %v5311 = vunpack.c.l.b16 %v4814
    %v5312 = vunpack.c.h.b16 %v4814
    %v5313 = vunpack.c.l.b16 %v4815
    %v5314 = vunpack.c.h.b16 %v4815
    %v5315 = vunpack.c.l.b16 %v4816
    %v5316 = vunpack.c.h.b16 %v4816
    %v5317 = vunpack.c.l.b16 %v4817
    %v5318 = vunpack.c.h.b16 %v4817
    %v5319 = vunpack.c.l.b16 %v4818
    %v5320 = vunpack.c.h.b16 %v4818
    %v5321 = vunpack.c.l.b16 %v4819
    %v5322 = vunpack.c.h.b16 %v4819
    %v5323 = vunpack.c.l.b16 %v4820
    %v5324 = vunpack.c.h.b16 %v4820
    %v5325 = vunpack.c.l.b16 %v4821
    %v5326 = vunpack.c.h.b16 %v4821
    %v5327 = vunpack.c.l.b16 %v4822
    %v5328 = vunpack.c.h.b16 %v4822
    %v5329 = vunpack.c.l.b16 %v4823
    %v5330 = vunpack.c.h.b16 %v4823
    %v5331 = vunpack.c.l.b16 %v4824
    %v5332 = vunpack.c.h.b16 %v4824
    %v5333 = vunpack.c.l.b16 %v4825
    %v5334 = vunpack.c.h.b16 %v4825
    %v5335 = vunpack.c.l.b16 %v4826
    %v5336 = vunpack.c.h.b16 %v4826
    %v5337 = vunpack.c.l.b16 %v4827
    %v5338 = vunpack.c.h.b16 %v4827
    %v5339 = vunpack.c.l.b16 %v4828
    %v5340 = vunpack.c.h.b16 %v4828
    %v5341 = vunpack.c.l.b16 %v4829
    %v5342 = vunpack.c.h.b16 %v4829
    %v5343 = vunpack.c.l.b16 %v4830
    %v5344 = vunpack.c.h.b16 %v4830
    %v5345 = vunpack.c.l.b16 %v4831
    %v5346 = vunpack.c.h.b16 %v4831
    %v5347 = vunpack.c.l.b16 %v4832
    %v5348 = vunpack.c.h.b16 %v4832
    %v5349 = vunpack.c.l.b16 %v4833
    %v5350 = vunpack.c.h.b16 %v4833
    %v5351 = vunpack.c.l.b16 %v4834
    %v5352 = vunpack.c.h.b16 %v4834
    %v5353 = vunpack.c.l.b16 %v4835
    %v5354 = vunpack.c.h.b16 %v4835
    %v5355 = vunpack.c.l.b16 %v4836
    %v5356 = vunpack.c.h.b16 %v4836
    %v5357 = vunpack.c.l.b16 %v4837
    %v5358 = vunpack.c.h.b16 %v4837
    %v5359 = vunpack.c.l.b16 %v4838
    %v5360 = vunpack.c.h.b16 %v4838
    %v5361 = vunpack.c.l.b16 %v4839
    %v5362 = vunpack.c.h.b16 %v4839
    %v5363 = vunpack.c.l.b16 %v4840
    %v5364 = vunpack.c.h.b16 %v4840
    %v5365 = vunpack.c.l.b16 %v4841
    %v5366 = vunpack.c.h.b16 %v4841
    %v5367 = vunpack.c.l.b16 %v4842
    %v5368 = vunpack.c.h.b16 %v4842
    %v5369 = vunpack.c.l.b16 %v4843
    %v5370 = vunpack.c.h.b16 %v4843
    %v5371 = vunpack.c.l.b16 %v4844
    %v5372 = vunpack.c.h.b16 %v4844
    %v5373 = vunpack.c.l.b16 %v4845
    %v5374 = vunpack.c.h.b16 %v4845
    %v5375 = vunpack.c.l.b16 %v4846
    %v5376 = vunpack.c.h.b16 %v4846
    %v5377 = vunpack.c.l.b16 %v4847
    %v5378 = vunpack.c.h.b16 %v4847
    %v5379 = vunpack.c.l.b16 %v4848
    %v5380 = vunpack.c.h.b16 %v4848
    %v5381 = vunpack.c.l.b16 %v4849
    %v5382 = vunpack.c.h.b16 %v4849
    %v5383 = vunpack.c.l.b16 %v4850
    %v5384 = vunpack.c.h.b16 %v4850
    %v5385 = vunpack.c.l.b16 %v4851
    %v5386 = vunpack.c.h.b16 %v4851
    %v5387 = vunpack.c.l.b16 %v4852
    %v5388 = vunpack.c.h.b16 %v4852
    %v5389 = vunpack.c.l.b16 %v4853
    %v5390 = vunpack.c.h.b16 %v4853
    %v5391 = vunpack.c.l.b16 %v4854
    %v5392 = vunpack.c.h.b16 %v4854
    %v5393 = vunpack.c.l.b16 %v4855
    %v5394 = vunpack.c.h.b16 %v4855
    %v5395 = vunpack.c.l.b16 %v4856
    %v5396 = vunpack.c.h.b16 %v4856
    %v5397 = vunpack.c.l.b16 %v4857
    %v5398 = vunpack.c.h.b16 %v4857
    %v5399 = vunpack.c.l.b16 %v4858
    %v5400 = vunpack.c.h.b16 %v4858
    %v5401 = vunpack.c.l.b16 %v4859
    %v5402 = vunpack.c.h.b16 %v4859
    %v5403 = vunpack.c.l.b16 %v4860
    %v5404 = vunpack.c.h.b16 %v4860
    %v5405 = vunpack.c.l.b16 %v4861
    %v5406 = vunpack.c.h.b16 %v4861
    %v5407 = vunpack.c.l.b16 %v4862
    %v5408 = vunpack.c.h.b16 %v4862
    %v5409 = vunpack.c.l.b16 %v4863
    %v5410 = vunpack.c.h.b16 %v4863
    %v5411 = vunpack.c.l.b16 %v4864
    %v5412 = vunpack.c.h.b16 %v4864
    %v5413 = vunpack.c.l.b16 %v4865
    %v5414 = vunpack.c.h.b16 %v4865
    %v5415 = vunpack.c.l.b16 %v4866
    %v5416 = vunpack.c.h.b16 %v4866
    %v5417 = vunpack.c.l.b16 %v4867
    %v5418 = vunpack.c.h.b16 %v4867
    %v5419 = vunpack.c.l.b16 %v4868
    %v5420 = vunpack.c.h.b16 %v4868
    %v5421 = vunpack.c.l.b16 %v4869
    %v5422 = vunpack.c.h.b16 %v4869
    %v5423 = vunpack.c.l.b16 %v4870
    %v5424 = vunpack.c.h.b16 %v4870
    %v5425 = vunpack.c.l.b16 %v4871
    %v5426 = vunpack.c.h.b16 %v4871
    %v5427 = vunpack.c.l.b16 %v4872
    %v5428 = vunpack.c.h.b16 %v4872
    %v5429 = vunpack.c.l.b16 %v4873
    %v5430 = vunpack.c.h.b16 %v4873
    %v5431 = vunpack.c.l.b16 %v4874
    %v5432 = vunpack.c.h.b16 %v4874
    %v5433 = vunpack.c.l.b16 %v4875
    %v5434 = vunpack.c.h.b16 %v4875
    %v5435 = vunpack.c.l.b16 %v4876
    %v5436 = vunpack.c.h.b16 %v4876
    %v5437 = vunpack.c.l.b16 %v4877
    %v5438 = vunpack.c.h.b16 %v4877
    %v5439 = vunpack.c.l.b16 %v4878
    %v5440 = vunpack.c.h.b16 %v4878
    %v5441 = vunpack.c.l.b16 %v4879
    %v5442 = vunpack.c.h.b16 %v4879
    %v5443 = vunpack.c.l.b16 %v4880
    %v5444 = vunpack.c.h.b16 %v4880
    %v5445 = vunpack.c.l.b16 %v4881
    %v5446 = vunpack.c.h.b16 %v4881
    %v5447 = vunpack.c.l.b16 %v4882
    %v5448 = vunpack.c.h.b16 %v4882
    %v5449 = vunpack.c.l.b16 %v4883
    %v5450 = vunpack.c.h.b16 %v4883
    %v5451 = vunpack.c.l.b16 %v4884
    %v5452 = vunpack.c.h.b16 %v4884
    %v5453 = vunpack.c.l.b16 %v4885
    %v5454 = vunpack.c.h.b16 %v4885
    %v5455 = vunpack.c.l.b16 %v4886
    %v5456 = vunpack.c.h.b16 %v4886
    %v5457 = vunpack.c.l.b16 %v4887
    %v5458 = vunpack.c.h.b16 %v4887
    %v5459 = vunpack.c.l.b16 %v4888
    %v5460 = vunpack.c.h.b16 %v4888
    %v5461 = vunpack.c.l.b16 %v4889
    %v5462 = vunpack.c.h.b16 %v4889
    %v5463 = vunpack.c.l.b16 %v4890
    %v5464 = vunpack.c.h.b16 %v4890
    %v5465 = vunpack.c.l.b16 %v4891
    %v5466 = vunpack.c.h.b16 %v4891
    %v5467 = vunpack.c.l.b16 %v4892
    %v5468 = vunpack.c.h.b16 %v4892
    %v5469 = vunpack.c.l.b16 %v4893
    %v5470 = vunpack.c.h.b16 %v4893
    %v5471 = vunpack.c.l.b16 %v4894
    %v5472 = vunpack.c.h.b16 %v4894
    %v5473 = vunpack.c.l.b16 %v4895
    %v5474 = vunpack.c.h.b16 %v4895
    %v5475 = vunpack.c.l.b16 %v4896
    %v5476 = vunpack.c.h.b16 %v4896
    %v5477 = vunpack.c.l.b16 %v4897
    %v5478 = vunpack.c.h.b16 %v4897
    %v5479 = vunpack.c.l.b16 %v4898
    %v5480 = vunpack.c.h.b16 %v4898
    %v5481 = vunpack.c.l.b16 %v4899
    %v5482 = vunpack.c.h.b16 %v4899
    %v5483 = vunpack.c.l.b16 %v4900
    %v5484 = vunpack.c.h.b16 %v4900
    %v5485 = vunpack.c.l.b16 %v4901
    %v5486 = vunpack.c.h.b16 %v4901
    %v5487 = vunpack.c.l.b16 %v4902
    %v5488 = vunpack.c.h.b16 %v4902
    %v5489 = vunpack.c.l.b16 %v4903
    %v5490 = vunpack.c.h.b16 %v4903
    %v5491 = vunpack.c.l.b16 %v4904
    %v5492 = vunpack.c.h.b16 %v4904
    %v5493 = vunpack.c.l.b16 %v4905
    %v5494 = vunpack.c.h.b16 %v4905
    %v5495 = vunpack.c.l.b16 %v4906
    %v5496 = vunpack.c.h.b16 %v4906
    %v5497 = vunpack.c.l.b16 %v4907
    %v5498 = vunpack.c.h.b16 %v4907
    %v5499 = vunpack.c.l.b16 %v4908
    %v5500 = vunpack.c.h.b16 %v4908
    %v5501 = vunpack.c.l.b16 %v4909
    %v5502 = vunpack.c.h.b16 %v4909
    %v5503 = vunpack.c.l.b16 %v4910
    %v5504 = vunpack.c.h.b16 %v4910
    %v5505 = vunpack.c.l.b16 %v4911
    %v5506 = vunpack.c.h.b16 %v4911
    %v5507 = vunpack.c.l.b16 %v4912
    %v5508 = vunpack.c.h.b16 %v4912
    %v5509 = vunpack.c.l.b16 %v4913
    %v5510 = vunpack.c.h.b16 %v4913
    %v5511 = vunpack.c.l.b16 %v4914
    %v5512 = vunpack.c.h.b16 %v4914
    %v5513 = vunpack.c.l.b16 %v4915
    %v5514 = vunpack.c.h.b16 %v4915
    %v5515 = vunpack.c.l.b16 %v4916
    %v5516 = vunpack.c.h.b16 %v4916
    %v5517 = vunpack.c.l.b16 %v4917
    %v5518 = vunpack.c.h.b16 %v4917
    %v5519 = vunpack.c.l.b16 %v4918
    %v5520 = vunpack.c.h.b16 %v4918
    %v5521 = vunpack.c.l.b16 %v4919
    %v5522 = vunpack.c.h.b16 %v4919
    %v5523 = vunpack.c.l.b16 %v4920
    %v5524 = vunpack.c.h.b16 %v4920
    %v5525 = vunpack.c.l.b16 %v4921
    %v5526 = vunpack.c.h.b16 %v4921
    %v5527 = vunpack.c.l.b16 %v4922
    %v5528 = vunpack.c.h.b16 %v4922
    %v5529 = vunpack.c.l.b16 %v4923
    %v5530 = vunpack.c.h.b16 %v4923
    %v5531 = vunpack.c.l.b16 %v4924
    %v5532 = vunpack.c.h.b16 %v4924
    %v5533 = vunpack.c.l.b16 %v4925
    %v5534 = vunpack.c.h.b16 %v4925
    %v5535 = vunpack.c.l.b16 %v4926
    %v5536 = vunpack.c.h.b16 %v4926
    %v5537 = vunpack.c.l.b16 %v4927
    %v5538 = vunpack.c.h.b16 %v4927
    %v5539 = vpack.c.b16 %v5161, %v5155
    %v5540 = vpack.c.b16 %v5162, %v5156
    %v5541 = vpack.c.b16 %v5163, %v5157
    %v5542 = vpack.c.b16 %v5164, %v5158
    %v5543 = vpack.c.b16 %v5165, %v5159
    %v5544 = vpack.c.b16 %v5166, %v5160
    %v5545 = vpack.c.b16 %v5173, %v5167
    %v5546 = vpack.c.b16 %v5174, %v5168
    %v5547 = vpack.c.b16 %v5175, %v5169
    %v5548 = vpack.c.b16 %v5176, %v5170
    %v5549 = vpack.c.b16 %v5177, %v5171
    %v5550 = vpack.c.b16 %v5178, %v5172
    %v5551 = vpack.c.b16 %v5185, %v5179
    %v5552 = vpack.c.b16 %v5186, %v5180
    %v5553 = vpack.c.b16 %v5187, %v5181
    %v5554 = vpack.c.b16 %v5188, %v5182
    %v5555 = vpack.c.b16 %v5189, %v5183
    %v5556 = vpack.c.b16 %v5190, %v5184
    %v5557 = vpack.c.b16 %v5197, %v5191
    %v5558 = vpack.c.b16 %v5198, %v5192
    %v5559 = vpack.c.b16 %v5199, %v5193
    %v5560 = vpack.c.b16 %v5200, %v5194
    %v5561 = vpack.c.b16 %v5201, %v5195
    %v5562 = vpack.c.b16 %v5202, %v5196
    %v5563 = vpack.c.b16 %v5209, %v5203
    %v5564 = vpack.c.b16 %v5210, %v5204
    %v5565 = vpack.c.b16 %v5211, %v5205
    %v5566 = vpack.c.b16 %v5212, %v5206
    %v5567 = vpack.c.b16 %v5213, %v5207
    %v5568 = vpack.c.b16 %v5214, %v5208
    %v5569 = vpack.c.b16 %v5221, %v5215
    %v5570 = vpack.c.b16 %v5222, %v5216
    %v5571 = vpack.c.b16 %v5223, %v5217
    %v5572 = vpack.c.b16 %v5224, %v5218
    %v5573 = vpack.c.b16 %v5225, %v5219
    %v5574 = vpack.c.b16 %v5226, %v5220
    %v5575 = vpack.c.b16 %v5233, %v5227
    %v5576 = vpack.c.b16 %v5234, %v5228
    %v5577 = vpack.c.b16 %v5235, %v5229
    %v5578 = vpack.c.b16 %v5236, %v5230
    %v5579 = vpack.c.b16 %v5237, %v5231
    %v5580 = vpack.c.b16 %v5238, %v5232
    %v5581 = vpack.c.b16 %v5245, %v5239
    %v5582 = vpack.c.b16 %v5246, %v5240
    %v5583 = vpack.c.b16 %v5247, %v5241
    %v5584 = vpack.c.b16 %v5248, %v5242
    %v5585 = vpack.c.b16 %v5249, %v5243
    %v5586 = vpack.c.b16 %v5250, %v5244
    %v5587 = vpack.c.b16 %v5257, %v5251
    %v5588 = vpack.c.b16 %v5258, %v5252
    %v5589 = vpack.c.b16 %v5259, %v5253
    %v5590 = vpack.c.b16 %v5260, %v5254
    %v5591 = vpack.c.b16 %v5261, %v5255
    %v5592 = vpack.c.b16 %v5262, %v5256
    %v5593 = vpack.c.b16 %v5269, %v5263
    %v5594 = vpack.c.b16 %v5270, %v5264
    %v5595 = vpack.c.b16 %v5271, %v5265
    %v5596 = vpack.c.b16 %v5272, %v5266
    %v5597 = vpack.c.b16 %v5273, %v5267
    %v5598 = vpack.c.b16 %v5274, %v5268
    %v5599 = vpack.c.b16 %v5281, %v5275
    %v5600 = vpack.c.b16 %v5282, %v5276
    %v5601 = vpack.c.b16 %v5283, %v5277
    %v5602 = vpack.c.b16 %v5284, %v5278
    %v5603 = vpack.c.b16 %v5285, %v5279
    %v5604 = vpack.c.b16 %v5286, %v5280
    %v5605 = vpack.c.b16 %v5293, %v5287
    %v5606 = vpack.c.b16 %v5294, %v5288
    %v5607 = vpack.c.b16 %v5295, %v5289
    %v5608 = vpack.c.b16 %v5296, %v5290
    %v5609 = vpack.c.b16 %v5297, %v5291
    %v5610 = vpack.c.b16 %v5298, %v5292
    %v5611 = vpack.c.b16 %v5305, %v5299
    %v5612 = vpack.c.b16 %v5306, %v5300
    %v5613 = vpack.c.b16 %v5307, %v5301
    %v5614 = vpack.c.b16 %v5308, %v5302
    %v5615 = vpack.c.b16 %v5309, %v5303
    %v5616 = vpack.c.b16 %v5310, %v5304
    %v5617 = vpack.c.b16 %v5317, %v5311
    %v5618 = vpack.c.b16 %v5318, %v5312
    %v5619 = vpack.c.b16 %v5319, %v5313
    %v5620 = vpack.c.b16 %v5320, %v5314
    %v5621 = vpack.c.b16 %v5321, %v5315
    %v5622 = vpack.c.b16 %v5322, %v5316
    %v5623 = vpack.c.b16 %v5329, %v5323
    %v5624 = vpack.c.b16 %v5330, %v5324
    %v5625 = vpack.c.b16 %v5331, %v5325
    %v5626 = vpack.c.b16 %v5332, %v5326
    %v5627 = vpack.c.b16 %v5333, %v5327
    %v5628 = vpack.c.b16 %v5334, %v5328
    %v5629 = vpack.c.b16 %v5341, %v5335
    %v5630 = vpack.c.b16 %v5342, %v5336
    %v5631 = vpack.c.b16 %v5343, %v5337
    %v5632 = vpack.c.b16 %v5344, %v5338
    %v5633 = vpack.c.b16 %v5345, %v5339
    %v5634 = vpack.c.b16 %v5346, %v5340
    %v5635 = vpack.c.b16 %v5353, %v5347
    %v5636 = vpack.c.b16 %v5354, %v5348
    %v5637 = vpack.c.b16 %v5355, %v5349
    %v5638 = vpack.c.b16 %v5356, %v5350
    %v5639 = vpack.c.b16 %v5357, %v5351
    %v5640 = vpack.c.b16 %v5358, %v5352
    %v5641 = vpack.c.b16 %v5365, %v5359
    %v5642 = vpack.c.b16 %v5366, %v5360
    %v5643 = vpack.c.b16 %v5367, %v5361
    %v5644 = vpack.c.b16 %v5368, %v5362
    %v5645 = vpack.c.b16 %v5369, %v5363
    %v5646 = vpack.c.b16 %v5370, %v5364
    %v5647 = vpack.c.b16 %v5377, %v5371
    %v5648 = vpack.c.b16 %v5378, %v5372
    %v5649 = vpack.c.b16 %v5379, %v5373
    %v5650 = vpack.c.b16 %v5380, %v5374
    %v5651 = vpack.c.b16 %v5381, %v5375
    %v5652 = vpack.c.b16 %v5382, %v5376
    %v5653 = vpack.c.b16 %v5389, %v5383
    %v5654 = vpack.c.b16 %v5390, %v5384
    %v5655 = vpack.c.b16 %v5391, %v5385
    %v5656 = vpack.c.b16 %v5392, %v5386
    %v5657 = vpack.c.b16 %v5393, %v5387
    %v5658 = vpack.c.b16 %v5394, %v5388
    %v5659 = vpack.c.b16 %v5401, %v5395
    %v5660 = vpack.c.b16 %v5402, %v5396
    %v5661 = vpack.c.b16 %v5403, %v5397
    %v5662 = vpack.c.b16 %v5404, %v5398
    %v5663 = vpack.c.b16 %v5405, %v5399
    %v5664 = vpack.c.b16 %v5406, %v5400
    %v5665 = vpack.c.b16 %v5413, %v5407
    %v5666 = vpack.c.b16 %v5414, %v5408
    %v5667 = vpack.c.b16 %v5415, %v5409
    %v5668 = vpack.c.b16 %v5416, %v5410
    %v5669 = vpack.c.b16 %v5417, %v5411
    %v5670 = vpack.c.b16 %v5418, %v5412
    %v5671 = vpack.c.b16 %v5425, %v5419
    %v5672 = vpack.c.b16 %v5426, %v5420
    %v5673 = vpack.c.b16 %v5427, %v5421
    %v5674 = vpack.c.b16 %v5428, %v5422
    %v5675 = vpack.c.b16 %v5429, %v5423
    %v5676 = vpack.c.b16 %v5430, %v5424
    %v5677 = vpack.c.b16 %v5437, %v5431
    %v5678 = vpack.c.b16 %v5438, %v5432
    %v5679 = vpack.c.b16 %v5439, %v5433
    %v5680 = vpack.c.b16 %v5440, %v5434
    %v5681 = vpack.c.b16 %v5441, %v5435
    %v5682 = vpack.c.b16 %v5442, %v5436
    %v5683 = vpack.c.b16 %v5449, %v5443
    %v5684 = vpack.c.b16 %v5450, %v5444
    %v5685 = vpack.c.b16 %v5451, %v5445
    %v5686 = vpack.c.b16 %v5452, %v5446
    %v5687 = vpack.c.b16 %v5453, %v5447
    %v5688 = vpack.c.b16 %v5454, %v5448
    %v5689 = vpack.c.b16 %v5461, %v5455
    %v5690 = vpack.c.b16 %v5462, %v5456
    %v5691 = vpack.c.b16 %v5463, %v5457
    %v5692 = vpack.c.b16 %v5464, %v5458
    %v5693 = vpack.c.b16 %v5465, %v5459
    %v5694 = vpack.c.b16 %v5466, %v5460
    %v5695 = vpack.c.b16 %v5473, %v5467
    %v5696 = vpack.c.b16 %v5474, %v5468
    %v5697 = vpack.c.b16 %v5475, %v5469
    %v5698 = vpack.c.b16 %v5476, %v5470
    %v5699 = vpack.c.b16 %v5477, %v5471
    %v5700 = vpack.c.b16 %v5478, %v5472
    %v5701 = vpack.c.b16 %v5485, %v5479
    %v5702 = vpack.c.b16 %v5486, %v5480
    %v5703 = vpack.c.b16 %v5487, %v5481
    %v5704 = vpack.c.b16 %v5488, %v5482
    %v5705 = vpack.c.b16 %v5489, %v5483
    %v5706 = vpack.c.b16 %v5490, %v5484
    %v5707 = vpack.c.b16 %v5497, %v5491
    %v5708 = vpack.c.b16 %v5498, %v5492
    %v5709 = vpack.c.b16 %v5499, %v5493
    %v5710 = vpack.c.b16 %v5500, %v5494
    %v5711 = vpack.c.b16 %v5501, %v5495
    %v5712 = vpack.c.b16 %v5502, %v5496
    %v5713 = vpack.c.b16 %v5509, %v5503
    %v5714 = vpack.c.b16 %v5510, %v5504
    %v5715 = vpack.c.b16 %v5511, %v5505
    %v5716 = vpack.c.b16 %v5512, %v5506
    %v5717 = vpack.c.b16 %v5513, %v5507
    %v5718 = vpack.c.b16 %v5514, %v5508
    %v5719 = vpack.c.b16 %v5521, %v5515
    %v5720 = vpack.c.b16 %v5522, %v5516
    %v5721 = vpack.c.b16 %v5523, %v5517
    %v5722 = vpack.c.b16 %v5524, %v5518
    %v5723 = vpack.c.b16 %v5525, %v5519
    %v5724 = vpack.c.b16 %v5526, %v5520
    %v5725 = vpack.c.b16 %v5533, %v5527
    %v5726 = vpack.c.b16 %v5534, %v5528
    %v5727 = vpack.c.b16 %v5535, %v5529
    %v5728 = vpack.c.b16 %v5536, %v5530
    %v5729 = vpack.c.b16 %v5537, %v5531
    %v5730 = vpack.c.b16 %v5538, %v5532
    %5923 = vmatprep.subr.bf16.mxu0 %v5540
    %5924 = vmatpush1.bf16.msra.mxu0 %v5539
    %5925 = vmatprep.subr.bf16.mxu0 %v5546
    %5926 = vmatpush1.bf16.msra.mxu0 %v5545
    %5927 = vmatprep.subr.bf16.mxu0 %v5552
    %5928 = vmatpush1.bf16.msra.mxu0 %v5551
    %5929 = vmatprep.subr.bf16.mxu0 %v5558
    %5930 = vmatpush1.bf16.msra.mxu0 %v5557
    %5931 = vmatprep.subr.bf16.mxu0 %v5564
    %5932 = vmatpush1.bf16.msra.mxu0 %v5563
    %5933 = vmatprep.subr.bf16.mxu0 %v5570
    %5934 = vmatpush1.bf16.msra.mxu0 %v5569
    %5935 = vmatprep.subr.bf16.mxu0 %v5576
    %5936 = vmatpush1.bf16.msra.mxu0 %v5575
    %5937 = vmatprep.subr.bf16.mxu0 %v5582
    %5938 = vmatpush1.bf16.msra.mxu0 %v5581
    %5939 = vmatprep.subr.bf16.mxu0 %v5588
    %5940 = vmatpush1.bf16.msra.mxu0 %v5587
    %5941 = vmatprep.subr.bf16.mxu0 %v5594
    %5942 = vmatpush1.bf16.msra.mxu0 %v5593
    %5943 = vmatprep.subr.bf16.mxu0 %v5600
    %5944 = vmatpush1.bf16.msra.mxu0 %v5599
    %5945 = vmatprep.subr.bf16.mxu0 %v5606
    %5946 = vmatpush1.bf16.msra.mxu0 %v5605
    %5947 = vmatprep.subr.bf16.mxu0 %v5612
    %5948 = vmatpush1.bf16.msra.mxu0 %v5611
    %5949 = vmatprep.subr.bf16.mxu0 %v5618
    %5950 = vmatpush1.bf16.msra.mxu0 %v5617
    %5951 = vmatprep.subr.bf16.mxu0 %v5624
    %5952 = vmatpush1.bf16.msra.mxu0 %v5623
    %5953 = vmatprep.subr.bf16.mxu0 %v5630
    %5954 = vmatpush1.bf16.msra.mxu0 %v5629
    %5955 = vmatprep.mubr.bf16.mxu0 %v4733
    %5956 = vmatmul.mubr.bf16.gmra.mrb[0].mxu0 %v4732
    %v5957 = vpop.f32.mrb[0].mxu0
    %v5958 = vadd.f32 %v4936, %v5957
    %v5959 = vpop.f32.mrb[0].mxu0
    %v5960 = vadd.f32 %v4940, %v5959
    %v5961 = vpop.f32.mrb[0].mxu0
    %v5962 = vpop.f32.mrb[0].mxu0
    %5963 = vdwg.mxu0
    %5964 = vmatprep.subr.bf16.mxu0 %v5636
    %5965 = vmatpush1.bf16.msra.mxu0 %v5635
    %5966 = vmatprep.subr.bf16.mxu0 %v5642
    %5967 = vmatpush1.bf16.msra.mxu0 %v5641
    %5968 = vmatprep.subr.bf16.mxu0 %v5648
    %5969 = vmatpush1.bf16.msra.mxu0 %v5647
    %5970 = vmatprep.subr.bf16.mxu0 %v5654
    %5971 = vmatpush1.bf16.msra.mxu0 %v5653
    %5972 = vmatprep.subr.bf16.mxu0 %v5660
    %5973 = vmatpush1.bf16.msra.mxu0 %v5659
    %5974 = vmatprep.subr.bf16.mxu0 %v5666
    %5975 = vmatpush1.bf16.msra.mxu0 %v5665
    %5976 = vmatprep.subr.bf16.mxu0 %v5672
    %5977 = vmatpush1.bf16.msra.mxu0 %v5671
    %5978 = vmatprep.subr.bf16.mxu0 %v5678
    %5979 = vmatpush1.bf16.msra.mxu0 %v5677
    %5980 = vmatprep.subr.bf16.mxu0 %v5684
    %5981 = vmatpush1.bf16.msra.mxu0 %v5683
    %5982 = vmatprep.subr.bf16.mxu0 %v5690
    %5983 = vmatpush1.bf16.msra.mxu0 %v5689
    %5984 = vmatprep.subr.bf16.mxu0 %v5696
    %5985 = vmatpush1.bf16.msra.mxu0 %v5695
    %5986 = vmatprep.subr.bf16.mxu0 %v5702
    %5987 = vmatpush1.bf16.msra.mxu0 %v5701
    %5988 = vmatprep.subr.bf16.mxu0 %v5708
    %5989 = vmatpush1.bf16.msra.mxu0 %v5707
    %5990 = vmatprep.subr.bf16.mxu0 %v5714
    %5991 = vmatpush1.bf16.msra.mxu0 %v5713
    %5992 = vmatprep.subr.bf16.mxu0 %v5720
    %5993 = vmatpush1.bf16.msra.mxu0 %v5719
    %5994 = vmatprep.subr.bf16.mxu0 %v5726
    %5995 = vmatpush1.bf16.msra.mxu0 %v5725
    %5996 = vmatprep.mubr.bf16.mxu0 %v4735
    %5997 = vmatmul.mubr.bf16.gmra.mrb[0].mxu0 %v4734
    %v5998 = vpop.f32.mrb[0].mxu0
    %v5999 = vadd.f32 %v5958, %v5998
    %v6000 = vpop.f32.mrb[0].mxu0
    %v6001 = vadd.f32 %v5960, %v6000
    %v6002 = vpop.f32.mrb[0].mxu0
    %v6003 = vpop.f32.mrb[0].mxu0
    %6004 = vdwg.mxu0
    %6005 = vmatprep.subr.bf16.mxu0 %v5542
    %6006 = vmatpush1.bf16.msra.mxu0 %v5541
    %6007 = vmatprep.subr.bf16.mxu0 %v5548
    %6008 = vmatpush1.bf16.msra.mxu0 %v5547
    %6009 = vmatprep.subr.bf16.mxu0 %v5554
    %6010 = vmatpush1.bf16.msra.mxu0 %v5553
    %6011 = vmatprep.subr.bf16.mxu0 %v5560
    %6012 = vmatpush1.bf16.msra.mxu0 %v5559
    %6013 = vmatprep.subr.bf16.mxu0 %v5566
    %6014 = vmatpush1.bf16.msra.mxu0 %v5565
    %6015 = vmatprep.subr.bf16.mxu0 %v5572
    %6016 = vmatpush1.bf16.msra.mxu0 %v5571
    %6017 = vmatprep.subr.bf16.mxu0 %v5578
    %6018 = vmatpush1.bf16.msra.mxu0 %v5577
    %6019 = vmatprep.subr.bf16.mxu0 %v5584
    %6020 = vmatpush1.bf16.msra.mxu0 %v5583
    %6021 = vmatprep.subr.bf16.mxu0 %v5590
    %6022 = vmatpush1.bf16.msra.mxu0 %v5589
    %6023 = vmatprep.subr.bf16.mxu0 %v5596
    %6024 = vmatpush1.bf16.msra.mxu0 %v5595
    %6025 = vmatprep.subr.bf16.mxu0 %v5602
    %6026 = vmatpush1.bf16.msra.mxu0 %v5601
    %6027 = vmatprep.subr.bf16.mxu0 %v5608
    %6028 = vmatpush1.bf16.msra.mxu0 %v5607
    %6029 = vmatprep.subr.bf16.mxu0 %v5614
    %6030 = vmatpush1.bf16.msra.mxu0 %v5613
    %6031 = vmatprep.subr.bf16.mxu0 %v5620
    %6032 = vmatpush1.bf16.msra.mxu0 %v5619
    %6033 = vmatprep.subr.bf16.mxu0 %v5626
    %6034 = vmatpush1.bf16.msra.mxu0 %v5625
    %6035 = vmatprep.subr.bf16.mxu0 %v5632
    %6036 = vmatpush1.bf16.msra.mxu0 %v5631
    %6037 = vmatprep.mubr.bf16.mxu0 %v4733
    %6038 = vmatmul.mubr.bf16.gmra.mrb[0].mxu0 %v4732
    %v6039 = vpop.f32.mrb[0].mxu0
    %v6040 = vadd.f32 %v4944, %v6039
    %v6041 = vpop.f32.mrb[0].mxu0
    %v6042 = vadd.f32 %v4948, %v6041
    %v6043 = vpop.f32.mrb[0].mxu0
    %v6044 = vpop.f32.mrb[0].mxu0
    %6045 = vdwg.mxu0
    %6046 = vmatprep.subr.bf16.mxu0 %v5638
    %6047 = vmatpush1.bf16.msra.mxu0 %v5637
    %6048 = vmatprep.subr.bf16.mxu0 %v5644
    %6049 = vmatpush1.bf16.msra.mxu0 %v5643
    %6050 = vmatprep.subr.bf16.mxu0 %v5650
    %6051 = vmatpush1.bf16.msra.mxu0 %v5649
    %6052 = vmatprep.subr.bf16.mxu0 %v5656
    %6053 = vmatpush1.bf16.msra.mxu0 %v5655
    %6054 = vmatprep.subr.bf16.mxu0 %v5662
    %6055 = vmatpush1.bf16.msra.mxu0 %v5661
    %6056 = vmatprep.subr.bf16.mxu0 %v5668
    %6057 = vmatpush1.bf16.msra.mxu0 %v5667
    %6058 = vmatprep.subr.bf16.mxu0 %v5674
    %6059 = vmatpush1.bf16.msra.mxu0 %v5673
    %6060 = vmatprep.subr.bf16.mxu0 %v5680
    %6061 = vmatpush1.bf16.msra.mxu0 %v5679
    %6062 = vmatprep.subr.bf16.mxu0 %v5686
    %6063 = vmatpush1.bf16.msra.mxu0 %v5685
    %6064 = vmatprep.subr.bf16.mxu0 %v5692
    %6065 = vmatpush1.bf16.msra.mxu0 %v5691
    %6066 = vmatprep.subr.bf16.mxu0 %v5698
    %6067 = vmatpush1.bf16.msra.mxu0 %v5697
    %6068 = vmatprep.subr.bf16.mxu0 %v5704
    %6069 = vmatpush1.bf16.msra.mxu0 %v5703
    %6070 = vmatprep.subr.bf16.mxu0 %v5710
    %6071 = vmatpush1.bf16.msra.mxu0 %v5709
    %6072 = vmatprep.subr.bf16.mxu0 %v5716
    %6073 = vmatpush1.bf16.msra.mxu0 %v5715
    %6074 = vmatprep.subr.bf16.mxu0 %v5722
    %6075 = vmatpush1.bf16.msra.mxu0 %v5721
    %6076 = vmatprep.subr.bf16.mxu0 %v5728
    %6077 = vmatpush1.bf16.msra.mxu0 %v5727
    %6078 = vmatprep.mubr.bf16.mxu0 %v4735
    %6079 = vmatmul.mubr.bf16.gmra.mrb[0].mxu0 %v4734
    %v6080 = vpop.f32.mrb[0].mxu0
    %v6081 = vadd.f32 %v6040, %v6080
    %v6082 = vpop.f32.mrb[0].mxu0
    %v6083 = vadd.f32 %v6042, %v6082
    %v6084 = vpop.f32.mrb[0].mxu0
    %v6085 = vpop.f32.mrb[0].mxu0
    %6086 = vdwg.mxu0
    %6087 = vmatprep.subr.bf16.mxu0 %v5544
    %6088 = vmatpush1.bf16.msra.mxu0 %v5543
    %6089 = vmatprep.subr.bf16.mxu0 %v5550
    %6090 = vmatpush1.bf16.msra.mxu0 %v5549
    %6091 = vmatprep.subr.bf16.mxu0 %v5556
    %6092 = vmatpush1.bf16.msra.mxu0 %v5555
    %6093 = vmatprep.subr.bf16.mxu0 %v5562
    %6094 = vmatpush1.bf16.msra.mxu0 %v5561
    %6095 = vmatprep.subr.bf16.mxu0 %v5568
    %6096 = vmatpush1.bf16.msra.mxu0 %v5567
    %6097 = vmatprep.subr.bf16.mxu0 %v5574
    %6098 = vmatpush1.bf16.msra.mxu0 %v5573
    %6099 = vmatprep.subr.bf16.mxu0 %v5580
    %6100 = vmatpush1.bf16.msra.mxu0 %v5579
    %6101 = vmatprep.subr.bf16.mxu0 %v5586
    %6102 = vmatpush1.bf16.msra.mxu0 %v5585
    %6103 = vmatprep.subr.bf16.mxu0 %v5592
    %6104 = vmatpush1.bf16.msra.mxu0 %v5591
    %6105 = vmatprep.subr.bf16.mxu0 %v5598
    %6106 = vmatpush1.bf16.msra.mxu0 %v5597
    %6107 = vmatprep.subr.bf16.mxu0 %v5604
    %6108 = vmatpush1.bf16.msra.mxu0 %v5603
    %6109 = vmatprep.subr.bf16.mxu0 %v5610
    %6110 = vmatpush1.bf16.msra.mxu0 %v5609
    %6111 = vmatprep.subr.bf16.mxu0 %v5616
    %6112 = vmatpush1.bf16.msra.mxu0 %v5615
    %6113 = vmatprep.subr.bf16.mxu0 %v5622
    %6114 = vmatpush1.bf16.msra.mxu0 %v5621
    %6115 = vmatprep.subr.bf16.mxu0 %v5628
    %6116 = vmatpush1.bf16.msra.mxu0 %v5627
    %6117 = vmatprep.subr.bf16.mxu0 %v5634
    %6118 = vmatpush1.bf16.msra.mxu0 %v5633
    %6119 = vmatprep.mubr.bf16.mxu0 %v4733
    %6120 = vmatmul.mubr.bf16.gmra.mrb[0].mxu0 %v4732
    %v6121 = vpop.f32.mrb[0].mxu0
    %v6122 = vadd.f32 %v4952, %v6121
    %v6123 = vpop.f32.mrb[0].mxu0
    %v6124 = vadd.f32 %v4956, %v6123
    %v6125 = vpop.f32.mrb[0].mxu0
    %v6126 = vpop.f32.mrb[0].mxu0
    %6127 = vdwg.mxu0
    %6128 = vmatprep.subr.bf16.mxu0 %v5640
    %6129 = vmatpush1.bf16.msra.mxu0 %v5639
    %6130 = vmatprep.subr.bf16.mxu0 %v5646
    %6131 = vmatpush1.bf16.msra.mxu0 %v5645
    %6132 = vmatprep.subr.bf16.mxu0 %v5652
    %6133 = vmatpush1.bf16.msra.mxu0 %v5651
    %6134 = vmatprep.subr.bf16.mxu0 %v5658
    %6135 = vmatpush1.bf16.msra.mxu0 %v5657
    %6136 = vmatprep.subr.bf16.mxu0 %v5664
    %6137 = vmatpush1.bf16.msra.mxu0 %v5663
    %6138 = vmatprep.subr.bf16.mxu0 %v5670
    %6139 = vmatpush1.bf16.msra.mxu0 %v5669
    %6140 = vmatprep.subr.bf16.mxu0 %v5676
    %6141 = vmatpush1.bf16.msra.mxu0 %v5675
    %6142 = vmatprep.subr.bf16.mxu0 %v5682
    %6143 = vmatpush1.bf16.msra.mxu0 %v5681
    %6144 = vmatprep.subr.bf16.mxu0 %v5688
    %6145 = vmatpush1.bf16.msra.mxu0 %v5687
    %6146 = vmatprep.subr.bf16.mxu0 %v5694
    %6147 = vmatpush1.bf16.msra.mxu0 %v5693
    %6148 = vmatprep.subr.bf16.mxu0 %v5700
    %6149 = vmatpush1.bf16.msra.mxu0 %v5699
    %6150 = vmatprep.subr.bf16.mxu0 %v5706
    %6151 = vmatpush1.bf16.msra.mxu0 %v5705
    %6152 = vmatprep.subr.bf16.mxu0 %v5712
    %6153 = vmatpush1.bf16.msra.mxu0 %v5711
    %6154 = vmatprep.subr.bf16.mxu0 %v5718
    %6155 = vmatpush1.bf16.msra.mxu0 %v5717
    %6156 = vmatprep.subr.bf16.mxu0 %v5724
    %6157 = vmatpush1.bf16.msra.mxu0 %v5723
    %6158 = vmatprep.subr.bf16.mxu0 %v5730
    %6159 = vmatpush1.bf16.msra.mxu0 %v5729
    %6160 = vmatprep.mubr.bf16.mxu0 %v4735
    %6161 = vmatmul.mubr.bf16.gmra.mrb[0].mxu0 %v4734
    %v6162 = vpop.f32.mrb[0].mxu0
    %v6163 = vadd.f32 %v6122, %v6162
    %v6164 = vpop.f32.mrb[0].mxu0
    %v6165 = vadd.f32 %v6124, %v6164
    %v6166 = vpop.f32.mrb[0].mxu0
    %v6167 = vpop.f32.mrb[0].mxu0
    %6168 = vdwg.mxu0
    %v6169 = vld [vmem:[%s1] sm:$0xff]
    %v6170 = vrcp.pop %v6169
    %v6171 = vmul.f32 1.0, %v6170
    %6173 = vset.pattern.permute.xlu0 0
    %6174 = vperm.xlu0 %6173, %v6171
    %v6175 = vpop.permute.xlu0 %6174
    %v6177 = vmul.f32 %v5999, %v6175
    %v6178 = vmul.f32 %v6001, %v6175
    %v6179 = vmul.f32 %v6081, %v6175
    %v6180 = vmul.f32 %v6083, %v6175
    %v6181 = vmul.f32 %v6163, %v6175
    %v6182 = vmul.f32 %v6165, %v6175
    %6183 = vst [vmem:[#allocation16] sm:$0xff] %v6177
    %6184 = vst [vmem:[#allocation16 + $0x8] sm:$0xff] %v6178
    %6185 = vst [vmem:[#allocation16 + $0x10] sm:$0xff] %v6179
    %6186 = vst [vmem:[#allocation16 + $0x18] sm:$0xff] %v6180
    %6187 = vst [vmem:[#allocation16 + $0x20] sm:$0xff] %v6181
    %6188 = vst [vmem:[#allocation16 + $0x28] sm:$0xff] %v6182
    // Predicated region
    $region70: #{sm3_forward.1} parent=1 // pred_check
      _
    $region71: #{sm3_forward.1} parent=1 // pred_check_branch
      %6190 = sbr.rel (0) target = $region73
    $region72: #{sm3_forward.1} parent=1 // pred_region
      %s6192 = ssub.s32 768, 768
      %6193 = vsyncadd [#allocation4], %s6192
      %s6195 = sshll.u32 [#allocation16], 4
      %s6196 = int_to_ptr.vmem [resolvable:$true] %s6195
      %6198 = dma.vmem_to_hbm [thread:$0]  %s6196, 768, %s9, [#allocation4]
    $region73: #{sm3_forward.1} parent=1 // pred_fallthru
      _
    // Predicated region
    $region74: #{sm3_forward.1} parent=1 // pred_check
      _
    $region75: #{sm3_forward.1} parent=1 // pred_check_branch
      %6200 = sbr.rel (0) target = $region77
    $region76: #{sm3_forward.1} parent=1 // pred_region
      %6201 = dma.done [#allocation4], 768
    $region77: #{sm3_forward.1} parent=1 // pred_fallthru
      _
    %6202 = vsyncpa [#allocation3], 1
    %6203 = vsyncpa [#allocation6], 1
    %6204 = vsyncpa [#allocation9], 1
    %6205 = vsyncpa [#allocation12], 1
    %6206 = vsyncpa [#allocation15], 1
    %6207 = vsyncpa [#allocation4], 1

</llo_original>
